<compile_context>
chip_gen: v6e
topology: v6e:2x2x1
jax: 0.10.0
libtpu: 0.0.40
codegen_flags: <defaults>
</compile_context>

<pallas_src>
import math

import jax
import jax.numpy as jnp
from jax.experimental import pallas as pl
from jax.experimental.pallas import tpu as pltpu

# ----------------------------- model config (small stand-in) -----------------
PATCH = 16                     # patch size (matches theia-base-patch16)
IMG = 32                       # small image side -> 2x2 = 4 patches
CH = 3                         # RGB input, as the Theia backbone expects
DIM = 128                      # lane-dense hidden size (small stand-in for 768)
HEADS = 2
HEAD_DIM = DIM // HEADS        # 64 real head dim
HEAD_PAD = 128                 # each head's q/k/v padded to a full 128-lane tile
DEPTH = 2
MLP_DIM = 4 * DIM
LN_EPS = 1e-12                 # HF ViT default layer_norm_eps

PATCH_DIM = CH * PATCH * PATCH          # 768
N_PATCH = (IMG // PATCH) ** 2           # 4
T_REAL = N_PATCH + 1                    # patches + CLS = 5
T_PAD = ((T_REAL + 7) // 8) * 8         # per-image rows padded to sublane mult -> 8
GROUP = 16                              # images packed per grid step
ROWS = GROUP * T_PAD                    # 128 rows per step -> full MXU row fill
QKV_OUT = HEADS * 3 * HEAD_PAD          # 768
SCALE = 1.0 / math.sqrt(HEAD_DIM)
NEG_INF = -1e30


# ------------------------------- fused kernel --------------------------------
def _theia_fused_kernel(patches_ref, tmpl_ref, bias_ref, patch_w_ref,
                        ln1_g_ref, ln1_b_ref, qkv_w_ref, qkv_b_ref,
                        proj_w_ref, proj_b_ref, ln2_g_ref, ln2_b_ref,
                        fc1_w_ref, fc1_b_ref, fc2_w_ref, fc2_b_ref,
                        lnf_g_ref, lnf_b_ref, o_ref, h_ref):
    l = pl.program_id(1)

    def ln(x, g, b):
        # f32 VPU math (v5e has no native bf16 VPU path)
        mu = jnp.mean(x, axis=-1, keepdims=True)
        var = jnp.mean((x - mu) ** 2, axis=-1, keepdims=True)
        return (x - mu) * jax.lax.rsqrt(var + LN_EPS) * g + b

    def mm(x, w):
        # bf16 MXU operands (weights already stored bf16), f32 accumulation
        return jnp.dot(x.astype(jnp.bfloat16), w, preferred_element_type=jnp.float32)

    # --- layer 0: patch embed + CLS/pos template into resident VMEM scratch ---
    @pl.when(l == 0)
    def _():
        h_ref[...] = mm(patches_ref[0], patch_w_ref[...]) + tmpl_ref[0]   # (ROWS, DIM)

    h = h_ref[...]
    bias = bias_ref[0]                        # (ROWS, ROWS) block-diag + pad-key mask

    # --- attention block (pre-LN), residual fused ---
    hn = ln(h, ln1_g_ref[0], ln1_b_ref[0])
    qkv = mm(hn, qkv_w_ref[0]) + qkv_b_ref[0]             # (ROWS, QKV_OUT) f32
    qkv_bf = qkv.astype(jnp.bfloat16)                     # cast once for all heads
    proj_w = proj_w_ref[0]                                # (HEADS*HEAD_PAD, DIM) bf16
    attn = jnp.zeros((ROWS, DIM), jnp.float32)
    for hd in range(HEADS):
        base = hd * 3 * HEAD_PAD                          # 128-lane-aligned slices
        q = qkv_bf[:, base:base + HEAD_PAD]
        k = qkv_bf[:, base + HEAD_PAD:base + 2 * HEAD_PAD]
        v = qkv_bf[:, base + 2 * HEAD_PAD:base + 3 * HEAD_PAD]
        # contract on last axes -> no materialized transpose of K
        s = jax.lax.dot_general(
            q, k, (((1,), (1,)), ((), ())),
            preferred_element_type=jnp.float32) * SCALE + bias           # (ROWS, ROWS)
        s = s - jnp.max(s, axis=-1, keepdims=True)
        p = jnp.exp(s)
        p = p * pl.reciprocal(jnp.sum(p, axis=-1, keepdims=True), approx=True)
        head_out = jnp.dot(p.astype(jnp.bfloat16), v,
                           preferred_element_type=jnp.float32)           # (ROWS, HEAD_PAD)
        # Per-head (zero-padded) projection block; accumulation replaces the
        # lane-axis concatenate of head outputs.
        attn = attn + jnp.dot(head_out.astype(jnp.bfloat16),
                              proj_w[hd * HEAD_PAD:(hd + 1) * HEAD_PAD, :],
                              preferred_element_type=jnp.float32)
    h = h + attn + proj_b_ref[0]                                         # residual fused

    # --- MLP block (pre-LN), residual fused ---
    hn = ln(h, ln2_g_ref[0], ln2_b_ref[0])
    y = mm(hn, fc1_w_ref[0]) + fc1_b_ref[0]                              # (ROWS, MLP_DIM)
    # TODO(synk): HF ViT uses exact (erf) GELU; tanh approximation kept for
    # guaranteed Mosaic lowering (small systematic deviation).
    c = math.sqrt(2.0 / math.pi)
    y = 0.5 * y * (1.0 + jnp.tanh(c * (y + 0.044715 * y * y * y)))
    h = h + mm(y, fc2_w_ref[0]) + fc2_b_ref[0]                           # residual fused

    h_ref[...] = h

    # Final LN; store ALL rows as one aligned full-tile write.  CLS + pad rows
    # are stripped in the XLA wrapper (keeps the epilogue an unmasked vst).
    @pl.when(l == DEPTH - 1)
    def _():
        o_ref[0] = ln(h, lnf_g_ref[...], lnf_b_ref[...])


# ------------------------------ parameter init -------------------------------
def init_params(key):
    std = 0.02
    keys = iter(jax.random.split(key, 8))
    bf = jnp.bfloat16

    def nrm(shape):
        return std * jax.random.normal(next(keys), shape, dtype=jnp.float32)

    # QKV: per head [Q|K|V], each padded to HEAD_PAD lanes with zero columns so
    # results match unpadded 64-dim heads exactly while keeping 128-lane slices.
    qkv_w = jnp.zeros((DEPTH, DIM, HEADS, 3, HEAD_PAD), jnp.float32)
    qkv_w = qkv_w.at[..., :HEAD_DIM].set(nrm((DEPTH, DIM, HEADS, 3, HEAD_DIM)))
    qkv_w = qkv_w.reshape(DEPTH, DIM, QKV_OUT).astype(bf)

    # Per-head projection blocks; pad rows (HEAD_DIM..HEAD_PAD-1) are zero.
    proj_w = jnp.zeros((DEPTH, HEADS, HEAD_PAD, DIM), jnp.float32)
    proj_w = proj_w.at[:, :, :HEAD_DIM, :].set(nrm((DEPTH, HEADS, HEAD_DIM, DIM)))
    proj_w = proj_w.reshape(DEPTH, HEADS * HEAD_PAD, DIM).astype(bf)

    return {
        # matmul weights stored bf16 (MXU-native, halves HBM/VMEM bytes)
        "patch_w": nrm((PATCH_DIM, DIM)).astype(bf),     # conv16x16/16 as matmul
        "patch_b": jnp.zeros((1, DIM), jnp.float32),
        "cls": nrm((1, 1, DIM)),
        "pos": nrm((1, T_REAL, DIM)),
        # per-layer params stacked along DEPTH; streamed one layer per grid step
        "ln1_g": jnp.ones((DEPTH, 1, DIM), jnp.float32),
        "ln1_b": jnp.zeros((DEPTH, 1, DIM), jnp.float32),
        "qkv_w": qkv_w,
        "qkv_b": jnp.zeros((DEPTH, 1, QKV_OUT), jnp.float32),
        "proj_w": proj_w,
        "proj_b": jnp.zeros((DEPTH, 1, DIM), jnp.float32),
        "ln2_g": jnp.ones((DEPTH, 1, DIM), jnp.float32),
        "ln2_b": jnp.zeros((DEPTH, 1, DIM), jnp.float32),
        "fc1_w": nrm((DEPTH, DIM, MLP_DIM)).astype(bf),
        "fc1_b": jnp.zeros((DEPTH, 1, MLP_DIM), jnp.float32),
        "fc2_w": nrm((DEPTH, MLP_DIM, DIM)).astype(bf),
        "fc2_b": jnp.zeros((DEPTH, 1, DIM), jnp.float32),
        "lnf_g": jnp.ones((1, DIM), jnp.float32),
        "lnf_b": jnp.zeros((1, DIM), jnp.float32),
    }


# --------------------------------- forward -----------------------------------
def theia_feature_forward(x, params):
    """x: NCHW float32 image batch. Returns patch-token features (B, N_PATCH, DIM)."""
    B, C, H, W = x.shape
    nH, nW = H // PATCH, W // PATCH
    assert (C, nH * nW) == (CH, N_PATCH)

    # Patch extraction (glue): (B,C,H,W) -> (B, N_PATCH, C*P*P), channel-major per
    # patch, matching PyTorch Conv2d(kernel=P, stride=P) weight flattening.
    patches = (x.reshape(B, C, nH, PATCH, nW, PATCH)
                 .transpose(0, 2, 4, 1, 3, 5)
                 .reshape(B, N_PATCH, PATCH_DIM))
    # Per-image token layout: rows 0..N_PATCH-1 = patch tokens (so the final
    # output strip starts at row 0), row N_PATCH = CLS slot (zero pixels),
    # remaining rows = pad.  Zero rows contribute nothing to the embed matmul.
    patches = jnp.pad(patches, ((0, 0), (0, T_PAD - N_PATCH), (0, 0)))

    # Pack GROUP images into the sublane (row) dimension of each grid step.
    B_pad = ((B + GROUP - 1) // GROUP) * GROUP
    num_groups = B_pad // GROUP
    patches = jnp.pad(patches, ((0, B_pad - B), (0, 0), (0, 0)))
    patches = patches.reshape(num_groups, ROWS, PATCH_DIM).astype(jnp.bfloat16)

    # Per-image token template: patch rows = pos[1:] + patch bias; CLS row =
    # cls + pos[0]; pad rows = 0.  Tiled across the GROUP packed images.
    tmpl_img = jnp.zeros((T_PAD, DIM), jnp.float32)
    tmpl_img = tmpl_img.at[:N_PATCH, :].set(params["pos"][0, 1:] + params["patch_b"][0])
    tmpl_img = tmpl_img.at[N_PATCH, :].set(params["cls"][0, 0] + params["pos"][0, 0])
    tmpl = jnp.tile(tmpl_img, (GROUP, 1))[None]                     # (1, ROWS, DIM)

    # Block-diagonal (queries only attend within their own image) + pad-key
    # additive attention mask, precomputed once.
    img_id = jnp.arange(ROWS) // T_PAD
    tok_id = jnp.arange(ROWS) % T_PAD
    valid = (img_id[:, None] == img_id[None, :]) & (tok_id[None, :] < T_REAL)
    attn_bias = jnp.where(valid, 0.0, NEG_INF).astype(jnp.float32)[None]  # (1,ROWS,ROWS)

    _grp = lambda g, l: (g, 0, 0)    # per-group activation blocks
    _lyr = lambda g, l: (l, 0, 0)    # per-layer weights streamed over grid axis 1
    _c3 = lambda g, l: (0, 0, 0)     # constants (3-D)
    _c2 = lambda g, l: (0, 0)        # constants (2-D)
    # TODO(synk): at real Theia-base scale (DIM=768, DEPTH=12), tag the
    # constant-index blocks with pipeline_mode=pl.Buffered(1) so never-changing
    # tiles are not double-buffered against v7x's 64 MiB VMEM.

    in_specs = [
        pl.BlockSpec((1, ROWS, PATCH_DIM), _grp),        # packed patches
        pl.BlockSpec((1, ROWS, DIM), _c3),               # token template
        pl.BlockSpec((1, ROWS, ROWS), _c3),              # attention bias mask
        pl.BlockSpec((PATCH_DIM, DIM), _c2),             # patch_w
        pl.BlockSpec((1, 1, DIM), _lyr),                 # ln1_g
        pl.BlockSpec((1, 1, DIM), _lyr),                 # ln1_b
        pl.BlockSpec((1, DIM, QKV_OUT), _lyr),           # qkv_w
        pl.BlockSpec((1, 1, QKV_OUT), _lyr),             # qkv_b
        pl.BlockSpec((1, HEADS * HEAD_PAD, DIM), _lyr),  # proj_w
        pl.BlockSpec((1, 1, DIM), _lyr),                 # proj_b
        pl.BlockSpec((1, 1, DIM), _lyr),                 # ln2_g
        pl.BlockSpec((1, 1, DIM), _lyr),                 # ln2_b
        pl.BlockSpec((1, DIM, MLP_DIM), _lyr),           # fc1_w
        pl.BlockSpec((1, 1, MLP_DIM), _lyr),             # fc1_b
        pl.BlockSpec((1, MLP_DIM, DIM), _lyr),           # fc2_w
        pl.BlockSpec((1, 1, DIM), _lyr),                 # fc2_b
        pl.BlockSpec((1, DIM), _c2),                     # lnf_g
        pl.BlockSpec((1, DIM), _c2),                     # lnf_b
    ]

    out = pl.pallas_call(
        _theia_fused_kernel,
        out_shape=jax.ShapeDtypeStruct((num_groups, ROWS, DIM), jnp.float32),
        grid=(num_groups, DEPTH),
        in_specs=in_specs,
        out_specs=pl.BlockSpec((1, ROWS, DIM), _grp),
        scratch_shapes=[pltpu.VMEM((ROWS, DIM), jnp.float32)],   # h carried over layers
        compiler_params=pltpu.CompilerParams(
            dimension_semantics=("parallel", "arbitrary"),       # groups across TCs
            vmem_limit_bytes=32 * 1024 * 1024,
        ),
    )(patches, tmpl, attn_bias, params["patch_w"],
      params["ln1_g"], params["ln1_b"], params["qkv_w"], params["qkv_b"],
      params["proj_w"], params["proj_b"], params["ln2_g"], params["ln2_b"],
      params["fc1_w"], params["fc1_b"], params["fc2_w"], params["fc2_b"],
      params["lnf_g"], params["lnf_b"])

    # forward_feature: strip CLS token, pad rows and pad images (aligned slice
    # starting at row 0, done in XLA glue).
    return out.reshape(B_pad, T_PAD, DIM)[:B, :N_PATCH, :]


if __name__ == "__main__":
    key = jax.random.PRNGKey(0)
    k_param, k_x = jax.random.split(key)
    params = init_params(k_param)

    B = 32                         # 2 packed groups of 16 images -> grid=(2, DEPTH)
    x = jax.random.normal(k_x, (B, CH, IMG, IMG), dtype=jnp.float32)

    fwd = jax.jit(theia_feature_forward)
    tokens = fwd(x, params)
    jax.block_until_ready(tokens)

    assert tokens.shape == (B, N_PATCH, DIM), tokens.shape
    assert tokens.dtype == jnp.float32
    assert bool(jnp.all(jnp.isfinite(tokens)))
    print("KERNEL_OK")
</pallas_src>

<mosaic_0001>
module attributes {stable_mosaic.version = 11 : i64} {
  func.func @_theia_fused_kernel(%arg0: i32, %arg1: i32, %arg2: memref<1x128x768xbf16, #tpu.memory_space<vmem>>, %arg3: memref<1x128x128xf32, #tpu.memory_space<vmem>>, %arg4: memref<1x128x128xf32, #tpu.memory_space<vmem>>, %arg5: memref<768x128xbf16, #tpu.memory_space<vmem>>, %arg6: memref<1x1x128xf32, #tpu.memory_space<vmem>>, %arg7: memref<1x1x128xf32, #tpu.memory_space<vmem>>, %arg8: memref<1x128x768xbf16, #tpu.memory_space<vmem>>, %arg9: memref<1x1x768xf32, #tpu.memory_space<vmem>>, %arg10: memref<1x256x128xbf16, #tpu.memory_space<vmem>>, %arg11: memref<1x1x128xf32, #tpu.memory_space<vmem>>, %arg12: memref<1x1x128xf32, #tpu.memory_space<vmem>>, %arg13: memref<1x1x128xf32, #tpu.memory_space<vmem>>, %arg14: memref<1x128x512xbf16, #tpu.memory_space<vmem>>, %arg15: memref<1x1x512xf32, #tpu.memory_space<vmem>>, %arg16: memref<1x512x128xbf16, #tpu.memory_space<vmem>>, %arg17: memref<1x1x128xf32, #tpu.memory_space<vmem>>, %arg18: memref<1x128xf32, #tpu.memory_space<vmem>>, %arg19: memref<1x128xf32, #tpu.memory_space<vmem>>, %arg20: memref<1x128x128xf32, #tpu.memory_space<vmem>>, %arg21: memref<128x128xf32, #tpu.memory_space<vmem>>) attributes {dimension_semantics = [#tpu.dimension_semantics<parallel>, #tpu.dimension_semantics<arbitrary>], iteration_bounds = array<i64: 2, 2>, scalar_prefetch = 0 : i64, scratch_operands = 1 : i64, tpu.core_type = #tpu.core_type<tc>, window_params = [{transform_indices = @transform_0, window_bounds = array<i64: 1, 128, 768>}, {pipeline_mode = #tpu.pipeline_mode<synchronous>, transform_indices = @transform_1, window_bounds = array<i64: 1, 128, 128>}, {pipeline_mode = #tpu.pipeline_mode<synchronous>, transform_indices = @transform_2, window_bounds = array<i64: 1, 128, 128>}, {pipeline_mode = #tpu.pipeline_mode<synchronous>, transform_indices = @transform_3, window_bounds = array<i64: 768, 128>}, {transform_indices = @transform_4, window_bounds = array<i64: 1, 1, 128>}, {transform_indices = @transform_5, window_bounds = array<i64: 1, 1, 128>}, {transform_indices = @transform_6, window_bounds = array<i64: 1, 128, 768>}, {transform_indices = @transform_7, window_bounds = array<i64: 1, 1, 768>}, {transform_indices = @transform_8, window_bounds = array<i64: 1, 256, 128>}, {transform_indices = @transform_9, window_bounds = array<i64: 1, 1, 128>}, {transform_indices = @transform_10, window_bounds = array<i64: 1, 1, 128>}, {transform_indices = @transform_11, window_bounds = array<i64: 1, 1, 128>}, {transform_indices = @transform_12, window_bounds = array<i64: 1, 128, 512>}, {transform_indices = @transform_13, window_bounds = array<i64: 1, 1, 512>}, {transform_indices = @transform_14, window_bounds = array<i64: 1, 512, 128>}, {transform_indices = @transform_15, window_bounds = array<i64: 1, 1, 128>}, {pipeline_mode = #tpu.pipeline_mode<synchronous>, transform_indices = @transform_16, window_bounds = array<i64: 1, 128>}, {pipeline_mode = #tpu.pipeline_mode<synchronous>, transform_indices = @transform_17, window_bounds = array<i64: 1, 128>}, {transform_indices = @transform_18, window_bounds = array<i64: 1, 128, 128>}]} {
    %c0_i32 = arith.constant 0 : i32
    %0 = arith.cmpi eq, %arg1, %c0_i32 : i32
    %1 = arith.extui %0 : i1 to i32
    %c0_i32_0 = arith.constant 0 : i32
    %2 = arith.cmpi ne, %1, %c0_i32_0 : i32
    scf.if %2 {
      %c0_73 = arith.constant 0 : index
      %c0_74 = arith.constant 0 : index
      %c0_75 = arith.constant 0 : index
      %155 = vector.load %arg2[%c0_73, %c0_74, %c0_75] : memref<1x128x768xbf16, #tpu.memory_space<vmem>>, vector<1x128x768xbf16>
      %156 = vector.shape_cast %155 : vector<1x128x768xbf16> to vector<128x768xbf16>
      %c0_76 = arith.constant 0 : index
      %c0_77 = arith.constant 0 : index
      %157 = vector.load %arg5[%c0_76, %c0_77] : memref<768x128xbf16, #tpu.memory_space<vmem>>, vector<768x128xbf16>
      %cst_78 = arith.constant dense<0.000000e+00> : vector<128x128xf32>
      %158 = tpu.matmul %156, %157, %cst_78 {dimension_numbers = #tpu.dot_dimension_numbers<[1], [0], [0], [1], [0, 0, 1, 1], [], []>} : vector<128x768xbf16>, vector<768x128xbf16>, vector<128x128xf32> -> vector<128x128xf32>
      %c0_79 = arith.constant 0 : index
      %c0_80 = arith.constant 0 : index
      %c0_81 = arith.constant 0 : index
      %159 = vector.load %arg3[%c0_79, %c0_80, %c0_81] : memref<1x128x128xf32, #tpu.memory_space<vmem>>, vector<1x128x128xf32>
      %160 = vector.shape_cast %159 : vector<1x128x128xf32> to vector<128x128xf32>
      %161 = arith.addf %158, %160 : vector<128x128xf32>
      %c0_82 = arith.constant 0 : index
      %c0_83 = arith.constant 0 : index
      %162 = vector.load %arg21[%c0_82, %c0_83] : memref<128x128xf32, #tpu.memory_space<vmem>>, vector<128x128xf32>
      tpu.vector_store %arg21[%c0_82, %c0_83], %161 {strides = array<i32>} : memref<128x128xf32, #tpu.memory_space<vmem>>, vector<128x128xf32>,
    } else {
    }
    %c0 = arith.constant 0 : index
    %c0_1 = arith.constant 0 : index
    %3 = vector.load %arg21[%c0, %c0_1] : memref<128x128xf32, #tpu.memory_space<vmem>>, vector<128x128xf32>
    %c0_2 = arith.constant 0 : index
    %c0_3 = arith.constant 0 : index
    %c0_4 = arith.constant 0 : index
    %4 = vector.load %arg4[%c0_2, %c0_3, %c0_4] : memref<1x128x128xf32, #tpu.memory_space<vmem>>, vector<1x128x128xf32>
    %5 = vector.shape_cast %4 : vector<1x128x128xf32> to vector<128x128xf32>
    %c0_5 = arith.constant 0 : index
    %c0_6 = arith.constant 0 : index
    %c0_7 = arith.constant 0 : index
    %6 = vector.load %arg6[%c0_5, %c0_6, %c0_7] : memref<1x1x128xf32, #tpu.memory_space<vmem>>, vector<1x1x128xf32>
    %7 = vector.shape_cast %6 : vector<1x1x128xf32> to vector<1x128xf32>
    %c0_8 = arith.constant 0 : index
    %c0_9 = arith.constant 0 : index
    %c0_10 = arith.constant 0 : index
    %8 = vector.load %arg7[%c0_8, %c0_9, %c0_10] : memref<1x1x128xf32, #tpu.memory_space<vmem>>, vector<1x1x128xf32>
    %9 = vector.shape_cast %8 : vector<1x1x128xf32> to vector<1x128xf32>
    %cst = arith.constant dense<0.000000e+00> : vector<128xf32>
    %10 = vector.multi_reduction <add>, %3, %cst [1] : vector<128x128xf32> to vector<128xf32>
    %11 = vector.shape_cast %10 : vector<128xf32> to vector<128x1xf32>
    %cst_11 = arith.constant 1.280000e+02 : f32
    %12 = vector.broadcast %cst_11 : f32 to vector<128x1xf32>
    %13 = arith.divf %11, %12 : vector<128x1xf32>
    %14 = vector.broadcast %13 : vector<128x1xf32> to vector<128x128xf32>
    %15 = arith.subf %3, %14 : vector<128x128xf32>
    %16 = arith.mulf %15, %15 : vector<128x128xf32>
    %cst_12 = arith.constant dense<0.000000e+00> : vector<128xf32>
    %17 = vector.multi_reduction <add>, %16, %cst_12 [1] : vector<128x128xf32> to vector<128xf32>
    %18 = vector.shape_cast %17 : vector<128xf32> to vector<128x1xf32>
    %cst_13 = arith.constant 1.280000e+02 : f32
    %19 = vector.broadcast %cst_13 : f32 to vector<128x1xf32>
    %20 = arith.divf %18, %19 : vector<128x1xf32>
    %21 = vector.broadcast %13 : vector<128x1xf32> to vector<128x128xf32>
    %22 = arith.subf %3, %21 : vector<128x128xf32>
    %cst_14 = arith.constant 9.99999996E-13 : f32
    %23 = vector.broadcast %cst_14 : f32 to vector<128x1xf32>
    %24 = arith.addf %20, %23 : vector<128x1xf32>
    %25 = math.rsqrt %24 : vector<128x1xf32>
    %26 = vector.broadcast %25 : vector<128x1xf32> to vector<128x128xf32>
    %27 = arith.mulf %22, %26 : vector<128x128xf32>
    %28 = vector.broadcast %7 : vector<1x128xf32> to vector<128x128xf32>
    %29 = arith.mulf %27, %28 : vector<128x128xf32>
    %30 = vector.broadcast %9 : vector<1x128xf32> to vector<128x128xf32>
    %31 = arith.addf %29, %30 : vector<128x128xf32>
    %c0_15 = arith.constant 0 : index
    %c0_16 = arith.constant 0 : index
    %c0_17 = arith.constant 0 : index
    %32 = vector.load %arg8[%c0_15, %c0_16, %c0_17] : memref<1x128x768xbf16, #tpu.memory_space<vmem>>, vector<1x128x768xbf16>
    %33 = vector.shape_cast %32 : vector<1x128x768xbf16> to vector<128x768xbf16>
    %34 = arith.truncf %31 : vector<128x128xf32> to vector<128x128xbf16>
    %cst_18 = arith.constant dense<0.000000e+00> : vector<128x768xf32>
    %35 = tpu.matmul %34, %33, %cst_18 {dimension_numbers = #tpu.dot_dimension_numbers<[1], [0], [0], [1], [0, 0, 1, 1], [], []>} : vector<128x128xbf16>, vector<128x768xbf16>, vector<128x768xf32> -> vector<128x768xf32>
    %c0_19 = arith.constant 0 : index
    %c0_20 = arith.constant 0 : index
    %c0_21 = arith.constant 0 : index
    %36 = vector.load %arg9[%c0_19, %c0_20, %c0_21] : memref<1x1x768xf32, #tpu.memory_space<vmem>>, vector<1x1x768xf32>
    %37 = vector.shape_cast %36 : vector<1x1x768xf32> to vector<1x768xf32>
    %38 = vector.broadcast %37 : vector<1x768xf32> to vector<128x768xf32>
    %39 = arith.addf %35, %38 : vector<128x768xf32>
    %40 = arith.truncf %39 : vector<128x768xf32> to vector<128x768xbf16>
    %c0_22 = arith.constant 0 : index
    %c0_23 = arith.constant 0 : index
    %c0_24 = arith.constant 0 : index
    %41 = vector.load %arg10[%c0_22, %c0_23, %c0_24] : memref<1x256x128xbf16, #tpu.memory_space<vmem>>, vector<1x256x128xbf16>
    %42 = vector.shape_cast %41 : vector<1x256x128xbf16> to vector<256x128xbf16>
    %cst_25 = arith.constant 0.000000e+00 : f32
    %43 = vector.broadcast %cst_25 : f32 to vector<128x128xf32>
    %44 = vector.extract_strided_slice %40 {offsets = [0, 0], sizes = [128, 128], strides = [1, 1]} : vector<128x768xbf16> to vector<128x128xbf16>
    %45 = vector.extract_strided_slice %40 {offsets = [0, 128], sizes = [128, 128], strides = [1, 1]} : vector<128x768xbf16> to vector<128x128xbf16>
    %46 = vector.extract_strided_slice %40 {offsets = [0, 256], sizes = [128, 128], strides = [1, 1]} : vector<128x768xbf16> to vector<128x128xbf16>
    %cst_26 = arith.constant dense<0.000000e+00> : vector<128x128xf32>
    %47 = tpu.matmul %44, %45, %cst_26 {dimension_numbers = #tpu.dot_dimension_numbers<[1], [1], [0], [0], [0, 0, 1, 0], [], []>} : vector<128x128xbf16>, vector<128x128xbf16>, vector<128x128xf32> -> vector<128x128xf32>
    %cst_27 = arith.constant 1.250000e-01 : f32
    %48 = vector.broadcast %cst_27 : f32 to vector<128x128xf32>
    %49 = arith.mulf %47, %48 : vector<128x128xf32>
    %50 = arith.addf %49, %5 : vector<128x128xf32>
    %cst_28 = arith.constant dense<0xFF800000> : vector<128xf32>
    %51 = vector.multi_reduction <maximumf>, %50, %cst_28 [1] : vector<128x128xf32> to vector<128xf32>
    %52 = vector.shape_cast %51 : vector<128xf32> to vector<128x1xf32>
    %53 = vector.broadcast %52 : vector<128x1xf32> to vector<128x128xf32>
    %54 = arith.subf %50, %53 : vector<128x128xf32>
    %55 = math.exp %54 : vector<128x128xf32>
    %cst_29 = arith.constant dense<0.000000e+00> : vector<128xf32>
    %56 = vector.multi_reduction <add>, %55, %cst_29 [1] : vector<128x128xf32> to vector<128xf32>
    %57 = vector.shape_cast %56 : vector<128xf32> to vector<128x1xf32>
    %58 = tpu.reciprocal %57 {approx = true} : vector<128x1xf32> -> vector<128x1xf32>
    %59 = vector.broadcast %58 : vector<128x1xf32> to vector<128x128xf32>
    %60 = arith.mulf %55, %59 : vector<128x128xf32>
    %61 = arith.truncf %60 : vector<128x128xf32> to vector<128x128xbf16>
    %cst_30 = arith.constant dense<0.000000e+00> : vector<128x128xf32>
    %62 = tpu.matmul %61, %46, %cst_30 {dimension_numbers = #tpu.dot_dimension_numbers<[1], [0], [0], [1], [0, 0, 1, 1], [], []>} : vector<128x128xbf16>, vector<128x128xbf16>, vector<128x128xf32> -> vector<128x128xf32>
    %63 = arith.truncf %62 : vector<128x128xf32> to vector<128x128xbf16>
    %64 = vector.extract_strided_slice %42 {offsets = [0, 0], sizes = [128, 128], strides = [1, 1]} : vector<256x128xbf16> to vector<128x128xbf16>
    %cst_31 = arith.constant dense<0.000000e+00> : vector<128x128xf32>
    %65 = tpu.matmul %63, %64, %cst_31 {dimension_numbers = #tpu.dot_dimension_numbers<[1], [0], [0], [1], [0, 0, 1, 1], [], []>} : vector<128x128xbf16>, vector<128x128xbf16>, vector<128x128xf32> -> vector<128x128xf32>
    %66 = arith.addf %43, %65 : vector<128x128xf32>
    %67 = vector.extract_strided_slice %40 {offsets = [0, 384], sizes = [128, 128], strides = [1, 1]} : vector<128x768xbf16> to vector<128x128xbf16>
    %68 = vector.extract_strided_slice %40 {offsets = [0, 512], sizes = [128, 128], strides = [1, 1]} : vector<128x768xbf16> to vector<128x128xbf16>
    %69 = vector.extract_strided_slice %40 {offsets = [0, 640], sizes = [128, 128], strides = [1, 1]} : vector<128x768xbf16> to vector<128x128xbf16>
    %cst_32 = arith.constant dense<0.000000e+00> : vector<128x128xf32>
    %70 = tpu.matmul %67, %68, %cst_32 {dimension_numbers = #tpu.dot_dimension_numbers<[1], [1], [0], [0], [0, 0, 1, 0], [], []>} : vector<128x128xbf16>, vector<128x128xbf16>, vector<128x128xf32> -> vector<128x128xf32>
    %cst_33 = arith.constant 1.250000e-01 : f32
    %71 = vector.broadcast %cst_33 : f32 to vector<128x128xf32>
    %72 = arith.mulf %70, %71 : vector<128x128xf32>
    %73 = arith.addf %72, %5 : vector<128x128xf32>
    %cst_34 = arith.constant dense<0xFF800000> : vector<128xf32>
    %74 = vector.multi_reduction <maximumf>, %73, %cst_34 [1] : vector<128x128xf32> to vector<128xf32>
    %75 = vector.shape_cast %74 : vector<128xf32> to vector<128x1xf32>
    %76 = vector.broadcast %75 : vector<128x1xf32> to vector<128x128xf32>
    %77 = arith.subf %73, %76 : vector<128x128xf32>
    %78 = math.exp %77 : vector<128x128xf32>
    %cst_35 = arith.constant dense<0.000000e+00> : vector<128xf32>
    %79 = vector.multi_reduction <add>, %78, %cst_35 [1] : vector<128x128xf32> to vector<128xf32>
    %80 = vector.shape_cast %79 : vector<128xf32> to vector<128x1xf32>
    %81 = tpu.reciprocal %80 {approx = true} : vector<128x1xf32> -> vector<128x1xf32>
    %82 = vector.broadcast %81 : vector<128x1xf32> to vector<128x128xf32>
    %83 = arith.mulf %78, %82 : vector<128x128xf32>
    %84 = arith.truncf %83 : vector<128x128xf32> to vector<128x128xbf16>
    %cst_36 = arith.constant dense<0.000000e+00> : vector<128x128xf32>
    %85 = tpu.matmul %84, %69, %cst_36 {dimension_numbers = #tpu.dot_dimension_numbers<[1], [0], [0], [1], [0, 0, 1, 1], [], []>} : vector<128x128xbf16>, vector<128x128xbf16>, vector<128x128xf32> -> vector<128x128xf32>
    %86 = arith.truncf %85 : vector<128x128xf32> to vector<128x128xbf16>
    %87 = vector.extract_strided_slice %42 {offsets = [128, 0], sizes = [128, 128], strides = [1, 1]} : vector<256x128xbf16> to vector<128x128xbf16>
    %cst_37 = arith.constant dense<0.000000e+00> : vector<128x128xf32>
    %88 = tpu.matmul %86, %87, %cst_37 {dimension_numbers = #tpu.dot_dimension_numbers<[1], [0], [0], [1], [0, 0, 1, 1], [], []>} : vector<128x128xbf16>, vector<128x128xbf16>, vector<128x128xf32> -> vector<128x128xf32>
    %89 = arith.addf %66, %88 : vector<128x128xf32>
    %90 = arith.addf %3, %89 : vector<128x128xf32>
    %c0_38 = arith.constant 0 : index
    %c0_39 = arith.constant 0 : index
    %c0_40 = arith.constant 0 : index
    %91 = vector.load %arg11[%c0_38, %c0_39, %c0_40] : memref<1x1x128xf32, #tpu.memory_space<vmem>>, vector<1x1x128xf32>
    %92 = vector.shape_cast %91 : vector<1x1x128xf32> to vector<1x128xf32>
    %93 = vector.broadcast %92 : vector<1x128xf32> to vector<128x128xf32>
    %94 = arith.addf %90, %93 : vector<128x128xf32>
    %c0_41 = arith.constant 0 : index
    %c0_42 = arith.constant 0 : index
    %c0_43 = arith.constant 0 : index
    %95 = vector.load %arg12[%c0_41, %c0_42, %c0_43] : memref<1x1x128xf32, #tpu.memory_space<vmem>>, vector<1x1x128xf32>
    %96 = vector.shape_cast %95 : vector<1x1x128xf32> to vector<1x128xf32>
    %c0_44 = arith.constant 0 : index
    %c0_45 = arith.constant 0 : index
    %c0_46 = arith.constant 0 : index
    %97 = vector.load %arg13[%c0_44, %c0_45, %c0_46] : memref<1x1x128xf32, #tpu.memory_space<vmem>>, vector<1x1x128xf32>
    %98 = vector.shape_cast %97 : vector<1x1x128xf32> to vector<1x128xf32>
    %cst_47 = arith.constant dense<0.000000e+00> : vector<128xf32>
    %99 = vector.multi_reduction <add>, %94, %cst_47 [1] : vector<128x128xf32> to vector<128xf32>
    %100 = vector.shape_cast %99 : vector<128xf32> to vector<128x1xf32>
    %cst_48 = arith.constant 1.280000e+02 : f32
    %101 = vector.broadcast %cst_48 : f32 to vector<128x1xf32>
    %102 = arith.divf %100, %101 : vector<128x1xf32>
    %103 = vector.broadcast %102 : vector<128x1xf32> to vector<128x128xf32>
    %104 = arith.subf %94, %103 : vector<128x128xf32>
    %105 = arith.mulf %104, %104 : vector<128x128xf32>
    %cst_49 = arith.constant dense<0.000000e+00> : vector<128xf32>
    %106 = vector.multi_reduction <add>, %105, %cst_49 [1] : vector<128x128xf32> to vector<128xf32>
    %107 = vector.shape_cast %106 : vector<128xf32> to vector<128x1xf32>
    %cst_50 = arith.constant 1.280000e+02 : f32
    %108 = vector.broadcast %cst_50 : f32 to vector<128x1xf32>
    %109 = arith.divf %107, %108 : vector<128x1xf32>
    %110 = vector.broadcast %102 : vector<128x1xf32> to vector<128x128xf32>
    %111 = arith.subf %94, %110 : vector<128x128xf32>
    %cst_51 = arith.constant 9.99999996E-13 : f32
    %112 = vector.broadcast %cst_51 : f32 to vector<128x1xf32>
    %113 = arith.addf %109, %112 : vector<128x1xf32>
    %114 = math.rsqrt %113 : vector<128x1xf32>
    %115 = vector.broadcast %114 : vector<128x1xf32> to vector<128x128xf32>
    %116 = arith.mulf %111, %115 : vector<128x128xf32>
    %117 = vector.broadcast %96 : vector<1x128xf32> to vector<128x128xf32>
    %118 = arith.mulf %116, %117 : vector<128x128xf32>
    %119 = vector.broadcast %98 : vector<1x128xf32> to vector<128x128xf32>
    %120 = arith.addf %118, %119 : vector<128x128xf32>
    %c0_52 = arith.constant 0 : index
    %c0_53 = arith.constant 0 : index
    %c0_54 = arith.constant 0 : index
    %121 = vector.load %arg14[%c0_52, %c0_53, %c0_54] : memref<1x128x512xbf16, #tpu.memory_space<vmem>>, vector<1x128x512xbf16>
    %122 = vector.shape_cast %121 : vector<1x128x512xbf16> to vector<128x512xbf16>
    %123 = arith.truncf %120 : vector<128x128xf32> to vector<128x128xbf16>
    %cst_55 = arith.constant dense<0.000000e+00> : vector<128x512xf32>
    %124 = tpu.matmul %123, %122, %cst_55 {dimension_numbers = #tpu.dot_dimension_numbers<[1], [0], [0], [1], [0, 0, 1, 1], [], []>} : vector<128x128xbf16>, vector<128x512xbf16>, vector<128x512xf32> -> vector<128x512xf32>
    %c0_56 = arith.constant 0 : index
    %c0_57 = arith.constant 0 : index
    %c0_58 = arith.constant 0 : index
    %125 = vector.load %arg15[%c0_56, %c0_57, %c0_58] : memref<1x1x512xf32, #tpu.memory_space<vmem>>, vector<1x1x512xf32>
    %126 = vector.shape_cast %125 : vector<1x1x512xf32> to vector<1x512xf32>
    %127 = vector.broadcast %126 : vector<1x512xf32> to vector<128x512xf32>
    %128 = arith.addf %124, %127 : vector<128x512xf32>
    %cst_59 = arith.constant 5.000000e-01 : f32
    %129 = vector.broadcast %cst_59 : f32 to vector<128x512xf32>
    %130 = arith.mulf %129, %128 : vector<128x512xf32>
    %cst_60 = arith.constant 4.471500e-02 : f32
    %131 = vector.broadcast %cst_60 : f32 to vector<128x512xf32>
    %132 = arith.mulf %131, %128 : vector<128x512xf32>
    %133 = arith.mulf %132, %128 : vector<128x512xf32>
    %134 = arith.mulf %133, %128 : vector<128x512xf32>
    %135 = arith.addf %128, %134 : vector<128x512xf32>
    %cst_61 = arith.constant 0.797884583 : f32
    %136 = vector.broadcast %cst_61 : f32 to vector<128x512xf32>
    %137 = arith.mulf %136, %135 : vector<128x512xf32>
    %138 = math.tanh %137 : vector<128x512xf32>
    %cst_62 = arith.constant 1.000000e+00 : f32
    %139 = vector.broadcast %cst_62 : f32 to vector<128x512xf32>
    %140 = arith.addf %139, %138 : vector<128x512xf32>
    %141 = arith.mulf %130, %140 : vector<128x512xf32>
    %c0_63 = arith.constant 0 : index
    %c0_64 = arith.constant 0 : index
    %c0_65 = arith.constant 0 : index
    %142 = vector.load %arg16[%c0_63, %c0_64, %c0_65] : memref<1x512x128xbf16, #tpu.memory_space<vmem>>, vector<1x512x128xbf16>
    %143 = vector.shape_cast %142 : vector<1x512x128xbf16> to vector<512x128xbf16>
    %144 = arith.truncf %141 : vector<128x512xf32> to vector<128x512xbf16>
    %cst_66 = arith.constant dense<0.000000e+00> : vector<128x128xf32>
    %145 = tpu.matmul %144, %143, %cst_66 {dimension_numbers = #tpu.dot_dimension_numbers<[1], [0], [0], [1], [0, 0, 1, 1], [], []>} : vector<128x512xbf16>, vector<512x128xbf16>, vector<128x128xf32> -> vector<128x128xf32>
    %146 = arith.addf %94, %145 : vector<128x128xf32>
    %c0_67 = arith.constant 0 : index
    %c0_68 = arith.constant 0 : index
    %c0_69 = arith.constant 0 : index
    %147 = vector.load %arg17[%c0_67, %c0_68, %c0_69] : memref<1x1x128xf32, #tpu.memory_space<vmem>>, vector<1x1x128xf32>
    %148 = vector.shape_cast %147 : vector<1x1x128xf32> to vector<1x128xf32>
    %149 = vector.broadcast %148 : vector<1x128xf32> to vector<128x128xf32>
    %150 = arith.addf %146, %149 : vector<128x128xf32>
    %c0_70 = arith.constant 0 : index
    %c0_71 = arith.constant 0 : index
    %151 = vector.load %arg21[%c0_70, %c0_71] : memref<128x128xf32, #tpu.memory_space<vmem>>, vector<128x128xf32>
    tpu.vector_store %arg21[%c0_70, %c0_71], %150 {strides = array<i32>} : memref<128x128xf32, #tpu.memory_space<vmem>>, vector<128x128xf32>,
    %c1_i32 = arith.constant 1 : i32
    %152 = arith.cmpi eq, %arg1, %c1_i32 : i32
    %153 = arith.extui %152 : i1 to i32
    %c0_i32_72 = arith.constant 0 : i32
    %154 = arith.cmpi ne, %153, %c0_i32_72 : i32
    scf.if %154 {
      %c0_73 = arith.constant 0 : index
      %c0_74 = arith.constant 0 : index
      %155 = vector.load %arg18[%c0_73, %c0_74] : memref<1x128xf32, #tpu.memory_space<vmem>>, vector<1x128xf32>
      %c0_75 = arith.constant 0 : index
      %c0_76 = arith.constant 0 : index
      %156 = vector.load %arg19[%c0_75, %c0_76] : memref<1x128xf32, #tpu.memory_space<vmem>>, vector<1x128xf32>
      %cst_77 = arith.constant dense<0.000000e+00> : vector<128xf32>
      %157 = vector.multi_reduction <add>, %150, %cst_77 [1] : vector<128x128xf32> to vector<128xf32>
      %158 = vector.shape_cast %157 : vector<128xf32> to vector<128x1xf32>
      %cst_78 = arith.constant 1.280000e+02 : f32
      %159 = vector.broadcast %cst_78 : f32 to vector<128x1xf32>
      %160 = arith.divf %158, %159 : vector<128x1xf32>
      %161 = vector.broadcast %160 : vector<128x1xf32> to vector<128x128xf32>
      %162 = arith.subf %150, %161 : vector<128x128xf32>
      %163 = arith.mulf %162, %162 : vector<128x128xf32>
      %cst_79 = arith.constant dense<0.000000e+00> : vector<128xf32>
      %164 = vector.multi_reduction <add>, %163, %cst_79 [1] : vector<128x128xf32> to vector<128xf32>
      %165 = vector.shape_cast %164 : vector<128xf32> to vector<128x1xf32>
      %cst_80 = arith.constant 1.280000e+02 : f32
      %166 = vector.broadcast %cst_80 : f32 to vector<128x1xf32>
      %167 = arith.divf %165, %166 : vector<128x1xf32>
      %168 = vector.broadcast %160 : vector<128x1xf32> to vector<128x128xf32>
      %169 = arith.subf %150, %168 : vector<128x128xf32>
      %cst_81 = arith.constant 9.99999996E-13 : f32
      %170 = vector.broadcast %cst_81 : f32 to vector<128x1xf32>
      %171 = arith.addf %167, %170 : vector<128x1xf32>
      %172 = math.rsqrt %171 : vector<128x1xf32>
      %173 = vector.broadcast %172 : vector<128x1xf32> to vector<128x128xf32>
      %174 = arith.mulf %169, %173 : vector<128x128xf32>
      %175 = vector.broadcast %155 : vector<1x128xf32> to vector<128x128xf32>
      %176 = arith.mulf %174, %175 : vector<128x128xf32>
      %177 = vector.broadcast %156 : vector<1x128xf32> to vector<128x128xf32>
      %178 = arith.addf %176, %177 : vector<128x128xf32>
      %c0_82 = arith.constant 0 : index
      %c0_83 = arith.constant 0 : index
      %c0_84 = arith.constant 0 : index
      %179 = vector.load %arg20[%c0_82, %c0_83, %c0_84] : memref<1x128x128xf32, #tpu.memory_space<vmem>>, vector<1x128x128xf32>
      %180 = vector.shape_cast %179 : vector<1x128x128xf32> to vector<128x128xf32>
      %181 = vector.shape_cast %178 : vector<128x128xf32> to vector<1x128x128xf32>
      tpu.vector_store %arg20[%c0_82, %c0_83, %c0_84], %181 {strides = array<i32>} : memref<1x128x128xf32, #tpu.memory_space<vmem>>, vector<1x128x128xf32>,
    } else {
    }
    return
  }
  func.func @transform_0(%arg0: i32, %arg1: i32) -> (i32, i32, i32) {
    %c0_i32 = arith.constant 0 : i32
    %c0_i32_0 = arith.constant 0 : i32
    %c0_i32_1 = arith.constant 0 : i32
    return %arg0, %c0_i32, %c0_i32_0 : i32, i32, i32
  }
  func.func @transform_1(%arg0: i32, %arg1: i32) -> (i32, i32, i32) {
    %c0_i32 = arith.constant 0 : i32
    %c0_i32_0 = arith.constant 0 : i32
    %c0_i32_1 = arith.constant 0 : i32
    %c0_i32_2 = arith.constant 0 : i32
    return %c0_i32, %c0_i32_0, %c0_i32_1 : i32, i32, i32
  }
  func.func @transform_2(%arg0: i32, %arg1: i32) -> (i32, i32, i32) {
    %c0_i32 = arith.constant 0 : i32
    %c0_i32_0 = arith.constant 0 : i32
    %c0_i32_1 = arith.constant 0 : i32
    %c0_i32_2 = arith.constant 0 : i32
    return %c0_i32, %c0_i32_0, %c0_i32_1 : i32, i32, i32
  }
  func.func @transform_3(%arg0: i32, %arg1: i32) -> (i32, i32) {
    %c0_i32 = arith.constant 0 : i32
    %c0_i32_0 = arith.constant 0 : i32
    %c0_i32_1 = arith.constant 0 : i32
    return %c0_i32, %c0_i32_0 : i32, i32
  }
  func.func @transform_4(%arg0: i32, %arg1: i32) -> (i32, i32, i32) {
    %c0_i32 = arith.constant 0 : i32
    %c0_i32_0 = arith.constant 0 : i32
    %c0_i32_1 = arith.constant 0 : i32
    return %arg1, %c0_i32, %c0_i32_0 : i32, i32, i32
  }
  func.func @transform_5(%arg0: i32, %arg1: i32) -> (i32, i32, i32) {
    %c0_i32 = arith.constant 0 : i32
    %c0_i32_0 = arith.constant 0 : i32
    %c0_i32_1 = arith.constant 0 : i32
    return %arg1, %c0_i32, %c0_i32_0 : i32, i32, i32
  }
  func.func @transform_6(%arg0: i32, %arg1: i32) -> (i32, i32, i32) {
    %c0_i32 = arith.constant 0 : i32
    %c0_i32_0 = arith.constant 0 : i32
    %c0_i32_1 = arith.constant 0 : i32
    return %arg1, %c0_i32, %c0_i32_0 : i32, i32, i32
  }
  func.func @transform_7(%arg0: i32, %arg1: i32) -> (i32, i32, i32) {
    %c0_i32 = arith.constant 0 : i32
    %c0_i32_0 = arith.constant 0 : i32
    %c0_i32_1 = arith.constant 0 : i32
    return %arg1, %c0_i32, %c0_i32_0 : i32, i32, i32
  }
  func.func @transform_8(%arg0: i32, %arg1: i32) -> (i32, i32, i32) {
    %c0_i32 = arith.constant 0 : i32
    %c0_i32_0 = arith.constant 0 : i32
    %c0_i32_1 = arith.constant 0 : i32
    return %arg1, %c0_i32, %c0_i32_0 : i32, i32, i32
  }
  func.func @transform_9(%arg0: i32, %arg1: i32) -> (i32, i32, i32) {
    %c0_i32 = arith.constant 0 : i32
    %c0_i32_0 = arith.constant 0 : i32
    %c0_i32_1 = arith.constant 0 : i32
    return %arg1, %c0_i32, %c0_i32_0 : i32, i32, i32
  }
  func.func @transform_10(%arg0: i32, %arg1: i32) -> (i32, i32, i32) {
    %c0_i32 = arith.constant 0 : i32
    %c0_i32_0 = arith.constant 0 : i32
    %c0_i32_1 = arith.constant 0 : i32
    return %arg1, %c0_i32, %c0_i32_0 : i32, i32, i32
  }
  func.func @transform_11(%arg0: i32, %arg1: i32) -> (i32, i32, i32) {
    %c0_i32 = arith.constant 0 : i32
    %c0_i32_0 = arith.constant 0 : i32
    %c0_i32_1 = arith.constant 0 : i32
    return %arg1, %c0_i32, %c0_i32_0 : i32, i32, i32
  }
  func.func @transform_12(%arg0: i32, %arg1: i32) -> (i32, i32, i32) {
    %c0_i32 = arith.constant 0 : i32
    %c0_i32_0 = arith.constant 0 : i32
    %c0_i32_1 = arith.constant 0 : i32
    return %arg1, %c0_i32, %c0_i32_0 : i32, i32, i32
  }
  func.func @transform_13(%arg0: i32, %arg1: i32) -> (i32, i32, i32) {
    %c0_i32 = arith.constant 0 : i32
    %c0_i32_0 = arith.constant 0 : i32
    %c0_i32_1 = arith.constant 0 : i32
    return %arg1, %c0_i32, %c0_i32_0 : i32, i32, i32
  }
  func.func @transform_14(%arg0: i32, %arg1: i32) -> (i32, i32, i32) {
    %c0_i32 = arith.constant 0 : i32
    %c0_i32_0 = arith.constant 0 : i32
    %c0_i32_1 = arith.constant 0 : i32
    return %arg1, %c0_i32, %c0_i32_0 : i32, i32, i32
  }
  func.func @transform_15(%arg0: i32, %arg1: i32) -> (i32, i32, i32) {
    %c0_i32 = arith.constant 0 : i32
    %c0_i32_0 = arith.constant 0 : i32
    %c0_i32_1 = arith.constant 0 : i32
    return %arg1, %c0_i32, %c0_i32_0 : i32, i32, i32
  }
  func.func @transform_16(%arg0: i32, %arg1: i32) -> (i32, i32) {
    %c0_i32 = arith.constant 0 : i32
    %c0_i32_0 = arith.constant 0 : i32
    %c0_i32_1 = arith.constant 0 : i32
    return %c0_i32, %c0_i32_0 : i32, i32
  }
  func.func @transform_17(%arg0: i32, %arg1: i32) -> (i32, i32) {
    %c0_i32 = arith.constant 0 : i32
    %c0_i32_0 = arith.constant 0 : i32
    %c0_i32_1 = arith.constant 0 : i32
    return %c0_i32, %c0_i32_0 : i32, i32
  }
  func.func @transform_18(%arg0: i32, %arg1: i32) -> (i32, i32, i32) {
    %c0_i32 = arith.constant 0 : i32
    %c0_i32_0 = arith.constant 0 : i32
    %c0_i32_1 = arith.constant 0 : i32
    return %arg0, %c0_i32, %c0_i32_0 : i32, i32, i32
  }
}

</mosaic_0001>

<llo_original>
// kernel: theia_feature_forward.1
$region0: #{theia_feature_forward.1}
  #allocation0 [shape = 'u32[]', space=smem, size = 0x4, offset = 0x4, fixed_abs, tag = 'smem constant byte address 0x4 - core index']
  #allocation1 [shape = 'u32[144,128]{1,0:T(1,128)}', space=vmem, size = 0x12000, scoped, tag = 'internal scratch']
  #allocation2 [shape = 'f32[128,128]{1,0:T(8,128)}', space=vmem, size = 0x10000, scoped, tag = 'scratch operand']
  %s0 = inlined_call_operand.vmem [shape: bf16[2,128,768], index: 0, kind: input, shape index: {}]
  %s1 = inlined_call_operand.vmem [shape: f32[1,128,128], index: 1, kind: input, shape index: {}]
  %s2 = inlined_call_operand.vmem [shape: f32[1,128,128], index: 2, kind: input, shape index: {}]
  %s3 = inlined_call_operand.vmem [shape: bf16[768,128], index: 3, kind: input, shape index: {}]
  %s4 = inlined_call_operand.vmem [shape: f32[2,1,128], index: 4, kind: input, shape index: {}]
  %s5 = inlined_call_operand.vmem [shape: f32[2,1,128], index: 5, kind: input, shape index: {}]
  %s6 = inlined_call_operand.vmem [shape: bf16[2,128,768], index: 6, kind: input, shape index: {}]
  %s7 = inlined_call_operand.vmem [shape: f32[2,1,768], index: 7, kind: input, shape index: {}]
  %s8 = inlined_call_operand.vmem [shape: bf16[2,256,128], index: 8, kind: input, shape index: {}]
  %s9 = inlined_call_operand.vmem [shape: f32[2,1,128], index: 9, kind: input, shape index: {}]
  %s10 = inlined_call_operand.vmem [shape: f32[2,1,128], index: 10, kind: input, shape index: {}]
  %s11 = inlined_call_operand.vmem [shape: f32[2,1,128], index: 11, kind: input, shape index: {}]
  %s12 = inlined_call_operand.vmem [shape: bf16[2,128,512], index: 12, kind: input, shape index: {}]
  %s13 = inlined_call_operand.vmem [shape: f32[2,1,512], index: 13, kind: input, shape index: {}]
  %s14 = inlined_call_operand.vmem [shape: bf16[2,512,128], index: 14, kind: input, shape index: {}]
  %s15 = inlined_call_operand.vmem [shape: f32[2,1,128], index: 15, kind: input, shape index: {}]
  %s16 = inlined_call_operand.vmem [shape: f32[1,128], index: 16, kind: input, shape index: {}]
  %s17 = inlined_call_operand.vmem [shape: f32[1,128], index: 17, kind: input, shape index: {}]
  %s18 = inlined_call_operand.vmem [shape: f32[2,128,128], index: 18, kind: output, shape index: {}]
  %s19 = sld [smem:[#allocation0]]
  $region113: #{theia_feature_forward.1} parent=0
    _
  %s21 = ssub.s32 1, %s19
  %s22 = scalar_select 0, %s21, %s19
  loop: start=0, step=1, limit=6
  $region2: #{theia_feature_forward.1} parent=0 // loop_pre_header
    _
  $region3: #{theia_feature_forward.1} parent=0 // loop_header
    %s24 = sphi 0, %s28
    %p25 = scmp.ge.s32.totalorder %s24, 6
    %s31 = sphi 0, %s43
    %s32 = sphi 0, %s39
    %s33 = sphi 0, %s31
    %s34 = sphi 0, %s32
    %s35 = sphi 0, %s33
    %s36 = sphi 0, %s34
    %s46 = sphi 0, %s48
    %s49 = sphi 0, %s46
    %s50 = sphi 0, %s49
    %s66 = sphi 0, %s50
    %s70 = sphi 0, %s70
    %s72 = sphi 0, %s70
    %s73 = sphi 0, %s72
    %s87 = sphi 0, %s73
    %s91 = sphi 0, %s91
    %s93 = sphi 0, %s91
    %s94 = sphi 0, %s93
    %s108 = sphi 0, %s94
    %s112 = sphi 0, %s112
    %s114 = sphi 0, %s112
    %s115 = sphi 0, %s114
    %s129 = sphi 0, %s115
    %s135 = sphi 0, %s137
    %s138 = sphi 0, %s135
    %s139 = sphi 0, %s138
    %s155 = sphi 0, %s139
    %s161 = sphi 0, %s163
    %s164 = sphi 0, %s161
    %s165 = sphi 0, %s164
    %s181 = sphi 0, %s165
    %s187 = sphi 0, %s189
    %s190 = sphi 0, %s187
    %s191 = sphi 0, %s190
    %s207 = sphi 0, %s191
    %s213 = sphi 0, %s215
    %s216 = sphi 0, %s213
    %s217 = sphi 0, %s216
    %s233 = sphi 0, %s217
    %s239 = sphi 0, %s241
    %s242 = sphi 0, %s239
    %s243 = sphi 0, %s242
    %s259 = sphi 0, %s243
    %s265 = sphi 0, %s267
    %s268 = sphi 0, %s265
    %s269 = sphi 0, %s268
    %s285 = sphi 0, %s269
    %s291 = sphi 0, %s293
    %s294 = sphi 0, %s291
    %s295 = sphi 0, %s294
    %s311 = sphi 0, %s295
    %s317 = sphi 0, %s319
    %s320 = sphi 0, %s317
    %s321 = sphi 0, %s320
    %s337 = sphi 0, %s321
    %s343 = sphi 0, %s345
    %s346 = sphi 0, %s343
    %s347 = sphi 0, %s346
    %s363 = sphi 0, %s347
    %s369 = sphi 0, %s371
    %s372 = sphi 0, %s369
    %s373 = sphi 0, %s372
    %s389 = sphi 0, %s373
    %s395 = sphi 0, %s397
    %s398 = sphi 0, %s395
    %s399 = sphi 0, %s398
    %s415 = sphi 0, %s399
    %s421 = sphi 0, %s423
    %s424 = sphi 0, %s421
    %s425 = sphi 0, %s424
    %s441 = sphi 0, %s425
    %s445 = sphi 0, %s445
    %s447 = sphi 0, %s445
    %s448 = sphi 0, %s447
    %s462 = sphi 0, %s448
    %s466 = sphi 0, %s466
    %s468 = sphi 0, %s466
    %s469 = sphi 0, %s468
    %s483 = sphi 0, %s469
    %s489 = sphi 0, %s491
    %s492 = sphi 0, %s489
    %s493 = sphi 0, %s492
    %s509 = sphi 0, %s493
  $region4: #{theia_feature_forward.1} parent=0 // loop_header_branch
    %27 = sbr.rel (%p25) target = $region8
  $region5: #{theia_feature_forward.1} parent=0 // loop_body
    %s29 = ssub.s32 %s24, 1
    %s30 = ssub.s32 %s24, 2
    %s37 = sadd.s32 1, %s32
    %p38 = scmp.ge.s32.totalorder %s37, 2
    %s39 = scalar_select %p38, 0, %s37
    %s40 = sadd.s32 1, %s31
    %s41 = scalar_select %p38, %s40, %s31
    %p42 = scmp.ge.s32.totalorder %s41, 2
    %s43 = scalar_select %p42, 0, %s41
    %s44 = ssub.s32 %s31, %s43
    %p45 = scmp.eq.s32.totalorder %s44, 0
    %s47 = sadd.s32 %s46, 1
    %s48 = scalar_select %p45, %s46, %s47
    %p51 = pneg %p45
    %p52 = scmp.eq.s32.totalorder %s24, 3
    %p53 = por %p51, %p52
    %p54 = scmp.ne.s32.totalorder %s46, %s49
    %p55 = scmp.eq.s32.totalorder %s24, 0
    %p56 = por %p54, %p55
    %p57 = scmp.ne.s32.totalorder %s46, %s49
    %p58 = scmp.eq.s32.totalorder %s29, 3
    %p59 = por %p57, %p58
    %p60 = scmp.ne.s32.totalorder %s49, %s50
    %p61 = scmp.eq.s32.totalorder %s29, 0
    %p62 = por %p60, %p61
    %p63 = scmp.ne.s32.totalorder %s49, %s50
    %p64 = scmp.eq.s32.totalorder %s30, 3
    %p65 = por %p63, %p64
    %p67 = scmp.ne.s32.totalorder %s50, %s66
    %p68 = scmp.eq.s32.totalorder %s30, 0
    %p69 = por %p67, %p68
    %s71 = sadd.s32 %s70, 1
    %p74 = scmp.eq.s32.totalorder %s24, 3
    %p75 = scmp.ne.s32.totalorder %s70, %s72
    %p76 = scmp.eq.s32.totalorder %s24, 0
    %p77 = por %p75, %p76
    %p78 = scmp.ne.s32.totalorder %s70, %s72
    %p79 = scmp.eq.s32.totalorder %s29, 3
    %p80 = por %p78, %p79
    %p81 = scmp.ne.s32.totalorder %s72, %s73
    %p82 = scmp.eq.s32.totalorder %s29, 0
    %p83 = por %p81, %p82
    %p84 = scmp.ne.s32.totalorder %s72, %s73
    %p85 = scmp.eq.s32.totalorder %s30, 3
    %p86 = por %p84, %p85
    %p88 = scmp.ne.s32.totalorder %s73, %s87
    %p89 = scmp.eq.s32.totalorder %s30, 0
    %p90 = por %p88, %p89
    %s92 = sadd.s32 %s91, 1
    %p95 = scmp.eq.s32.totalorder %s24, 3
    %p96 = scmp.ne.s32.totalorder %s91, %s93
    %p97 = scmp.eq.s32.totalorder %s24, 0
    %p98 = por %p96, %p97
    %p99 = scmp.ne.s32.totalorder %s91, %s93
    %p100 = scmp.eq.s32.totalorder %s29, 3
    %p101 = por %p99, %p100
    %p102 = scmp.ne.s32.totalorder %s93, %s94
    %p103 = scmp.eq.s32.totalorder %s29, 0
    %p104 = por %p102, %p103
    %p105 = scmp.ne.s32.totalorder %s93, %s94
    %p106 = scmp.eq.s32.totalorder %s30, 3
    %p107 = por %p105, %p106
    %p109 = scmp.ne.s32.totalorder %s94, %s108
    %p110 = scmp.eq.s32.totalorder %s30, 0
    %p111 = por %p109, %p110
    %s113 = sadd.s32 %s112, 1
    %p116 = scmp.eq.s32.totalorder %s24, 3
    %p117 = scmp.ne.s32.totalorder %s112, %s114
    %p118 = scmp.eq.s32.totalorder %s24, 0
    %p119 = por %p117, %p118
    %p120 = scmp.ne.s32.totalorder %s112, %s114
    %p121 = scmp.eq.s32.totalorder %s29, 3
    %p122 = por %p120, %p121
    %p123 = scmp.ne.s32.totalorder %s114, %s115
    %p124 = scmp.eq.s32.totalorder %s29, 0
    %p125 = por %p123, %p124
    %p126 = scmp.ne.s32.totalorder %s114, %s115
    %p127 = scmp.eq.s32.totalorder %s30, 3
    %p128 = por %p126, %p127
    %p130 = scmp.ne.s32.totalorder %s115, %s129
    %p131 = scmp.eq.s32.totalorder %s30, 0
    %p132 = por %p130, %p131
    %s133 = ssub.s32 %s32, %s39
    %p134 = scmp.eq.s32.totalorder %s133, 0
    %s136 = sadd.s32 %s135, 1
    %s137 = scalar_select %p134, %s135, %s136
    %p140 = pneg %p134
    %p141 = scmp.eq.s32.totalorder %s24, 3
    %p142 = por %p140, %p141
    %p143 = scmp.ne.s32.totalorder %s135, %s138
    %p144 = scmp.eq.s32.totalorder %s24, 0
    %p145 = por %p143, %p144
    %p146 = scmp.ne.s32.totalorder %s135, %s138
    %p147 = scmp.eq.s32.totalorder %s29, 3
    %p148 = por %p146, %p147
    %p149 = scmp.ne.s32.totalorder %s138, %s139
    %p150 = scmp.eq.s32.totalorder %s29, 0
    %p151 = por %p149, %p150
    %p152 = scmp.ne.s32.totalorder %s138, %s139
    %p153 = scmp.eq.s32.totalorder %s30, 3
    %p154 = por %p152, %p153
    %p156 = scmp.ne.s32.totalorder %s139, %s155
    %p157 = scmp.eq.s32.totalorder %s30, 0
    %p158 = por %p156, %p157
    %s159 = ssub.s32 %s32, %s39
    %p160 = scmp.eq.s32.totalorder %s159, 0
    %s162 = sadd.s32 %s161, 1
    %s163 = scalar_select %p160, %s161, %s162
    %p166 = pneg %p160
    %p167 = scmp.eq.s32.totalorder %s24, 3
    %p168 = por %p166, %p167
    %p169 = scmp.ne.s32.totalorder %s161, %s164
    %p170 = scmp.eq.s32.totalorder %s24, 0
    %p171 = por %p169, %p170
    %p172 = scmp.ne.s32.totalorder %s161, %s164
    %p173 = scmp.eq.s32.totalorder %s29, 3
    %p174 = por %p172, %p173
    %p175 = scmp.ne.s32.totalorder %s164, %s165
    %p176 = scmp.eq.s32.totalorder %s29, 0
    %p177 = por %p175, %p176
    %p178 = scmp.ne.s32.totalorder %s164, %s165
    %p179 = scmp.eq.s32.totalorder %s30, 3
    %p180 = por %p178, %p179
    %p182 = scmp.ne.s32.totalorder %s165, %s181
    %p183 = scmp.eq.s32.totalorder %s30, 0
    %p184 = por %p182, %p183
    %s185 = ssub.s32 %s32, %s39
    %p186 = scmp.eq.s32.totalorder %s185, 0
    %s188 = sadd.s32 %s187, 1
    %s189 = scalar_select %p186, %s187, %s188
    %p192 = pneg %p186
    %p193 = scmp.eq.s32.totalorder %s24, 3
    %p194 = por %p192, %p193
    %p195 = scmp.ne.s32.totalorder %s187, %s190
    %p196 = scmp.eq.s32.totalorder %s24, 0
    %p197 = por %p195, %p196
    %p198 = scmp.ne.s32.totalorder %s187, %s190
    %p199 = scmp.eq.s32.totalorder %s29, 3
    %p200 = por %p198, %p199
    %p201 = scmp.ne.s32.totalorder %s190, %s191
    %p202 = scmp.eq.s32.totalorder %s29, 0
    %p203 = por %p201, %p202
    %p204 = scmp.ne.s32.totalorder %s190, %s191
    %p205 = scmp.eq.s32.totalorder %s30, 3
    %p206 = por %p204, %p205
    %p208 = scmp.ne.s32.totalorder %s191, %s207
    %p209 = scmp.eq.s32.totalorder %s30, 0
    %p210 = por %p208, %p209
    %s211 = ssub.s32 %s32, %s39
    %p212 = scmp.eq.s32.totalorder %s211, 0
    %s214 = sadd.s32 %s213, 1
    %s215 = scalar_select %p212, %s213, %s214
    %p218 = pneg %p212
    %p219 = scmp.eq.s32.totalorder %s24, 3
    %p220 = por %p218, %p219
    %p221 = scmp.ne.s32.totalorder %s213, %s216
    %p222 = scmp.eq.s32.totalorder %s24, 0
    %p223 = por %p221, %p222
    %p224 = scmp.ne.s32.totalorder %s213, %s216
    %p225 = scmp.eq.s32.totalorder %s29, 3
    %p226 = por %p224, %p225
    %p227 = scmp.ne.s32.totalorder %s216, %s217
    %p228 = scmp.eq.s32.totalorder %s29, 0
    %p229 = por %p227, %p228
    %p230 = scmp.ne.s32.totalorder %s216, %s217
    %p231 = scmp.eq.s32.totalorder %s30, 3
    %p232 = por %p230, %p231
    %p234 = scmp.ne.s32.totalorder %s217, %s233
    %p235 = scmp.eq.s32.totalorder %s30, 0
    %p236 = por %p234, %p235
    %s237 = ssub.s32 %s32, %s39
    %p238 = scmp.eq.s32.totalorder %s237, 0
    %s240 = sadd.s32 %s239, 1
    %s241 = scalar_select %p238, %s239, %s240
    %p244 = pneg %p238
    %p245 = scmp.eq.s32.totalorder %s24, 3
    %p246 = por %p244, %p245
    %p247 = scmp.ne.s32.totalorder %s239, %s242
    %p248 = scmp.eq.s32.totalorder %s24, 0
    %p249 = por %p247, %p248
    %p250 = scmp.ne.s32.totalorder %s239, %s242
    %p251 = scmp.eq.s32.totalorder %s29, 3
    %p252 = por %p250, %p251
    %p253 = scmp.ne.s32.totalorder %s242, %s243
    %p254 = scmp.eq.s32.totalorder %s29, 0
    %p255 = por %p253, %p254
    %p256 = scmp.ne.s32.totalorder %s242, %s243
    %p257 = scmp.eq.s32.totalorder %s30, 3
    %p258 = por %p256, %p257
    %p260 = scmp.ne.s32.totalorder %s243, %s259
    %p261 = scmp.eq.s32.totalorder %s30, 0
    %p262 = por %p260, %p261
    %s263 = ssub.s32 %s32, %s39
    %p264 = scmp.eq.s32.totalorder %s263, 0
    %s266 = sadd.s32 %s265, 1
    %s267 = scalar_select %p264, %s265, %s266
    %p270 = pneg %p264
    %p271 = scmp.eq.s32.totalorder %s24, 3
    %p272 = por %p270, %p271
    %p273 = scmp.ne.s32.totalorder %s265, %s268
    %p274 = scmp.eq.s32.totalorder %s24, 0
    %p275 = por %p273, %p274
    %p276 = scmp.ne.s32.totalorder %s265, %s268
    %p277 = scmp.eq.s32.totalorder %s29, 3
    %p278 = por %p276, %p277
    %p279 = scmp.ne.s32.totalorder %s268, %s269
    %p280 = scmp.eq.s32.totalorder %s29, 0
    %p281 = por %p279, %p280
    %p282 = scmp.ne.s32.totalorder %s268, %s269
    %p283 = scmp.eq.s32.totalorder %s30, 3
    %p284 = por %p282, %p283
    %p286 = scmp.ne.s32.totalorder %s269, %s285
    %p287 = scmp.eq.s32.totalorder %s30, 0
    %p288 = por %p286, %p287
    %s289 = ssub.s32 %s32, %s39
    %p290 = scmp.eq.s32.totalorder %s289, 0
    %s292 = sadd.s32 %s291, 1
    %s293 = scalar_select %p290, %s291, %s292
    %p296 = pneg %p290
    %p297 = scmp.eq.s32.totalorder %s24, 3
    %p298 = por %p296, %p297
    %p299 = scmp.ne.s32.totalorder %s291, %s294
    %p300 = scmp.eq.s32.totalorder %s24, 0
    %p301 = por %p299, %p300
    %p302 = scmp.ne.s32.totalorder %s291, %s294
    %p303 = scmp.eq.s32.totalorder %s29, 3
    %p304 = por %p302, %p303
    %p305 = scmp.ne.s32.totalorder %s294, %s295
    %p306 = scmp.eq.s32.totalorder %s29, 0
    %p307 = por %p305, %p306
    %p308 = scmp.ne.s32.totalorder %s294, %s295
    %p309 = scmp.eq.s32.totalorder %s30, 3
    %p310 = por %p308, %p309
    %p312 = scmp.ne.s32.totalorder %s295, %s311
    %p313 = scmp.eq.s32.totalorder %s30, 0
    %p314 = por %p312, %p313
    %s315 = ssub.s32 %s32, %s39
    %p316 = scmp.eq.s32.totalorder %s315, 0
    %s318 = sadd.s32 %s317, 1
    %s319 = scalar_select %p316, %s317, %s318
    %p322 = pneg %p316
    %p323 = scmp.eq.s32.totalorder %s24, 3
    %p324 = por %p322, %p323
    %p325 = scmp.ne.s32.totalorder %s317, %s320
    %p326 = scmp.eq.s32.totalorder %s24, 0
    %p327 = por %p325, %p326
    %p328 = scmp.ne.s32.totalorder %s317, %s320
    %p329 = scmp.eq.s32.totalorder %s29, 3
    %p330 = por %p328, %p329
    %p331 = scmp.ne.s32.totalorder %s320, %s321
    %p332 = scmp.eq.s32.totalorder %s29, 0
    %p333 = por %p331, %p332
    %p334 = scmp.ne.s32.totalorder %s320, %s321
    %p335 = scmp.eq.s32.totalorder %s30, 3
    %p336 = por %p334, %p335
    %p338 = scmp.ne.s32.totalorder %s321, %s337
    %p339 = scmp.eq.s32.totalorder %s30, 0
    %p340 = por %p338, %p339
    %s341 = ssub.s32 %s32, %s39
    %p342 = scmp.eq.s32.totalorder %s341, 0
    %s344 = sadd.s32 %s343, 1
    %s345 = scalar_select %p342, %s343, %s344
    %p348 = pneg %p342
    %p349 = scmp.eq.s32.totalorder %s24, 3
    %p350 = por %p348, %p349
    %p351 = scmp.ne.s32.totalorder %s343, %s346
    %p352 = scmp.eq.s32.totalorder %s24, 0
    %p353 = por %p351, %p352
    %p354 = scmp.ne.s32.totalorder %s343, %s346
    %p355 = scmp.eq.s32.totalorder %s29, 3
    %p356 = por %p354, %p355
    %p357 = scmp.ne.s32.totalorder %s346, %s347
    %p358 = scmp.eq.s32.totalorder %s29, 0
    %p359 = por %p357, %p358
    %p360 = scmp.ne.s32.totalorder %s346, %s347
    %p361 = scmp.eq.s32.totalorder %s30, 3
    %p362 = por %p360, %p361
    %p364 = scmp.ne.s32.totalorder %s347, %s363
    %p365 = scmp.eq.s32.totalorder %s30, 0
    %p366 = por %p364, %p365
    %s367 = ssub.s32 %s32, %s39
    %p368 = scmp.eq.s32.totalorder %s367, 0
    %s370 = sadd.s32 %s369, 1
    %s371 = scalar_select %p368, %s369, %s370
    %p374 = pneg %p368
    %p375 = scmp.eq.s32.totalorder %s24, 3
    %p376 = por %p374, %p375
    %p377 = scmp.ne.s32.totalorder %s369, %s372
    %p378 = scmp.eq.s32.totalorder %s24, 0
    %p379 = por %p377, %p378
    %p380 = scmp.ne.s32.totalorder %s369, %s372
    %p381 = scmp.eq.s32.totalorder %s29, 3
    %p382 = por %p380, %p381
    %p383 = scmp.ne.s32.totalorder %s372, %s373
    %p384 = scmp.eq.s32.totalorder %s29, 0
    %p385 = por %p383, %p384
    %p386 = scmp.ne.s32.totalorder %s372, %s373
    %p387 = scmp.eq.s32.totalorder %s30, 3
    %p388 = por %p386, %p387
    %p390 = scmp.ne.s32.totalorder %s373, %s389
    %p391 = scmp.eq.s32.totalorder %s30, 0
    %p392 = por %p390, %p391
    %s393 = ssub.s32 %s32, %s39
    %p394 = scmp.eq.s32.totalorder %s393, 0
    %s396 = sadd.s32 %s395, 1
    %s397 = scalar_select %p394, %s395, %s396
    %p400 = pneg %p394
    %p401 = scmp.eq.s32.totalorder %s24, 3
    %p402 = por %p400, %p401
    %p403 = scmp.ne.s32.totalorder %s395, %s398
    %p404 = scmp.eq.s32.totalorder %s24, 0
    %p405 = por %p403, %p404
    %p406 = scmp.ne.s32.totalorder %s395, %s398
    %p407 = scmp.eq.s32.totalorder %s29, 3
    %p408 = por %p406, %p407
    %p409 = scmp.ne.s32.totalorder %s398, %s399
    %p410 = scmp.eq.s32.totalorder %s29, 0
    %p411 = por %p409, %p410
    %p412 = scmp.ne.s32.totalorder %s398, %s399
    %p413 = scmp.eq.s32.totalorder %s30, 3
    %p414 = por %p412, %p413
    %p416 = scmp.ne.s32.totalorder %s399, %s415
    %p417 = scmp.eq.s32.totalorder %s30, 0
    %p418 = por %p416, %p417
    %s419 = ssub.s32 %s32, %s39
    %p420 = scmp.eq.s32.totalorder %s419, 0
    %s422 = sadd.s32 %s421, 1
    %s423 = scalar_select %p420, %s421, %s422
    %p426 = pneg %p420
    %p427 = scmp.eq.s32.totalorder %s24, 3
    %p428 = por %p426, %p427
    %p429 = scmp.ne.s32.totalorder %s421, %s424
    %p430 = scmp.eq.s32.totalorder %s24, 0
    %p431 = por %p429, %p430
    %p432 = scmp.ne.s32.totalorder %s421, %s424
    %p433 = scmp.eq.s32.totalorder %s29, 3
    %p434 = por %p432, %p433
    %p435 = scmp.ne.s32.totalorder %s424, %s425
    %p436 = scmp.eq.s32.totalorder %s29, 0
    %p437 = por %p435, %p436
    %p438 = scmp.ne.s32.totalorder %s424, %s425
    %p439 = scmp.eq.s32.totalorder %s30, 3
    %p440 = por %p438, %p439
    %p442 = scmp.ne.s32.totalorder %s425, %s441
    %p443 = scmp.eq.s32.totalorder %s30, 0
    %p444 = por %p442, %p443
    %s446 = sadd.s32 %s445, 1
    %p449 = scmp.eq.s32.totalorder %s24, 3
    %p450 = scmp.ne.s32.totalorder %s445, %s447
    %p451 = scmp.eq.s32.totalorder %s24, 0
    %p452 = por %p450, %p451
    %p453 = scmp.ne.s32.totalorder %s445, %s447
    %p454 = scmp.eq.s32.totalorder %s29, 3
    %p455 = por %p453, %p454
    %p456 = scmp.ne.s32.totalorder %s447, %s448
    %p457 = scmp.eq.s32.totalorder %s29, 0
    %p458 = por %p456, %p457
    %p459 = scmp.ne.s32.totalorder %s447, %s448
    %p460 = scmp.eq.s32.totalorder %s30, 3
    %p461 = por %p459, %p460
    %p463 = scmp.ne.s32.totalorder %s448, %s462
    %p464 = scmp.eq.s32.totalorder %s30, 0
    %p465 = por %p463, %p464
    %s467 = sadd.s32 %s466, 1
    %p470 = scmp.eq.s32.totalorder %s24, 3
    %p471 = scmp.ne.s32.totalorder %s466, %s468
    %p472 = scmp.eq.s32.totalorder %s24, 0
    %p473 = por %p471, %p472
    %p474 = scmp.ne.s32.totalorder %s466, %s468
    %p475 = scmp.eq.s32.totalorder %s29, 3
    %p476 = por %p474, %p475
    %p477 = scmp.ne.s32.totalorder %s468, %s469
    %p478 = scmp.eq.s32.totalorder %s29, 0
    %p479 = por %p477, %p478
    %p480 = scmp.ne.s32.totalorder %s468, %s469
    %p481 = scmp.eq.s32.totalorder %s30, 3
    %p482 = por %p480, %p481
    %p484 = scmp.ne.s32.totalorder %s469, %s483
    %p485 = scmp.eq.s32.totalorder %s30, 0
    %p486 = por %p484, %p485
    %s487 = ssub.s32 %s31, %s43
    %p488 = scmp.eq.s32.totalorder %s487, 0
    %s490 = sadd.s32 %s489, 1
    %s491 = scalar_select %p488, %s489, %s490
    %p494 = pneg %p488
    %p495 = scmp.eq.s32.totalorder %s24, 3
    %p496 = por %p494, %p495
    %p497 = scmp.ne.s32.totalorder %s489, %s492
    %p498 = scmp.eq.s32.totalorder %s24, 0
    %p499 = por %p497, %p498
    %p500 = scmp.ne.s32.totalorder %s489, %s492
    %p501 = scmp.eq.s32.totalorder %s29, 3
    %p502 = por %p500, %p501
    %p503 = scmp.ne.s32.totalorder %s492, %s493
    %p504 = scmp.eq.s32.totalorder %s29, 0
    %p505 = por %p503, %p504
    %p506 = scmp.ne.s32.totalorder %s492, %s493
    %p507 = scmp.eq.s32.totalorder %s30, 3
    %p508 = por %p506, %p507
    %p510 = scmp.ne.s32.totalorder %s493, %s509
    %p511 = scmp.eq.s32.totalorder %s30, 0
    %p512 = por %p510, %p511
    %p513 = scmp.le.s32.totalorder 1, %s24
    %p514 = scmp.lt.s32.totalorder %s24, 5
    %p515 = pnand %p513, %p514
    %p516 = pneg %p515
    // Predicated region
    $region9: #{theia_feature_forward.1} parent=5 // pred_check
      _
    $region10: #{theia_feature_forward.1} parent=5 // pred_check_branch
      %518 = sbr.rel (%p515) target = $region12
    $region11: #{theia_feature_forward.1} parent=5 // pred_region
      %s519 = ssub.s32 %s24, 1
      // Predicated region
      $region13: #{theia_feature_forward.1} parent=11 // pred_check
        %p520 = pneg %p83
      $region14: #{theia_feature_forward.1} parent=11 // pred_check_branch
        %522 = sbr.rel (%p520) target = $region16
      $region15: #{theia_feature_forward.1} parent=11 // pred_region
        _
      $region16: #{theia_feature_forward.1} parent=11 // pred_fallthru
        _
      // Predicated region
      $region17: #{theia_feature_forward.1} parent=11 // pred_check
        %p523 = pneg %p104
      $region18: #{theia_feature_forward.1} parent=11 // pred_check_branch
        %525 = sbr.rel (%p523) target = $region20
      $region19: #{theia_feature_forward.1} parent=11 // pred_region
        _
      $region20: #{theia_feature_forward.1} parent=11 // pred_fallthru
        _
      // Predicated region
      $region21: #{theia_feature_forward.1} parent=11 // pred_check
        %p526 = pneg %p125
      $region22: #{theia_feature_forward.1} parent=11 // pred_check_branch
        %528 = sbr.rel (%p526) target = $region24
      $region23: #{theia_feature_forward.1} parent=11 // pred_region
        _
      $region24: #{theia_feature_forward.1} parent=11 // pred_fallthru
        _
      // Predicated region
      $region25: #{theia_feature_forward.1} parent=11 // pred_check
        %p529 = pneg %p458
      $region26: #{theia_feature_forward.1} parent=11 // pred_check_branch
        %531 = sbr.rel (%p529) target = $region28
      $region27: #{theia_feature_forward.1} parent=11 // pred_region
        _
      $region28: #{theia_feature_forward.1} parent=11 // pred_fallthru
        _
      // Predicated region
      $region29: #{theia_feature_forward.1} parent=11 // pred_check
        %p532 = pneg %p479
      $region30: #{theia_feature_forward.1} parent=11 // pred_check_branch
        %534 = sbr.rel (%p532) target = $region32
      $region31: #{theia_feature_forward.1} parent=11 // pred_region
        _
      $region32: #{theia_feature_forward.1} parent=11 // pred_fallthru
        _
    $region12: #{theia_feature_forward.1} parent=5 // pred_fallthru
      _
    %p535 = scmp.lt.s32.totalorder %s24, 4
    // Predicated region
    $region33: #{theia_feature_forward.1} parent=5 // pred_check
      %p536 = pneg %p535
    $region34: #{theia_feature_forward.1} parent=5 // pred_check_branch
      %538 = sbr.rel (%p536) target = $region36
    $region35: #{theia_feature_forward.1} parent=5 // pred_region
      // Predicated region
      $region37: #{theia_feature_forward.1} parent=35 // pred_check
        %p539 = pneg %p56
      $region38: #{theia_feature_forward.1} parent=35 // pred_check_branch
        %541 = sbr.rel (%p539) target = $region40
      $region39: #{theia_feature_forward.1} parent=35 // pred_region
        %p542 = scmp.lt.s32.totalorder %s31, 1
        %s543 = scalar_select %p542, %s31, 1
        %s544 = smul.addr %s543, 96
        %s545 = smul.addr %s544, 4
        %s546 = scalar_lea.vmem %s0, %s545
      $region40: #{theia_feature_forward.1} parent=35 // pred_fallthru
        _
      // Predicated region
      $region41: #{theia_feature_forward.1} parent=35 // pred_check
        %p547 = pneg %p145
      $region42: #{theia_feature_forward.1} parent=35 // pred_check_branch
        %549 = sbr.rel (%p547) target = $region44
      $region43: #{theia_feature_forward.1} parent=35 // pred_region
        %p550 = scmp.lt.s32.totalorder %s32, 1
        %s551 = scalar_select %p550, %s32, 1
        %s552 = scalar_lea.vmem %s4, %s551
      $region44: #{theia_feature_forward.1} parent=35 // pred_fallthru
        _
      // Predicated region
      $region45: #{theia_feature_forward.1} parent=35 // pred_check
        %p553 = pneg %p171
      $region46: #{theia_feature_forward.1} parent=35 // pred_check_branch
        %555 = sbr.rel (%p553) target = $region48
      $region47: #{theia_feature_forward.1} parent=35 // pred_region
        %p556 = scmp.lt.s32.totalorder %s32, 1
        %s557 = scalar_select %p556, %s32, 1
        %s558 = scalar_lea.vmem %s5, %s557
      $region48: #{theia_feature_forward.1} parent=35 // pred_fallthru
        _
      // Predicated region
      $region49: #{theia_feature_forward.1} parent=35 // pred_check
        %p559 = pneg %p197
      $region50: #{theia_feature_forward.1} parent=35 // pred_check_branch
        %561 = sbr.rel (%p559) target = $region52
      $region51: #{theia_feature_forward.1} parent=35 // pred_region
        %p562 = scmp.lt.s32.totalorder %s32, 1
        %s563 = scalar_select %p562, %s32, 1
        %s564 = smul.addr %s563, 96
        %s565 = smul.addr %s564, 4
        %s566 = scalar_lea.vmem %s6, %s565
      $region52: #{theia_feature_forward.1} parent=35 // pred_fallthru
        _
      // Predicated region
      $region53: #{theia_feature_forward.1} parent=35 // pred_check
        %p567 = pneg %p223
      $region54: #{theia_feature_forward.1} parent=35 // pred_check_branch
        %569 = sbr.rel (%p567) target = $region56
      $region55: #{theia_feature_forward.1} parent=35 // pred_region
        %p570 = scmp.lt.s32.totalorder %s32, 1
        %s571 = scalar_select %p570, %s32, 1
        %s572 = smul.addr %s571, 6
        %s573 = scalar_lea.vmem %s7, %s572
      $region56: #{theia_feature_forward.1} parent=35 // pred_fallthru
        _
      // Predicated region
      $region57: #{theia_feature_forward.1} parent=35 // pred_check
        %p574 = pneg %p249
      $region58: #{theia_feature_forward.1} parent=35 // pred_check_branch
        %576 = sbr.rel (%p574) target = $region60
      $region59: #{theia_feature_forward.1} parent=35 // pred_region
        %p577 = scmp.lt.s32.totalorder %s32, 1
        %s578 = scalar_select %p577, %s32, 1
        %s579 = smul.addr %s578, 32
        %s580 = smul.addr %s579, 4
        %s581 = scalar_lea.vmem %s8, %s580
      $region60: #{theia_feature_forward.1} parent=35 // pred_fallthru
        _
      // Predicated region
      $region61: #{theia_feature_forward.1} parent=35 // pred_check
        %p582 = pneg %p275
      $region62: #{theia_feature_forward.1} parent=35 // pred_check_branch
        %584 = sbr.rel (%p582) target = $region64
      $region63: #{theia_feature_forward.1} parent=35 // pred_region
        %p585 = scmp.lt.s32.totalorder %s32, 1
        %s586 = scalar_select %p585, %s32, 1
        %s587 = scalar_lea.vmem %s9, %s586
      $region64: #{theia_feature_forward.1} parent=35 // pred_fallthru
        _
      // Predicated region
      $region65: #{theia_feature_forward.1} parent=35 // pred_check
        %p588 = pneg %p301
      $region66: #{theia_feature_forward.1} parent=35 // pred_check_branch
        %590 = sbr.rel (%p588) target = $region68
      $region67: #{theia_feature_forward.1} parent=35 // pred_region
        %p591 = scmp.lt.s32.totalorder %s32, 1
        %s592 = scalar_select %p591, %s32, 1
        %s593 = scalar_lea.vmem %s10, %s592
      $region68: #{theia_feature_forward.1} parent=35 // pred_fallthru
        _
      // Predicated region
      $region69: #{theia_feature_forward.1} parent=35 // pred_check
        %p594 = pneg %p327
      $region70: #{theia_feature_forward.1} parent=35 // pred_check_branch
        %596 = sbr.rel (%p594) target = $region72
      $region71: #{theia_feature_forward.1} parent=35 // pred_region
        %p597 = scmp.lt.s32.totalorder %s32, 1
        %s598 = scalar_select %p597, %s32, 1
        %s599 = scalar_lea.vmem %s11, %s598
      $region72: #{theia_feature_forward.1} parent=35 // pred_fallthru
        _
      // Predicated region
      $region73: #{theia_feature_forward.1} parent=35 // pred_check
        %p600 = pneg %p353
      $region74: #{theia_feature_forward.1} parent=35 // pred_check_branch
        %602 = sbr.rel (%p600) target = $region76
      $region75: #{theia_feature_forward.1} parent=35 // pred_region
        %p603 = scmp.lt.s32.totalorder %s32, 1
        %s604 = scalar_select %p603, %s32, 1
        %s605 = smul.addr %s604, 64
        %s606 = smul.addr %s605, 4
        %s607 = scalar_lea.vmem %s12, %s606
      $region76: #{theia_feature_forward.1} parent=35 // pred_fallthru
        _
      // Predicated region
      $region77: #{theia_feature_forward.1} parent=35 // pred_check
        %p608 = pneg %p379
      $region78: #{theia_feature_forward.1} parent=35 // pred_check_branch
        %610 = sbr.rel (%p608) target = $region80
      $region79: #{theia_feature_forward.1} parent=35 // pred_region
        %p611 = scmp.lt.s32.totalorder %s32, 1
        %s612 = scalar_select %p611, %s32, 1
        %s613 = smul.addr %s612, 4
        %s614 = scalar_lea.vmem %s13, %s613
      $region80: #{theia_feature_forward.1} parent=35 // pred_fallthru
        _
      // Predicated region
      $region81: #{theia_feature_forward.1} parent=35 // pred_check
        %p615 = pneg %p405
      $region82: #{theia_feature_forward.1} parent=35 // pred_check_branch
        %617 = sbr.rel (%p615) target = $region84
      $region83: #{theia_feature_forward.1} parent=35 // pred_region
        %p618 = scmp.lt.s32.totalorder %s32, 1
        %s619 = scalar_select %p618, %s32, 1
        %s620 = smul.addr %s619, 64
        %s621 = smul.addr %s620, 4
        %s622 = scalar_lea.vmem %s14, %s621
      $region84: #{theia_feature_forward.1} parent=35 // pred_fallthru
        _
      // Predicated region
      $region85: #{theia_feature_forward.1} parent=35 // pred_check
        %p623 = pneg %p431
      $region86: #{theia_feature_forward.1} parent=35 // pred_check_branch
        %625 = sbr.rel (%p623) target = $region88
      $region87: #{theia_feature_forward.1} parent=35 // pred_region
        %p626 = scmp.lt.s32.totalorder %s32, 1
        %s627 = scalar_select %p626, %s32, 1
        %s628 = scalar_lea.vmem %s15, %s627
      $region88: #{theia_feature_forward.1} parent=35 // pred_fallthru
        _
    $region36: #{theia_feature_forward.1} parent=5 // pred_fallthru
      _
    %p629 = scmp.le.s32.totalorder 1, %s24
    %p630 = scmp.lt.s32.totalorder %s24, 5
    %p631 = pnand %p629, %p630
    %p632 = pneg %p631
    // Predicated region
    $region89: #{theia_feature_forward.1} parent=5 // pred_check
      _
    $region90: #{theia_feature_forward.1} parent=5 // pred_check_branch
      %634 = sbr.rel (%p631) target = $region92
    $region91: #{theia_feature_forward.1} parent=5 // pred_region
      %s635 = ssub.s32 %s24, 1
      %p636 = scmp.lt.s32.totalorder %s33, 1
      %s637 = scalar_select %p636, %s33, 1
      %s638 = smul.addr %s637, 96
      %s639 = smul.addr %s638, 4
      %s640 = scalar_lea.vmem %s0, %s639
      %p641 = pneg %p62
      %p642 = pneg %p59
      %p643 = pneg %p83
      %p644 = pneg %p80
      %p645 = pneg %p104
      %p646 = pneg %p101
      %p647 = pneg %p125
      %p648 = pneg %p122
      %p649 = scmp.lt.s32.totalorder %s34, 1
      %s650 = scalar_select %p649, %s34, 1
      %s651 = scalar_lea.vmem %s4, %s650
      %p652 = pneg %p151
      %p653 = pneg %p148
      %p654 = scmp.lt.s32.totalorder %s34, 1
      %s655 = scalar_select %p654, %s34, 1
      %s656 = scalar_lea.vmem %s5, %s655
      %p657 = pneg %p177
      %p658 = pneg %p174
      %p659 = scmp.lt.s32.totalorder %s34, 1
      %s660 = scalar_select %p659, %s34, 1
      %s661 = smul.addr %s660, 96
      %s662 = smul.addr %s661, 4
      %s663 = scalar_lea.vmem %s6, %s662
      %p664 = pneg %p203
      %p665 = pneg %p200
      %p666 = scmp.lt.s32.totalorder %s34, 1
      %s667 = scalar_select %p666, %s34, 1
      %s668 = smul.addr %s667, 6
      %s669 = scalar_lea.vmem %s7, %s668
      %p670 = pneg %p229
      %p671 = pneg %p226
      %p672 = scmp.lt.s32.totalorder %s34, 1
      %s673 = scalar_select %p672, %s34, 1
      %s674 = smul.addr %s673, 32
      %s675 = smul.addr %s674, 4
      %s676 = scalar_lea.vmem %s8, %s675
      %p677 = pneg %p255
      %p678 = pneg %p252
      %p679 = scmp.lt.s32.totalorder %s34, 1
      %s680 = scalar_select %p679, %s34, 1
      %s681 = scalar_lea.vmem %s9, %s680
      %p682 = pneg %p281
      %p683 = pneg %p278
      %p684 = scmp.lt.s32.totalorder %s34, 1
      %s685 = scalar_select %p684, %s34, 1
      %s686 = scalar_lea.vmem %s10, %s685
      %p687 = pneg %p307
      %p688 = pneg %p304
      %p689 = scmp.lt.s32.totalorder %s34, 1
      %s690 = scalar_select %p689, %s34, 1
      %s691 = scalar_lea.vmem %s11, %s690
      %p692 = pneg %p333
      %p693 = pneg %p330
      %p694 = scmp.lt.s32.totalorder %s34, 1
      %s695 = scalar_select %p694, %s34, 1
      %s696 = smul.addr %s695, 64
      %s697 = smul.addr %s696, 4
      %s698 = scalar_lea.vmem %s12, %s697
      %p699 = pneg %p359
      %p700 = pneg %p356
      %p701 = scmp.lt.s32.totalorder %s34, 1
      %s702 = scalar_select %p701, %s34, 1
      %s703 = smul.addr %s702, 4
      %s704 = scalar_lea.vmem %s13, %s703
      %p705 = pneg %p385
      %p706 = pneg %p382
      %p707 = scmp.lt.s32.totalorder %s34, 1
      %s708 = scalar_select %p707, %s34, 1
      %s709 = smul.addr %s708, 64
      %s710 = smul.addr %s709, 4
      %s711 = scalar_lea.vmem %s14, %s710
      %p712 = pneg %p411
      %p713 = pneg %p408
      %p714 = scmp.lt.s32.totalorder %s34, 1
      %s715 = scalar_select %p714, %s34, 1
      %s716 = scalar_lea.vmem %s15, %s715
      %p717 = pneg %p437
      %p718 = pneg %p434
      %p719 = pneg %p458
      %p720 = pneg %p455
      %p721 = pneg %p479
      %p722 = pneg %p476
      %p723 = pneg %p505
      %p724 = pneg %p502
      %p725 = scmp.lt.s32.totalorder %s33, 1
      %s726 = scalar_select %p725, %s33, 1
      %s727 = smul.addr %s726, 16
      %s728 = smul.addr %s727, 8
      %s729 = scalar_lea.vmem %s18, %s728
      %p730 = scmp.lt.s32.totalorder %s33, 1
      %s731 = scalar_select %p730, %s33, 1
      %s732 = smul.addr %s731, 96
      %s733 = smul.addr %s732, 4
      %s734 = scalar_lea.vmem %s0, %s733
      %p735 = scmp.lt.s32.totalorder %s34, 1
      %s736 = scalar_select %p735, %s34, 1
      %s737 = scalar_lea.vmem %s4, %s736
      %p738 = scmp.lt.s32.totalorder %s34, 1
      %s739 = scalar_select %p738, %s34, 1
      %s740 = scalar_lea.vmem %s5, %s739
      %p741 = scmp.lt.s32.totalorder %s34, 1
      %s742 = scalar_select %p741, %s34, 1
      %s743 = smul.addr %s742, 96
      %s744 = smul.addr %s743, 4
      %s745 = scalar_lea.vmem %s6, %s744
      %p746 = scmp.lt.s32.totalorder %s34, 1
      %s747 = scalar_select %p746, %s34, 1
      %s748 = smul.addr %s747, 6
      %s749 = scalar_lea.vmem %s7, %s748
      %p750 = scmp.lt.s32.totalorder %s34, 1
      %s751 = scalar_select %p750, %s34, 1
      %s752 = smul.addr %s751, 32
      %s753 = smul.addr %s752, 4
      %s754 = scalar_lea.vmem %s8, %s753
      %p755 = scmp.lt.s32.totalorder %s34, 1
      %s756 = scalar_select %p755, %s34, 1
      %s757 = scalar_lea.vmem %s9, %s756
      %p758 = scmp.lt.s32.totalorder %s34, 1
      %s759 = scalar_select %p758, %s34, 1
      %s760 = scalar_lea.vmem %s10, %s759
      %p761 = scmp.lt.s32.totalorder %s34, 1
      %s762 = scalar_select %p761, %s34, 1
      %s763 = scalar_lea.vmem %s11, %s762
      %p764 = scmp.lt.s32.totalorder %s34, 1
      %s765 = scalar_select %p764, %s34, 1
      %s766 = smul.addr %s765, 64
      %s767 = smul.addr %s766, 4
      %s768 = scalar_lea.vmem %s12, %s767
      %p769 = scmp.lt.s32.totalorder %s34, 1
      %s770 = scalar_select %p769, %s34, 1
      %s771 = smul.addr %s770, 4
      %s772 = scalar_lea.vmem %s13, %s771
      %p773 = scmp.lt.s32.totalorder %s34, 1
      %s774 = scalar_select %p773, %s34, 1
      %s775 = smul.addr %s774, 64
      %s776 = smul.addr %s775, 4
      %s777 = scalar_lea.vmem %s14, %s776
      %p778 = scmp.lt.s32.totalorder %s34, 1
      %s779 = scalar_select %p778, %s34, 1
      %s780 = scalar_lea.vmem %s15, %s779
      %p781 = scmp.lt.s32.totalorder %s33, 1
      %s782 = scalar_select %p781, %s33, 1
      %s783 = smul.addr %s782, 16
      %s784 = smul.addr %s783, 8
      %s785 = scalar_lea.vmem %s18, %s784
      %p787 = scmp.eq.s32.totalorder %s34, 0
      // Predicated region
      $region93: #{theia_feature_forward.1} parent=91 // pred_check
        %p788 = pneg %p787
      $region94: #{theia_feature_forward.1} parent=91 // pred_check_branch
        %790 = sbr.rel (%p788) target = $region96
      $region95: #{theia_feature_forward.1} parent=91 // pred_region
        %v791 = vld [vmem:[%s734] sm:$0xff]
        %v792 = vld [vmem:[%s734 + $0x8] sm:$0xff]
        %v793 = vld [vmem:[%s734 + $0x10] sm:$0xff]
        %v794 = vld [vmem:[%s734 + $0x18] sm:$0xff]
        %v795 = vld [vmem:[%s734 + $0x20] sm:$0xff]
        %v796 = vld [vmem:[%s734 + $0x28] sm:$0xff]
        %v797 = vld [vmem:[%s734 + $0x30] sm:$0xff]
        %v798 = vld [vmem:[%s734 + $0x38] sm:$0xff]
        %v799 = vld [vmem:[%s734 + $0x40] sm:$0xff]
        %v800 = vld [vmem:[%s734 + $0x48] sm:$0xff]
        %v801 = vld [vmem:[%s734 + $0x50] sm:$0xff]
        %v802 = vld [vmem:[%s734 + $0x58] sm:$0xff]
        %v803 = vld [vmem:[%s734 + $0x60] sm:$0xff]
        %v804 = vld [vmem:[%s734 + $0x68] sm:$0xff]
        %v805 = vld [vmem:[%s734 + $0x70] sm:$0xff]
        %v806 = vld [vmem:[%s734 + $0x78] sm:$0xff]
        %v807 = vld [vmem:[%s734 + $0x80] sm:$0xff]
        %v808 = vld [vmem:[%s734 + $0x88] sm:$0xff]
        %v809 = vld [vmem:[%s734 + $0x90] sm:$0xff]
        %v810 = vld [vmem:[%s734 + $0x98] sm:$0xff]
        %v811 = vld [vmem:[%s734 + $0xa0] sm:$0xff]
        %v812 = vld [vmem:[%s734 + $0xa8] sm:$0xff]
        %v813 = vld [vmem:[%s734 + $0xb0] sm:$0xff]
        %v814 = vld [vmem:[%s734 + $0xb8] sm:$0xff]
        %v815 = vld [vmem:[%s734 + $0xc0] sm:$0xff]
        %v816 = vld [vmem:[%s734 + $0xc8] sm:$0xff]
        %v817 = vld [vmem:[%s734 + $0xd0] sm:$0xff]
        %v818 = vld [vmem:[%s734 + $0xd8] sm:$0xff]
        %v819 = vld [vmem:[%s734 + $0xe0] sm:$0xff]
        %v820 = vld [vmem:[%s734 + $0xe8] sm:$0xff]
        %v821 = vld [vmem:[%s734 + $0xf0] sm:$0xff]
        %v822 = vld [vmem:[%s734 + $0xf8] sm:$0xff]
        %v823 = vld [vmem:[%s734 + $0x100] sm:$0xff]
        %v824 = vld [vmem:[%s734 + $0x108] sm:$0xff]
        %v825 = vld [vmem:[%s734 + $0x110] sm:$0xff]
        %v826 = vld [vmem:[%s734 + $0x118] sm:$0xff]
        %v827 = vld [vmem:[%s734 + $0x120] sm:$0xff]
        %v828 = vld [vmem:[%s734 + $0x128] sm:$0xff]
        %v829 = vld [vmem:[%s734 + $0x130] sm:$0xff]
        %v830 = vld [vmem:[%s734 + $0x138] sm:$0xff]
        %v831 = vld [vmem:[%s734 + $0x140] sm:$0xff]
        %v832 = vld [vmem:[%s734 + $0x148] sm:$0xff]
        %v833 = vld [vmem:[%s734 + $0x150] sm:$0xff]
        %v834 = vld [vmem:[%s734 + $0x158] sm:$0xff]
        %v835 = vld [vmem:[%s734 + $0x160] sm:$0xff]
        %v836 = vld [vmem:[%s734 + $0x168] sm:$0xff]
        %v837 = vld [vmem:[%s734 + $0x170] sm:$0xff]
        %v838 = vld [vmem:[%s734 + $0x178] sm:$0xff]
        %v839 = vld [vmem:[%s3] sm:$0xf]
        %v840 = vld [vmem:[%s3 + $0x4] sm:$0xf]
        %v841 = vld [vmem:[%s3 + $0x8] sm:$0xf]
        %v842 = vld [vmem:[%s3 + $0xc] sm:$0xf]
        %v843 = vld [vmem:[%s3 + $0x10] sm:$0xf]
        %v844 = vld [vmem:[%s3 + $0x14] sm:$0xf]
        %v845 = vld [vmem:[%s3 + $0x18] sm:$0xf]
        %v846 = vld [vmem:[%s3 + $0x1c] sm:$0xf]
        %v847 = vld [vmem:[%s3 + $0x20] sm:$0xf]
        %v848 = vld [vmem:[%s3 + $0x24] sm:$0xf]
        %v849 = vld [vmem:[%s3 + $0x28] sm:$0xf]
        %v850 = vld [vmem:[%s3 + $0x2c] sm:$0xf]
        %v851 = vld [vmem:[%s3 + $0x30] sm:$0xf]
        %v852 = vld [vmem:[%s3 + $0x34] sm:$0xf]
        %v853 = vld [vmem:[%s3 + $0x38] sm:$0xf]
        %v854 = vld [vmem:[%s3 + $0x3c] sm:$0xf]
        %v855 = vld [vmem:[%s3 + $0x40] sm:$0xf]
        %v856 = vld [vmem:[%s3 + $0x44] sm:$0xf]
        %v857 = vld [vmem:[%s3 + $0x48] sm:$0xf]
        %v858 = vld [vmem:[%s3 + $0x4c] sm:$0xf]
        %v859 = vld [vmem:[%s3 + $0x50] sm:$0xf]
        %v860 = vld [vmem:[%s3 + $0x54] sm:$0xf]
        %v861 = vld [vmem:[%s3 + $0x58] sm:$0xf]
        %v862 = vld [vmem:[%s3 + $0x5c] sm:$0xf]
        %v863 = vld [vmem:[%s3 + $0x60] sm:$0xf]
        %v864 = vld [vmem:[%s3 + $0x64] sm:$0xf]
        %v865 = vld [vmem:[%s3 + $0x68] sm:$0xf]
        %v866 = vld [vmem:[%s3 + $0x6c] sm:$0xf]
        %v867 = vld [vmem:[%s3 + $0x70] sm:$0xf]
        %v868 = vld [vmem:[%s3 + $0x74] sm:$0xf]
        %v869 = vld [vmem:[%s3 + $0x78] sm:$0xf]
        %v870 = vld [vmem:[%s3 + $0x7c] sm:$0xf]
        %v871 = vld [vmem:[%s3 + $0x80] sm:$0xf]
        %v872 = vld [vmem:[%s3 + $0x84] sm:$0xf]
        %v873 = vld [vmem:[%s3 + $0x88] sm:$0xf]
        %v874 = vld [vmem:[%s3 + $0x8c] sm:$0xf]
        %v875 = vld [vmem:[%s3 + $0x90] sm:$0xf]
        %v876 = vld [vmem:[%s3 + $0x94] sm:$0xf]
        %v877 = vld [vmem:[%s3 + $0x98] sm:$0xf]
        %v878 = vld [vmem:[%s3 + $0x9c] sm:$0xf]
        %v879 = vld [vmem:[%s3 + $0xa0] sm:$0xf]
        %v880 = vld [vmem:[%s3 + $0xa4] sm:$0xf]
        %v881 = vld [vmem:[%s3 + $0xa8] sm:$0xf]
        %v882 = vld [vmem:[%s3 + $0xac] sm:$0xf]
        %v883 = vld [vmem:[%s3 + $0xb0] sm:$0xf]
        %v884 = vld [vmem:[%s3 + $0xb4] sm:$0xf]
        %v885 = vld [vmem:[%s3 + $0xb8] sm:$0xf]
        %v886 = vld [vmem:[%s3 + $0xbc] sm:$0xf]
        %v887 = vld [vmem:[%s3 + $0xc0] sm:$0xf]
        %v888 = vld [vmem:[%s3 + $0xc4] sm:$0xf]
        %v889 = vld [vmem:[%s3 + $0xc8] sm:$0xf]
        %v890 = vld [vmem:[%s3 + $0xcc] sm:$0xf]
        %v891 = vld [vmem:[%s3 + $0xd0] sm:$0xf]
        %v892 = vld [vmem:[%s3 + $0xd4] sm:$0xf]
        %v893 = vld [vmem:[%s3 + $0xd8] sm:$0xf]
        %v894 = vld [vmem:[%s3 + $0xdc] sm:$0xf]
        %v895 = vld [vmem:[%s3 + $0xe0] sm:$0xf]
        %v896 = vld [vmem:[%s3 + $0xe4] sm:$0xf]
        %v897 = vld [vmem:[%s3 + $0xe8] sm:$0xf]
        %v898 = vld [vmem:[%s3 + $0xec] sm:$0xf]
        %v899 = vld [vmem:[%s3 + $0xf0] sm:$0xf]
        %v900 = vld [vmem:[%s3 + $0xf4] sm:$0xf]
        %v901 = vld [vmem:[%s3 + $0xf8] sm:$0xf]
        %v902 = vld [vmem:[%s3 + $0xfc] sm:$0xf]
        %v903 = vld [vmem:[%s3 + $0x100] sm:$0xf]
        %v904 = vld [vmem:[%s3 + $0x104] sm:$0xf]
        %v905 = vld [vmem:[%s3 + $0x108] sm:$0xf]
        %v906 = vld [vmem:[%s3 + $0x10c] sm:$0xf]
        %v907 = vld [vmem:[%s3 + $0x110] sm:$0xf]
        %v908 = vld [vmem:[%s3 + $0x114] sm:$0xf]
        %v909 = vld [vmem:[%s3 + $0x118] sm:$0xf]
        %v910 = vld [vmem:[%s3 + $0x11c] sm:$0xf]
        %v911 = vld [vmem:[%s3 + $0x120] sm:$0xf]
        %v912 = vld [vmem:[%s3 + $0x124] sm:$0xf]
        %v913 = vld [vmem:[%s3 + $0x128] sm:$0xf]
        %v914 = vld [vmem:[%s3 + $0x12c] sm:$0xf]
        %v915 = vld [vmem:[%s3 + $0x130] sm:$0xf]
        %v916 = vld [vmem:[%s3 + $0x134] sm:$0xf]
        %v917 = vld [vmem:[%s3 + $0x138] sm:$0xf]
        %v918 = vld [vmem:[%s3 + $0x13c] sm:$0xf]
        %v919 = vld [vmem:[%s3 + $0x140] sm:$0xf]
        %v920 = vld [vmem:[%s3 + $0x144] sm:$0xf]
        %v921 = vld [vmem:[%s3 + $0x148] sm:$0xf]
        %v922 = vld [vmem:[%s3 + $0x14c] sm:$0xf]
        %v923 = vld [vmem:[%s3 + $0x150] sm:$0xf]
        %v924 = vld [vmem:[%s3 + $0x154] sm:$0xf]
        %v925 = vld [vmem:[%s3 + $0x158] sm:$0xf]
        %v926 = vld [vmem:[%s3 + $0x15c] sm:$0xf]
        %v927 = vld [vmem:[%s3 + $0x160] sm:$0xf]
        %v928 = vld [vmem:[%s3 + $0x164] sm:$0xf]
        %v929 = vld [vmem:[%s3 + $0x168] sm:$0xf]
        %v930 = vld [vmem:[%s3 + $0x16c] sm:$0xf]
        %v931 = vld [vmem:[%s3 + $0x170] sm:$0xf]
        %v932 = vld [vmem:[%s3 + $0x174] sm:$0xf]
        %v933 = vld [vmem:[%s3 + $0x178] sm:$0xf]
        %v934 = vld [vmem:[%s3 + $0x17c] sm:$0xf]
        %v935 = vld [vmem:[%s1] sm:$0xff]
        %v936 = vld [vmem:[%s1 + $0x8] sm:$0xff]
        %v937 = vld [vmem:[%s1 + $0x10] sm:$0xff]
        %v938 = vld [vmem:[%s1 + $0x18] sm:$0xff]
        %v939 = vld [vmem:[%s1 + $0x20] sm:$0xff]
        %v940 = vld [vmem:[%s1 + $0x28] sm:$0xff]
        %v941 = vld [vmem:[%s1 + $0x30] sm:$0xff]
        %v942 = vld [vmem:[%s1 + $0x38] sm:$0xff]
        %v943 = vld [vmem:[%s1 + $0x40] sm:$0xff]
        %v944 = vld [vmem:[%s1 + $0x48] sm:$0xff]
        %v945 = vld [vmem:[%s1 + $0x50] sm:$0xff]
        %v946 = vld [vmem:[%s1 + $0x58] sm:$0xff]
        %v947 = vld [vmem:[%s1 + $0x60] sm:$0xff]
        %v948 = vld [vmem:[%s1 + $0x68] sm:$0xff]
        %v949 = vld [vmem:[%s1 + $0x70] sm:$0xff]
        %v950 = vld [vmem:[%s1 + $0x78] sm:$0xff]
        %v999 = vunpack.c.l.b16 %v791
        %v1000 = vunpack.c.h.b16 %v791
        %v1001 = vunpack.c.l.b16 %v792
        %v1002 = vunpack.c.h.b16 %v792
        %v1003 = vunpack.c.l.b16 %v793
        %v1004 = vunpack.c.h.b16 %v793
        %v1005 = vunpack.c.l.b16 %v794
        %v1006 = vunpack.c.h.b16 %v794
        %v1007 = vunpack.c.l.b16 %v795
        %v1008 = vunpack.c.h.b16 %v795
        %v1009 = vunpack.c.l.b16 %v796
        %v1010 = vunpack.c.h.b16 %v796
        %v1011 = vunpack.c.l.b16 %v797
        %v1012 = vunpack.c.h.b16 %v797
        %v1013 = vunpack.c.l.b16 %v798
        %v1014 = vunpack.c.h.b16 %v798
        %v1015 = vunpack.c.l.b16 %v799
        %v1016 = vunpack.c.h.b16 %v799
        %v1017 = vunpack.c.l.b16 %v800
        %v1018 = vunpack.c.h.b16 %v800
        %v1019 = vunpack.c.l.b16 %v801
        %v1020 = vunpack.c.h.b16 %v801
        %v1021 = vunpack.c.l.b16 %v802
        %v1022 = vunpack.c.h.b16 %v802
        %v1023 = vunpack.c.l.b16 %v803
        %v1024 = vunpack.c.h.b16 %v803
        %v1025 = vunpack.c.l.b16 %v804
        %v1026 = vunpack.c.h.b16 %v804
        %v1027 = vunpack.c.l.b16 %v805
        %v1028 = vunpack.c.h.b16 %v805
        %v1029 = vunpack.c.l.b16 %v806
        %v1030 = vunpack.c.h.b16 %v806
        %v1031 = vunpack.c.l.b16 %v807
        %v1032 = vunpack.c.h.b16 %v807
        %v1033 = vunpack.c.l.b16 %v808
        %v1034 = vunpack.c.h.b16 %v808
        %v1035 = vunpack.c.l.b16 %v809
        %v1036 = vunpack.c.h.b16 %v809
        %v1037 = vunpack.c.l.b16 %v810
        %v1038 = vunpack.c.h.b16 %v810
        %v1039 = vunpack.c.l.b16 %v811
        %v1040 = vunpack.c.h.b16 %v811
        %v1041 = vunpack.c.l.b16 %v812
        %v1042 = vunpack.c.h.b16 %v812
        %v1043 = vunpack.c.l.b16 %v813
        %v1044 = vunpack.c.h.b16 %v813
        %v1045 = vunpack.c.l.b16 %v814
        %v1046 = vunpack.c.h.b16 %v814
        %v1047 = vunpack.c.l.b16 %v815
        %v1048 = vunpack.c.h.b16 %v815
        %v1049 = vunpack.c.l.b16 %v816
        %v1050 = vunpack.c.h.b16 %v816
        %v1051 = vunpack.c.l.b16 %v817
        %v1052 = vunpack.c.h.b16 %v817
        %v1053 = vunpack.c.l.b16 %v818
        %v1054 = vunpack.c.h.b16 %v818
        %v1055 = vunpack.c.l.b16 %v819
        %v1056 = vunpack.c.h.b16 %v819
        %v1057 = vunpack.c.l.b16 %v820
        %v1058 = vunpack.c.h.b16 %v820
        %v1059 = vunpack.c.l.b16 %v821
        %v1060 = vunpack.c.h.b16 %v821
        %v1061 = vunpack.c.l.b16 %v822
        %v1062 = vunpack.c.h.b16 %v822
        %v1063 = vunpack.c.l.b16 %v823
        %v1064 = vunpack.c.h.b16 %v823
        %v1065 = vunpack.c.l.b16 %v824
        %v1066 = vunpack.c.h.b16 %v824
        %v1067 = vunpack.c.l.b16 %v825
        %v1068 = vunpack.c.h.b16 %v825
        %v1069 = vunpack.c.l.b16 %v826
        %v1070 = vunpack.c.h.b16 %v826
        %v1071 = vunpack.c.l.b16 %v827
        %v1072 = vunpack.c.h.b16 %v827
        %v1073 = vunpack.c.l.b16 %v828
        %v1074 = vunpack.c.h.b16 %v828
        %v1075 = vunpack.c.l.b16 %v829
        %v1076 = vunpack.c.h.b16 %v829
        %v1077 = vunpack.c.l.b16 %v830
        %v1078 = vunpack.c.h.b16 %v830
        %v1079 = vunpack.c.l.b16 %v831
        %v1080 = vunpack.c.h.b16 %v831
        %v1081 = vunpack.c.l.b16 %v832
        %v1082 = vunpack.c.h.b16 %v832
        %v1083 = vunpack.c.l.b16 %v833
        %v1084 = vunpack.c.h.b16 %v833
        %v1085 = vunpack.c.l.b16 %v834
        %v1086 = vunpack.c.h.b16 %v834
        %v1087 = vunpack.c.l.b16 %v835
        %v1088 = vunpack.c.h.b16 %v835
        %v1089 = vunpack.c.l.b16 %v836
        %v1090 = vunpack.c.h.b16 %v836
        %v1091 = vunpack.c.l.b16 %v837
        %v1092 = vunpack.c.h.b16 %v837
        %v1093 = vunpack.c.l.b16 %v838
        %v1094 = vunpack.c.h.b16 %v838
        %v1095 = vpack.c.b16 %v1005, %v999
        %v1096 = vpack.c.b16 %v1006, %v1000
        %v1097 = vpack.c.b16 %v1007, %v1001
        %v1098 = vpack.c.b16 %v1008, %v1002
        %v1099 = vpack.c.b16 %v1009, %v1003
        %v1100 = vpack.c.b16 %v1010, %v1004
        %v1101 = vpack.c.b16 %v1017, %v1011
        %v1102 = vpack.c.b16 %v1018, %v1012
        %v1103 = vpack.c.b16 %v1019, %v1013
        %v1104 = vpack.c.b16 %v1020, %v1014
        %v1105 = vpack.c.b16 %v1021, %v1015
        %v1106 = vpack.c.b16 %v1022, %v1016
        %v1107 = vpack.c.b16 %v1029, %v1023
        %v1108 = vpack.c.b16 %v1030, %v1024
        %v1109 = vpack.c.b16 %v1031, %v1025
        %v1110 = vpack.c.b16 %v1032, %v1026
        %v1111 = vpack.c.b16 %v1033, %v1027
        %v1112 = vpack.c.b16 %v1034, %v1028
        %v1113 = vpack.c.b16 %v1041, %v1035
        %v1114 = vpack.c.b16 %v1042, %v1036
        %v1115 = vpack.c.b16 %v1043, %v1037
        %v1116 = vpack.c.b16 %v1044, %v1038
        %v1117 = vpack.c.b16 %v1045, %v1039
        %v1118 = vpack.c.b16 %v1046, %v1040
        %v1119 = vpack.c.b16 %v1053, %v1047
        %v1120 = vpack.c.b16 %v1054, %v1048
        %v1121 = vpack.c.b16 %v1055, %v1049
        %v1122 = vpack.c.b16 %v1056, %v1050
        %v1123 = vpack.c.b16 %v1057, %v1051
        %v1124 = vpack.c.b16 %v1058, %v1052
        %v1125 = vpack.c.b16 %v1065, %v1059
        %v1126 = vpack.c.b16 %v1066, %v1060
        %v1127 = vpack.c.b16 %v1067, %v1061
        %v1128 = vpack.c.b16 %v1068, %v1062
        %v1129 = vpack.c.b16 %v1069, %v1063
        %v1130 = vpack.c.b16 %v1070, %v1064
        %v1131 = vpack.c.b16 %v1077, %v1071
        %v1132 = vpack.c.b16 %v1078, %v1072
        %v1133 = vpack.c.b16 %v1079, %v1073
        %v1134 = vpack.c.b16 %v1080, %v1074
        %v1135 = vpack.c.b16 %v1081, %v1075
        %v1136 = vpack.c.b16 %v1082, %v1076
        %v1137 = vpack.c.b16 %v1089, %v1083
        %v1138 = vpack.c.b16 %v1090, %v1084
        %v1139 = vpack.c.b16 %v1091, %v1085
        %v1140 = vpack.c.b16 %v1092, %v1086
        %v1141 = vpack.c.b16 %v1093, %v1087
        %v1142 = vpack.c.b16 %v1094, %v1088
        %v1287 = vunpack.c.l.b16 %v839
        %v1288 = vunpack.c.l.b16 %v840
        %v1289 = vunpack.c.l.b16 %v841
        %v1290 = vunpack.c.l.b16 %v842
        %v1291 = vunpack.c.l.b16 %v843
        %v1292 = vunpack.c.l.b16 %v844
        %v1293 = vunpack.c.l.b16 %v845
        %v1294 = vunpack.c.l.b16 %v846
        %v1295 = vunpack.c.l.b16 %v847
        %v1296 = vunpack.c.l.b16 %v848
        %v1297 = vunpack.c.l.b16 %v849
        %v1298 = vunpack.c.l.b16 %v850
        %v1299 = vunpack.c.l.b16 %v851
        %v1300 = vunpack.c.l.b16 %v852
        %v1301 = vunpack.c.l.b16 %v853
        %v1302 = vunpack.c.l.b16 %v854
        %v1303 = vunpack.c.l.b16 %v855
        %v1304 = vunpack.c.l.b16 %v856
        %v1305 = vunpack.c.l.b16 %v857
        %v1306 = vunpack.c.l.b16 %v858
        %v1307 = vunpack.c.l.b16 %v859
        %v1308 = vunpack.c.l.b16 %v860
        %v1309 = vunpack.c.l.b16 %v861
        %v1310 = vunpack.c.l.b16 %v862
        %v1311 = vunpack.c.l.b16 %v863
        %v1312 = vunpack.c.l.b16 %v864
        %v1313 = vunpack.c.l.b16 %v865
        %v1314 = vunpack.c.l.b16 %v866
        %v1315 = vunpack.c.l.b16 %v867
        %v1316 = vunpack.c.l.b16 %v868
        %v1317 = vunpack.c.l.b16 %v869
        %v1318 = vunpack.c.l.b16 %v870
        %v1319 = vunpack.c.l.b16 %v871
        %v1320 = vunpack.c.l.b16 %v872
        %v1321 = vunpack.c.l.b16 %v873
        %v1322 = vunpack.c.l.b16 %v874
        %v1323 = vunpack.c.l.b16 %v875
        %v1324 = vunpack.c.l.b16 %v876
        %v1325 = vunpack.c.l.b16 %v877
        %v1326 = vunpack.c.l.b16 %v878
        %v1327 = vunpack.c.l.b16 %v879
        %v1328 = vunpack.c.l.b16 %v880
        %v1329 = vunpack.c.l.b16 %v881
        %v1330 = vunpack.c.l.b16 %v882
        %v1331 = vunpack.c.l.b16 %v883
        %v1332 = vunpack.c.l.b16 %v884
        %v1333 = vunpack.c.l.b16 %v885
        %v1334 = vunpack.c.l.b16 %v886
        %v1335 = vunpack.c.l.b16 %v887
        %v1336 = vunpack.c.l.b16 %v888
        %v1337 = vunpack.c.l.b16 %v889
        %v1338 = vunpack.c.l.b16 %v890
        %v1339 = vunpack.c.l.b16 %v891
        %v1340 = vunpack.c.l.b16 %v892
        %v1341 = vunpack.c.l.b16 %v893
        %v1342 = vunpack.c.l.b16 %v894
        %v1343 = vunpack.c.l.b16 %v895
        %v1344 = vunpack.c.l.b16 %v896
        %v1345 = vunpack.c.l.b16 %v897
        %v1346 = vunpack.c.l.b16 %v898
        %v1347 = vunpack.c.l.b16 %v899
        %v1348 = vunpack.c.l.b16 %v900
        %v1349 = vunpack.c.l.b16 %v901
        %v1350 = vunpack.c.l.b16 %v902
        %v1351 = vunpack.c.l.b16 %v903
        %v1352 = vunpack.c.l.b16 %v904
        %v1353 = vunpack.c.l.b16 %v905
        %v1354 = vunpack.c.l.b16 %v906
        %v1355 = vunpack.c.l.b16 %v907
        %v1356 = vunpack.c.l.b16 %v908
        %v1357 = vunpack.c.l.b16 %v909
        %v1358 = vunpack.c.l.b16 %v910
        %v1359 = vunpack.c.l.b16 %v911
        %v1360 = vunpack.c.l.b16 %v912
        %v1361 = vunpack.c.l.b16 %v913
        %v1362 = vunpack.c.l.b16 %v914
        %v1363 = vunpack.c.l.b16 %v915
        %v1364 = vunpack.c.l.b16 %v916
        %v1365 = vunpack.c.l.b16 %v917
        %v1366 = vunpack.c.l.b16 %v918
        %v1367 = vunpack.c.l.b16 %v919
        %v1368 = vunpack.c.l.b16 %v920
        %v1369 = vunpack.c.l.b16 %v921
        %v1370 = vunpack.c.l.b16 %v922
        %v1371 = vunpack.c.l.b16 %v923
        %v1372 = vunpack.c.l.b16 %v924
        %v1373 = vunpack.c.l.b16 %v925
        %v1374 = vunpack.c.l.b16 %v926
        %v1375 = vunpack.c.l.b16 %v927
        %v1376 = vunpack.c.l.b16 %v928
        %v1377 = vunpack.c.l.b16 %v929
        %v1378 = vunpack.c.l.b16 %v930
        %v1379 = vunpack.c.l.b16 %v931
        %v1380 = vunpack.c.l.b16 %v932
        %v1381 = vunpack.c.l.b16 %v933
        %v1382 = vunpack.c.l.b16 %v934
        %v1383 = vpack.c.b16 %v1288, %v1287
        %v1384 = vpack.c.b16 %v1290, %v1289
        %v1385 = vpack.c.b16 %v1292, %v1291
        %v1386 = vpack.c.b16 %v1294, %v1293
        %v1387 = vpack.c.b16 %v1296, %v1295
        %v1388 = vpack.c.b16 %v1298, %v1297
        %v1389 = vpack.c.b16 %v1300, %v1299
        %v1390 = vpack.c.b16 %v1302, %v1301
        %v1391 = vpack.c.b16 %v1304, %v1303
        %v1392 = vpack.c.b16 %v1306, %v1305
        %v1393 = vpack.c.b16 %v1308, %v1307
        %v1394 = vpack.c.b16 %v1310, %v1309
        %v1395 = vpack.c.b16 %v1312, %v1311
        %v1396 = vpack.c.b16 %v1314, %v1313
        %v1397 = vpack.c.b16 %v1316, %v1315
        %v1398 = vpack.c.b16 %v1318, %v1317
        %v1399 = vpack.c.b16 %v1320, %v1319
        %v1400 = vpack.c.b16 %v1322, %v1321
        %v1401 = vpack.c.b16 %v1324, %v1323
        %v1402 = vpack.c.b16 %v1326, %v1325
        %v1403 = vpack.c.b16 %v1328, %v1327
        %v1404 = vpack.c.b16 %v1330, %v1329
        %v1405 = vpack.c.b16 %v1332, %v1331
        %v1406 = vpack.c.b16 %v1334, %v1333
        %v1407 = vpack.c.b16 %v1336, %v1335
        %v1408 = vpack.c.b16 %v1338, %v1337
        %v1409 = vpack.c.b16 %v1340, %v1339
        %v1410 = vpack.c.b16 %v1342, %v1341
        %v1411 = vpack.c.b16 %v1344, %v1343
        %v1412 = vpack.c.b16 %v1346, %v1345
        %v1413 = vpack.c.b16 %v1348, %v1347
        %v1414 = vpack.c.b16 %v1350, %v1349
        %v1415 = vpack.c.b16 %v1352, %v1351
        %v1416 = vpack.c.b16 %v1354, %v1353
        %v1417 = vpack.c.b16 %v1356, %v1355
        %v1418 = vpack.c.b16 %v1358, %v1357
        %v1419 = vpack.c.b16 %v1360, %v1359
        %v1420 = vpack.c.b16 %v1362, %v1361
        %v1421 = vpack.c.b16 %v1364, %v1363
        %v1422 = vpack.c.b16 %v1366, %v1365
        %v1423 = vpack.c.b16 %v1368, %v1367
        %v1424 = vpack.c.b16 %v1370, %v1369
        %v1425 = vpack.c.b16 %v1372, %v1371
        %v1426 = vpack.c.b16 %v1374, %v1373
        %v1427 = vpack.c.b16 %v1376, %v1375
        %v1428 = vpack.c.b16 %v1378, %v1377
        %v1429 = vpack.c.b16 %v1380, %v1379
        %v1430 = vpack.c.b16 %v1382, %v1381
        %1479 = vmatprep.subr.bf16.mxu0 0
        %1480 = vmatpush1.bf16.msra.mxu0 %v1390
        %1481 = vmatprep.subr.bf16.mxu0 0
        %1482 = vmatpush1.bf16.msra.mxu0 %v1389
        %1483 = vmatprep.subr.bf16.mxu0 0
        %1484 = vmatpush1.bf16.msra.mxu0 %v1388
        %1485 = vmatprep.subr.bf16.mxu0 0
        %1486 = vmatpush1.bf16.msra.mxu0 %v1387
        %1487 = vmatprep.subr.bf16.mxu0 0
        %1488 = vmatpush1.bf16.msra.mxu0 %v1386
        %1489 = vmatprep.subr.bf16.mxu0 0
        %1490 = vmatpush1.bf16.msra.mxu0 %v1385
        %1491 = vmatprep.subr.bf16.mxu0 0
        %1492 = vmatpush1.bf16.msra.mxu0 %v1384
        %1493 = vmatprep.subr.bf16.mxu0 0
        %1494 = vmatpush1.bf16.msra.mxu0 %v1383
        %1495 = vmatprep.subr.bf16.mxu0 0
        %1496 = vmatpush2.bf16.msra.mxu0 %v1398
        %1497 = vmatprep.subr.bf16.mxu0 0
        %1498 = vmatpush2.bf16.msra.mxu0 %v1397
        %1499 = vmatprep.subr.bf16.mxu0 0
        %1500 = vmatpush2.bf16.msra.mxu0 %v1396
        %1501 = vmatprep.subr.bf16.mxu0 0
        %1502 = vmatpush2.bf16.msra.mxu0 %v1395
        %1503 = vmatprep.subr.bf16.mxu0 0
        %1504 = vmatpush2.bf16.msra.mxu0 %v1394
        %1505 = vmatprep.subr.bf16.mxu0 0
        %1506 = vmatpush2.bf16.msra.mxu0 %v1393
        %1507 = vmatprep.subr.bf16.mxu0 0
        %1508 = vmatpush2.bf16.msra.mxu0 %v1392
        %1509 = vmatprep.subr.bf16.mxu0 0
        %1510 = vmatpush2.bf16.msra.mxu0 %v1391
        %1511 = vmatprep.mubr.bf16.mxu0 %v1096
        %1512 = vmatmul.mubr.bf16.gmra.mxu0 %v1095
        %v1513 = vpop.f32.mrf.mxu0
        %v1514 = vadd.f32 %v935, %v1513
        %v1515 = vpop.f32.mrf.mxu0
        %v1516 = vpop.f32.mrf.mxu0
        %v1517 = vadd.f32 %v936, %v1516
        %v1518 = vpop.f32.mrf.mxu0
        %1519 = vmatprep.mubr.bf16.mxu0 %v1102
        %1520 = vmatmul.mubr.bf16.gmra.mxu0 %v1101
        %v1521 = vpop.f32.mrf.mxu0
        %v1522 = vadd.f32 %v937, %v1521
        %v1523 = vpop.f32.mrf.mxu0
        %v1524 = vpop.f32.mrf.mxu0
        %v1525 = vadd.f32 %v938, %v1524
        %v1526 = vpop.f32.mrf.mxu0
        %1527 = vmatprep.mubr.bf16.mxu0 %v1108
        %1528 = vmatmul.mubr.bf16.gmra.mxu0 %v1107
        %v1529 = vpop.f32.mrf.mxu0
        %v1530 = vadd.f32 %v939, %v1529
        %v1531 = vpop.f32.mrf.mxu0
        %v1532 = vpop.f32.mrf.mxu0
        %v1533 = vadd.f32 %v940, %v1532
        %v1534 = vpop.f32.mrf.mxu0
        %1535 = vmatprep.mubr.bf16.mxu0 %v1114
        %1536 = vmatmul.mubr.bf16.gmra.mxu0 %v1113
        %v1537 = vpop.f32.mrf.mxu0
        %v1538 = vadd.f32 %v941, %v1537
        %v1539 = vpop.f32.mrf.mxu0
        %v1540 = vpop.f32.mrf.mxu0
        %v1541 = vadd.f32 %v942, %v1540
        %v1542 = vpop.f32.mrf.mxu0
        %1543 = vmatprep.mubr.bf16.mxu0 %v1120
        %1544 = vmatmul.mubr.bf16.gmra.mxu0 %v1119
        %v1545 = vpop.f32.mrf.mxu0
        %v1546 = vadd.f32 %v943, %v1545
        %v1547 = vpop.f32.mrf.mxu0
        %v1548 = vpop.f32.mrf.mxu0
        %v1549 = vadd.f32 %v944, %v1548
        %v1550 = vpop.f32.mrf.mxu0
        %1551 = vmatprep.mubr.bf16.mxu0 %v1126
        %1552 = vmatmul.mubr.bf16.gmra.mxu0 %v1125
        %v1553 = vpop.f32.mrf.mxu0
        %v1554 = vadd.f32 %v945, %v1553
        %v1555 = vpop.f32.mrf.mxu0
        %v1556 = vpop.f32.mrf.mxu0
        %v1557 = vadd.f32 %v946, %v1556
        %v1558 = vpop.f32.mrf.mxu0
        %1559 = vmatprep.mubr.bf16.mxu0 %v1132
        %1560 = vmatmul.mubr.bf16.gmra.mxu0 %v1131
        %v1561 = vpop.f32.mrf.mxu0
        %v1562 = vadd.f32 %v947, %v1561
        %v1563 = vpop.f32.mrf.mxu0
        %v1564 = vpop.f32.mrf.mxu0
        %v1565 = vadd.f32 %v948, %v1564
        %v1566 = vpop.f32.mrf.mxu0
        %1567 = vmatprep.mubr.bf16.mxu0 %v1138
        %1568 = vmatmul.mubr.bf16.gmra.mxu0 %v1137
        %v1569 = vpop.f32.mrf.mxu0
        %v1570 = vadd.f32 %v949, %v1569
        %v1571 = vpop.f32.mrf.mxu0
        %v1572 = vpop.f32.mrf.mxu0
        %v1573 = vadd.f32 %v950, %v1572
        %v1574 = vpop.f32.mrf.mxu0
        %1575 = vdwg.mxu0
        %1576 = vmatprep.subr.bf16.mxu0 0
        %1577 = vmatpush1.bf16.msra.mxu0 %v1406
        %1578 = vmatprep.subr.bf16.mxu0 0
        %1579 = vmatpush1.bf16.msra.mxu0 %v1405
        %1580 = vmatprep.subr.bf16.mxu0 0
        %1581 = vmatpush1.bf16.msra.mxu0 %v1404
        %1582 = vmatprep.subr.bf16.mxu0 0
        %1583 = vmatpush1.bf16.msra.mxu0 %v1403
        %1584 = vmatprep.subr.bf16.mxu0 0
        %1585 = vmatpush1.bf16.msra.mxu0 %v1402
        %1586 = vmatprep.subr.bf16.mxu0 0
        %1587 = vmatpush1.bf16.msra.mxu0 %v1401
        %1588 = vmatprep.subr.bf16.mxu0 0
        %1589 = vmatpush1.bf16.msra.mxu0 %v1400
        %1590 = vmatprep.subr.bf16.mxu0 0
        %1591 = vmatpush1.bf16.msra.mxu0 %v1399
        %1592 = vmatprep.subr.bf16.mxu0 0
        %1593 = vmatpush2.bf16.msra.mxu0 %v1414
        %1594 = vmatprep.subr.bf16.mxu0 0
        %1595 = vmatpush2.bf16.msra.mxu0 %v1413
        %1596 = vmatprep.subr.bf16.mxu0 0
        %1597 = vmatpush2.bf16.msra.mxu0 %v1412
        %1598 = vmatprep.subr.bf16.mxu0 0
        %1599 = vmatpush2.bf16.msra.mxu0 %v1411
        %1600 = vmatprep.subr.bf16.mxu0 0
        %1601 = vmatpush2.bf16.msra.mxu0 %v1410
        %1602 = vmatprep.subr.bf16.mxu0 0
        %1603 = vmatpush2.bf16.msra.mxu0 %v1409
        %1604 = vmatprep.subr.bf16.mxu0 0
        %1605 = vmatpush2.bf16.msra.mxu0 %v1408
        %1606 = vmatprep.subr.bf16.mxu0 0
        %1607 = vmatpush2.bf16.msra.mxu0 %v1407
        %1608 = vmatprep.mubr.bf16.mxu0 %v1098
        %1609 = vmatmul.mubr.bf16.gmra.mxu0 %v1097
        %v1610 = vpop.f32.mrf.mxu0
        %v1611 = vadd.f32 %v1514, %v1610
        %v1612 = vpop.f32.mrf.mxu0
        %v1613 = vpop.f32.mrf.mxu0
        %v1614 = vadd.f32 %v1517, %v1613
        %v1615 = vpop.f32.mrf.mxu0
        %1616 = vmatprep.mubr.bf16.mxu0 %v1104
        %1617 = vmatmul.mubr.bf16.gmra.mxu0 %v1103
        %v1618 = vpop.f32.mrf.mxu0
        %v1619 = vadd.f32 %v1522, %v1618
        %v1620 = vpop.f32.mrf.mxu0
        %v1621 = vpop.f32.mrf.mxu0
        %v1622 = vadd.f32 %v1525, %v1621
        %v1623 = vpop.f32.mrf.mxu0
        %1624 = vmatprep.mubr.bf16.mxu0 %v1110
        %1625 = vmatmul.mubr.bf16.gmra.mxu0 %v1109
        %v1626 = vpop.f32.mrf.mxu0
        %v1627 = vadd.f32 %v1530, %v1626
        %v1628 = vpop.f32.mrf.mxu0
        %v1629 = vpop.f32.mrf.mxu0
        %v1630 = vadd.f32 %v1533, %v1629
        %v1631 = vpop.f32.mrf.mxu0
        %1632 = vmatprep.mubr.bf16.mxu0 %v1116
        %1633 = vmatmul.mubr.bf16.gmra.mxu0 %v1115
        %v1634 = vpop.f32.mrf.mxu0
        %v1635 = vadd.f32 %v1538, %v1634
        %v1636 = vpop.f32.mrf.mxu0
        %v1637 = vpop.f32.mrf.mxu0
        %v1638 = vadd.f32 %v1541, %v1637
        %v1639 = vpop.f32.mrf.mxu0
        %1640 = vmatprep.mubr.bf16.mxu0 %v1122
        %1641 = vmatmul.mubr.bf16.gmra.mxu0 %v1121
        %v1642 = vpop.f32.mrf.mxu0
        %v1643 = vadd.f32 %v1546, %v1642
        %v1644 = vpop.f32.mrf.mxu0
        %v1645 = vpop.f32.mrf.mxu0
        %v1646 = vadd.f32 %v1549, %v1645
        %v1647 = vpop.f32.mrf.mxu0
        %1648 = vmatprep.mubr.bf16.mxu0 %v1128
        %1649 = vmatmul.mubr.bf16.gmra.mxu0 %v1127
        %v1650 = vpop.f32.mrf.mxu0
        %v1651 = vadd.f32 %v1554, %v1650
        %v1652 = vpop.f32.mrf.mxu0
        %v1653 = vpop.f32.mrf.mxu0
        %v1654 = vadd.f32 %v1557, %v1653
        %v1655 = vpop.f32.mrf.mxu0
        %1656 = vmatprep.mubr.bf16.mxu0 %v1134
        %1657 = vmatmul.mubr.bf16.gmra.mxu0 %v1133
        %v1658 = vpop.f32.mrf.mxu0
        %v1659 = vadd.f32 %v1562, %v1658
        %v1660 = vpop.f32.mrf.mxu0
        %v1661 = vpop.f32.mrf.mxu0
        %v1662 = vadd.f32 %v1565, %v1661
        %v1663 = vpop.f32.mrf.mxu0
        %1664 = vmatprep.mubr.bf16.mxu0 %v1140
        %1665 = vmatmul.mubr.bf16.gmra.mxu0 %v1139
        %v1666 = vpop.f32.mrf.mxu0
        %v1667 = vadd.f32 %v1570, %v1666
        %v1668 = vpop.f32.mrf.mxu0
        %v1669 = vpop.f32.mrf.mxu0
        %v1670 = vadd.f32 %v1573, %v1669
        %v1671 = vpop.f32.mrf.mxu0
        %1672 = vdwg.mxu0
        %1673 = vmatprep.subr.bf16.mxu0 0
        %1674 = vmatpush1.bf16.msra.mxu0 %v1422
        %1675 = vmatprep.subr.bf16.mxu0 0
        %1676 = vmatpush1.bf16.msra.mxu0 %v1421
        %1677 = vmatprep.subr.bf16.mxu0 0
        %1678 = vmatpush1.bf16.msra.mxu0 %v1420
        %1679 = vmatprep.subr.bf16.mxu0 0
        %1680 = vmatpush1.bf16.msra.mxu0 %v1419
        %1681 = vmatprep.subr.bf16.mxu0 0
        %1682 = vmatpush1.bf16.msra.mxu0 %v1418
        %1683 = vmatprep.subr.bf16.mxu0 0
        %1684 = vmatpush1.bf16.msra.mxu0 %v1417
        %1685 = vmatprep.subr.bf16.mxu0 0
        %1686 = vmatpush1.bf16.msra.mxu0 %v1416
        %1687 = vmatprep.subr.bf16.mxu0 0
        %1688 = vmatpush1.bf16.msra.mxu0 %v1415
        %1689 = vmatprep.subr.bf16.mxu0 0
        %1690 = vmatpush2.bf16.msra.mxu0 %v1430
        %1691 = vmatprep.subr.bf16.mxu0 0
        %1692 = vmatpush2.bf16.msra.mxu0 %v1429
        %1693 = vmatprep.subr.bf16.mxu0 0
        %1694 = vmatpush2.bf16.msra.mxu0 %v1428
        %1695 = vmatprep.subr.bf16.mxu0 0
        %1696 = vmatpush2.bf16.msra.mxu0 %v1427
        %1697 = vmatprep.subr.bf16.mxu0 0
        %1698 = vmatpush2.bf16.msra.mxu0 %v1426
        %1699 = vmatprep.subr.bf16.mxu0 0
        %1700 = vmatpush2.bf16.msra.mxu0 %v1425
        %1701 = vmatprep.subr.bf16.mxu0 0
        %1702 = vmatpush2.bf16.msra.mxu0 %v1424
        %1703 = vmatprep.subr.bf16.mxu0 0
        %1704 = vmatpush2.bf16.msra.mxu0 %v1423
        %1705 = vmatprep.mubr.bf16.mxu0 %v1100
        %1706 = vmatmul.mubr.bf16.gmra.mxu0 %v1099
        %v1707 = vpop.f32.mrf.mxu0
        %v1708 = vadd.f32 %v1611, %v1707
        %v1709 = vpop.f32.mrf.mxu0
        %v1710 = vpop.f32.mrf.mxu0
        %v1711 = vadd.f32 %v1614, %v1710
        %v1712 = vpop.f32.mrf.mxu0
        %1713 = vmatprep.mubr.bf16.mxu0 %v1106
        %1714 = vmatmul.mubr.bf16.gmra.mxu0 %v1105
        %v1715 = vpop.f32.mrf.mxu0
        %v1716 = vadd.f32 %v1619, %v1715
        %v1717 = vpop.f32.mrf.mxu0
        %v1718 = vpop.f32.mrf.mxu0
        %v1719 = vadd.f32 %v1622, %v1718
        %v1720 = vpop.f32.mrf.mxu0
        %1721 = vmatprep.mubr.bf16.mxu0 %v1112
        %1722 = vmatmul.mubr.bf16.gmra.mxu0 %v1111
        %v1723 = vpop.f32.mrf.mxu0
        %v1724 = vadd.f32 %v1627, %v1723
        %v1725 = vpop.f32.mrf.mxu0
        %v1726 = vpop.f32.mrf.mxu0
        %v1727 = vadd.f32 %v1630, %v1726
        %v1728 = vpop.f32.mrf.mxu0
        %1729 = vmatprep.mubr.bf16.mxu0 %v1118
        %1730 = vmatmul.mubr.bf16.gmra.mxu0 %v1117
        %v1731 = vpop.f32.mrf.mxu0
        %v1732 = vadd.f32 %v1635, %v1731
        %v1733 = vpop.f32.mrf.mxu0
        %v1734 = vpop.f32.mrf.mxu0
        %v1735 = vadd.f32 %v1638, %v1734
        %v1736 = vpop.f32.mrf.mxu0
        %1737 = vmatprep.mubr.bf16.mxu0 %v1124
        %1738 = vmatmul.mubr.bf16.gmra.mxu0 %v1123
        %v1739 = vpop.f32.mrf.mxu0
        %v1740 = vadd.f32 %v1643, %v1739
        %v1741 = vpop.f32.mrf.mxu0
        %v1742 = vpop.f32.mrf.mxu0
        %v1743 = vadd.f32 %v1646, %v1742
        %v1744 = vpop.f32.mrf.mxu0
        %1745 = vmatprep.mubr.bf16.mxu0 %v1130
        %1746 = vmatmul.mubr.bf16.gmra.mxu0 %v1129
        %v1747 = vpop.f32.mrf.mxu0
        %v1748 = vadd.f32 %v1651, %v1747
        %v1749 = vpop.f32.mrf.mxu0
        %v1750 = vpop.f32.mrf.mxu0
        %v1751 = vadd.f32 %v1654, %v1750
        %v1752 = vpop.f32.mrf.mxu0
        %1753 = vmatprep.mubr.bf16.mxu0 %v1136
        %1754 = vmatmul.mubr.bf16.gmra.mxu0 %v1135
        %v1755 = vpop.f32.mrf.mxu0
        %v1756 = vadd.f32 %v1659, %v1755
        %v1757 = vpop.f32.mrf.mxu0
        %v1758 = vpop.f32.mrf.mxu0
        %v1759 = vadd.f32 %v1662, %v1758
        %v1760 = vpop.f32.mrf.mxu0
        %1761 = vmatprep.mubr.bf16.mxu0 %v1142
        %1762 = vmatmul.mubr.bf16.gmra.mxu0 %v1141
        %v1763 = vpop.f32.mrf.mxu0
        %v1764 = vadd.f32 %v1667, %v1763
        %v1765 = vpop.f32.mrf.mxu0
        %v1766 = vpop.f32.mrf.mxu0
        %v1767 = vadd.f32 %v1670, %v1766
        %v1768 = vpop.f32.mrf.mxu0
        %1769 = vdwg.mxu0
        %1770 = vst [vmem:[#allocation2] sm:$0xff] %v1708
        %1771 = vst [vmem:[#allocation2 + $0x8] sm:$0xff] %v1711
        %1772 = vst [vmem:[#allocation2 + $0x10] sm:$0xff] %v1716
        %1773 = vst [vmem:[#allocation2 + $0x18] sm:$0xff] %v1719
        %1774 = vst [vmem:[#allocation2 + $0x20] sm:$0xff] %v1724
        %1775 = vst [vmem:[#allocation2 + $0x28] sm:$0xff] %v1727
        %1776 = vst [vmem:[#allocation2 + $0x30] sm:$0xff] %v1732
        %1777 = vst [vmem:[#allocation2 + $0x38] sm:$0xff] %v1735
        %1778 = vst [vmem:[#allocation2 + $0x40] sm:$0xff] %v1740
        %1779 = vst [vmem:[#allocation2 + $0x48] sm:$0xff] %v1743
        %1780 = vst [vmem:[#allocation2 + $0x50] sm:$0xff] %v1748
        %1781 = vst [vmem:[#allocation2 + $0x58] sm:$0xff] %v1751
        %1782 = vst [vmem:[#allocation2 + $0x60] sm:$0xff] %v1756
        %1783 = vst [vmem:[#allocation2 + $0x68] sm:$0xff] %v1759
        %1784 = vst [vmem:[#allocation2 + $0x70] sm:$0xff] %v1764
        %1785 = vst [vmem:[#allocation2 + $0x78] sm:$0xff] %v1767
      $region96: #{theia_feature_forward.1} parent=91 // pred_fallthru
        _
      %v1786 = vld [vmem:[#allocation2] sm:$0xff]
      %v1787 = vld [vmem:[#allocation2 + $0x8] sm:$0xff]
      %v1788 = vld [vmem:[#allocation2 + $0x10] sm:$0xff]
      %v1789 = vld [vmem:[#allocation2 + $0x18] sm:$0xff]
      %v1790 = vld [vmem:[#allocation2 + $0x20] sm:$0xff]
      %v1791 = vld [vmem:[#allocation2 + $0x28] sm:$0xff]
      %v1792 = vld [vmem:[#allocation2 + $0x30] sm:$0xff]
      %v1793 = vld [vmem:[#allocation2 + $0x38] sm:$0xff]
      %v1794 = vld [vmem:[#allocation2 + $0x40] sm:$0xff]
      %v1795 = vld [vmem:[#allocation2 + $0x48] sm:$0xff]
      %v1796 = vld [vmem:[#allocation2 + $0x50] sm:$0xff]
      %v1797 = vld [vmem:[#allocation2 + $0x58] sm:$0xff]
      %v1798 = vld [vmem:[#allocation2 + $0x60] sm:$0xff]
      %v1799 = vld [vmem:[#allocation2 + $0x68] sm:$0xff]
      %v1800 = vld [vmem:[#allocation2 + $0x70] sm:$0xff]
      %v1801 = vld [vmem:[#allocation2 + $0x78] sm:$0xff]
      %v1802 = vld [vmem:[%s2] sm:$0xff]
      %v1803 = vld [vmem:[%s2 + $0x8] sm:$0xff]
      %v1804 = vld [vmem:[%s2 + $0x10] sm:$0xff]
      %v1805 = vld [vmem:[%s2 + $0x18] sm:$0xff]
      %v1806 = vld [vmem:[%s2 + $0x20] sm:$0xff]
      %v1807 = vld [vmem:[%s2 + $0x28] sm:$0xff]
      %v1808 = vld [vmem:[%s2 + $0x30] sm:$0xff]
      %v1809 = vld [vmem:[%s2 + $0x38] sm:$0xff]
      %v1810 = vld [vmem:[%s2 + $0x40] sm:$0xff]
      %v1811 = vld [vmem:[%s2 + $0x48] sm:$0xff]
      %v1812 = vld [vmem:[%s2 + $0x50] sm:$0xff]
      %v1813 = vld [vmem:[%s2 + $0x58] sm:$0xff]
      %v1814 = vld [vmem:[%s2 + $0x60] sm:$0xff]
      %v1815 = vld [vmem:[%s2 + $0x68] sm:$0xff]
      %v1816 = vld [vmem:[%s2 + $0x70] sm:$0xff]
      %v1817 = vld [vmem:[%s2 + $0x78] sm:$0xff]
      %v1818 = vld [vmem:[%s737] sm:$0x1]
      %v1819 = vld [vmem:[%s740] sm:$0x1]
      %1820 = vadd.xlane.f32.xlu0 %v1786
      %v1821 = vpop.xlane.xlu0 %1820
      %1822 = vadd.xlane.f32.xlu0 %v1787
      %v1823 = vpop.xlane.xlu0 %1822
      %1824 = vadd.xlane.f32.xlu0 %v1788
      %v1825 = vpop.xlane.xlu0 %1824
      %1826 = vadd.xlane.f32.xlu0 %v1789
      %v1827 = vpop.xlane.xlu0 %1826
      %1828 = vadd.xlane.f32.xlu0 %v1790
      %v1829 = vpop.xlane.xlu0 %1828
      %1830 = vadd.xlane.f32.xlu0 %v1791
      %v1831 = vpop.xlane.xlu0 %1830
      %1832 = vadd.xlane.f32.xlu0 %v1792
      %v1833 = vpop.xlane.xlu0 %1832
      %1834 = vadd.xlane.f32.xlu0 %v1793
      %v1835 = vpop.xlane.xlu0 %1834
      %1836 = vadd.xlane.f32.xlu0 %v1794
      %v1837 = vpop.xlane.xlu0 %1836
      %1838 = vadd.xlane.f32.xlu0 %v1795
      %v1839 = vpop.xlane.xlu0 %1838
      %1840 = vadd.xlane.f32.xlu0 %v1796
      %v1841 = vpop.xlane.xlu0 %1840
      %1842 = vadd.xlane.f32.xlu0 %v1797
      %v1843 = vpop.xlane.xlu0 %1842
      %1844 = vadd.xlane.f32.xlu0 %v1798
      %v1845 = vpop.xlane.xlu0 %1844
      %1846 = vadd.xlane.f32.xlu0 %v1799
      %v1847 = vpop.xlane.xlu0 %1846
      %1848 = vadd.xlane.f32.xlu0 %v1800
      %v1849 = vpop.xlane.xlu0 %1848
      %1850 = vadd.xlane.f32.xlu0 %v1801
      %v1851 = vpop.xlane.xlu0 %1850
      %v1852 = vrcp.pop 128.0
      %v1853 = vmul.f32 %v1821, %v1852
      %v1854 = vmul.f32 %v1823, %v1852
      %v1855 = vmul.f32 %v1825, %v1852
      %v1856 = vmul.f32 %v1827, %v1852
      %v1857 = vmul.f32 %v1829, %v1852
      %v1858 = vmul.f32 %v1831, %v1852
      %v1859 = vmul.f32 %v1833, %v1852
      %v1860 = vmul.f32 %v1835, %v1852
      %v1861 = vmul.f32 %v1837, %v1852
      %v1862 = vmul.f32 %v1839, %v1852
      %v1863 = vmul.f32 %v1841, %v1852
      %v1864 = vmul.f32 %v1843, %v1852
      %v1865 = vmul.f32 %v1845, %v1852
      %v1866 = vmul.f32 %v1847, %v1852
      %v1867 = vmul.f32 %v1849, %v1852
      %v1868 = vmul.f32 %v1851, %v1852
      %v1869 = vsub.f32 %v1786, %v1853
      %v1870 = vsub.f32 %v1787, %v1854
      %v1871 = vsub.f32 %v1788, %v1855
      %v1872 = vsub.f32 %v1789, %v1856
      %v1873 = vsub.f32 %v1790, %v1857
      %v1874 = vsub.f32 %v1791, %v1858
      %v1875 = vsub.f32 %v1792, %v1859
      %v1876 = vsub.f32 %v1793, %v1860
      %v1877 = vsub.f32 %v1794, %v1861
      %v1878 = vsub.f32 %v1795, %v1862
      %v1879 = vsub.f32 %v1796, %v1863
      %v1880 = vsub.f32 %v1797, %v1864
      %v1881 = vsub.f32 %v1798, %v1865
      %v1882 = vsub.f32 %v1799, %v1866
      %v1883 = vsub.f32 %v1800, %v1867
      %v1884 = vsub.f32 %v1801, %v1868
      %v1885 = vmul.f32 %v1869, %v1869
      %v1886 = vmul.f32 %v1870, %v1870
      %v1887 = vmul.f32 %v1871, %v1871
      %v1888 = vmul.f32 %v1872, %v1872
      %v1889 = vmul.f32 %v1873, %v1873
      %v1890 = vmul.f32 %v1874, %v1874
      %v1891 = vmul.f32 %v1875, %v1875
      %v1892 = vmul.f32 %v1876, %v1876
      %v1893 = vmul.f32 %v1877, %v1877
      %v1894 = vmul.f32 %v1878, %v1878
      %v1895 = vmul.f32 %v1879, %v1879
      %v1896 = vmul.f32 %v1880, %v1880
      %v1897 = vmul.f32 %v1881, %v1881
      %v1898 = vmul.f32 %v1882, %v1882
      %v1899 = vmul.f32 %v1883, %v1883
      %v1900 = vmul.f32 %v1884, %v1884
      %1901 = vadd.xlane.f32.xlu0 %v1885
      %v1902 = vpop.xlane.xlu0 %1901
      %1903 = vadd.xlane.f32.xlu0 %v1886
      %v1904 = vpop.xlane.xlu0 %1903
      %1905 = vadd.xlane.f32.xlu0 %v1887
      %v1906 = vpop.xlane.xlu0 %1905
      %1907 = vadd.xlane.f32.xlu0 %v1888
      %v1908 = vpop.xlane.xlu0 %1907
      %1909 = vadd.xlane.f32.xlu0 %v1889
      %v1910 = vpop.xlane.xlu0 %1909
      %1911 = vadd.xlane.f32.xlu0 %v1890
      %v1912 = vpop.xlane.xlu0 %1911
      %1913 = vadd.xlane.f32.xlu0 %v1891
      %v1914 = vpop.xlane.xlu0 %1913
      %1915 = vadd.xlane.f32.xlu0 %v1892
      %v1916 = vpop.xlane.xlu0 %1915
      %1917 = vadd.xlane.f32.xlu0 %v1893
      %v1918 = vpop.xlane.xlu0 %1917
      %1919 = vadd.xlane.f32.xlu0 %v1894
      %v1920 = vpop.xlane.xlu0 %1919
      %1921 = vadd.xlane.f32.xlu0 %v1895
      %v1922 = vpop.xlane.xlu0 %1921
      %1923 = vadd.xlane.f32.xlu0 %v1896
      %v1924 = vpop.xlane.xlu0 %1923
      %1925 = vadd.xlane.f32.xlu0 %v1897
      %v1926 = vpop.xlane.xlu0 %1925
      %1927 = vadd.xlane.f32.xlu0 %v1898
      %v1928 = vpop.xlane.xlu0 %1927
      %1929 = vadd.xlane.f32.xlu0 %v1899
      %v1930 = vpop.xlane.xlu0 %1929
      %1931 = vadd.xlane.f32.xlu0 %v1900
      %v1932 = vpop.xlane.xlu0 %1931
      %v1933 = vmul.f32 %v1902, %v1852
      %v1934 = vmul.f32 %v1904, %v1852
      %v1935 = vmul.f32 %v1906, %v1852
      %v1936 = vmul.f32 %v1908, %v1852
      %v1937 = vmul.f32 %v1910, %v1852
      %v1938 = vmul.f32 %v1912, %v1852
      %v1939 = vmul.f32 %v1914, %v1852
      %v1940 = vmul.f32 %v1916, %v1852
      %v1941 = vmul.f32 %v1918, %v1852
      %v1942 = vmul.f32 %v1920, %v1852
      %v1943 = vmul.f32 %v1922, %v1852
      %v1944 = vmul.f32 %v1924, %v1852
      %v1945 = vmul.f32 %v1926, %v1852
      %v1946 = vmul.f32 %v1928, %v1852
      %v1947 = vmul.f32 %v1930, %v1852
      %v1948 = vmul.f32 %v1932, %v1852
      %v1949 = vadd.f32 %v1933, 1e-12
      %v1950 = vadd.f32 %v1934, 1e-12
      %v1951 = vadd.f32 %v1935, 1e-12
      %v1952 = vadd.f32 %v1936, 1e-12
      %v1953 = vadd.f32 %v1937, 1e-12
      %v1954 = vadd.f32 %v1938, 1e-12
      %v1955 = vadd.f32 %v1939, 1e-12
      %v1956 = vadd.f32 %v1940, 1e-12
      %v1957 = vadd.f32 %v1941, 1e-12
      %v1958 = vadd.f32 %v1942, 1e-12
      %v1959 = vadd.f32 %v1943, 1e-12
      %v1960 = vadd.f32 %v1944, 1e-12
      %v1961 = vadd.f32 %v1945, 1e-12
      %v1962 = vadd.f32 %v1946, 1e-12
      %v1963 = vadd.f32 %v1947, 1e-12
      %v1964 = vadd.f32 %v1948, 1e-12
      %v1965 = vrsqrt.pop %v1949
      %v1966 = vrsqrt.pop %v1950
      %v1967 = vrsqrt.pop %v1951
      %v1968 = vrsqrt.pop %v1952
      %v1969 = vrsqrt.pop %v1953
      %v1970 = vrsqrt.pop %v1954
      %v1971 = vrsqrt.pop %v1955
      %v1972 = vrsqrt.pop %v1956
      %v1973 = vrsqrt.pop %v1957
      %v1974 = vrsqrt.pop %v1958
      %v1975 = vrsqrt.pop %v1959
      %v1976 = vrsqrt.pop %v1960
      %v1977 = vrsqrt.pop %v1961
      %v1978 = vrsqrt.pop %v1962
      %v1979 = vrsqrt.pop %v1963
      %v1980 = vrsqrt.pop %v1964
      %v1981 = vmul.f32 %v1869, %v1965
      %v1982 = vmul.f32 %v1870, %v1966
      %v1983 = vmul.f32 %v1871, %v1967
      %v1984 = vmul.f32 %v1872, %v1968
      %v1985 = vmul.f32 %v1873, %v1969
      %v1986 = vmul.f32 %v1874, %v1970
      %v1987 = vmul.f32 %v1875, %v1971
      %v1988 = vmul.f32 %v1876, %v1972
      %v1989 = vmul.f32 %v1877, %v1973
      %v1990 = vmul.f32 %v1878, %v1974
      %v1991 = vmul.f32 %v1879, %v1975
      %v1992 = vmul.f32 %v1880, %v1976
      %v1993 = vmul.f32 %v1881, %v1977
      %v1994 = vmul.f32 %v1882, %v1978
      %v1995 = vmul.f32 %v1883, %v1979
      %v1996 = vmul.f32 %v1884, %v1980
      %v1998 = vlaneseq
      %v1999 = vshrl.u32 %v1998, 7
      %v2000 = vsub.s32 0, %v1999
      %v2001 = vrot.slane %v1818, %v2000
      %v2003 = vmul.f32 %v1981, %v2001
      %v2004 = vmul.f32 %v1982, %v2001
      %v2005 = vmul.f32 %v1983, %v2001
      %v2006 = vmul.f32 %v1984, %v2001
      %v2007 = vmul.f32 %v1985, %v2001
      %v2008 = vmul.f32 %v1986, %v2001
      %v2009 = vmul.f32 %v1987, %v2001
      %v2010 = vmul.f32 %v1988, %v2001
      %v2011 = vmul.f32 %v1989, %v2001
      %v2012 = vmul.f32 %v1990, %v2001
      %v2013 = vmul.f32 %v1991, %v2001
      %v2014 = vmul.f32 %v1992, %v2001
      %v2015 = vmul.f32 %v1993, %v2001
      %v2016 = vmul.f32 %v1994, %v2001
      %v2017 = vmul.f32 %v1995, %v2001
      %v2018 = vmul.f32 %v1996, %v2001
      %v2020 = vlaneseq
      %v2021 = vshrl.u32 %v2020, 7
      %v2022 = vsub.s32 0, %v2021
      %v2023 = vrot.slane %v1819, %v2022
      %v2025 = vadd.f32 %v2003, %v2023
      %v2026 = vadd.f32 %v2004, %v2023
      %v2027 = vadd.f32 %v2005, %v2023
      %v2028 = vadd.f32 %v2006, %v2023
      %v2029 = vadd.f32 %v2007, %v2023
      %v2030 = vadd.f32 %v2008, %v2023
      %v2031 = vadd.f32 %v2009, %v2023
      %v2032 = vadd.f32 %v2010, %v2023
      %v2033 = vadd.f32 %v2011, %v2023
      %v2034 = vadd.f32 %v2012, %v2023
      %v2035 = vadd.f32 %v2013, %v2023
      %v2036 = vadd.f32 %v2014, %v2023
      %v2037 = vadd.f32 %v2015, %v2023
      %v2038 = vadd.f32 %v2016, %v2023
      %v2039 = vadd.f32 %v2017, %v2023
      %v2040 = vadd.f32 %v2018, %v2023
      %v2041 = vld [vmem:[%s745] sm:$0xff]
      %v2042 = vld [vmem:[%s745 + $0x8] sm:$0xff]
      %v2043 = vld [vmem:[%s745 + $0x10] sm:$0xff]
      %v2044 = vld [vmem:[%s745 + $0x18] sm:$0xff]
      %v2045 = vld [vmem:[%s745 + $0x20] sm:$0xff]
      %v2046 = vld [vmem:[%s745 + $0x28] sm:$0xff]
      %v2047 = vld [vmem:[%s745 + $0x30] sm:$0xff]
      %v2048 = vld [vmem:[%s745 + $0x38] sm:$0xff]
      %v2049 = vld [vmem:[%s745 + $0x40] sm:$0xff]
      %v2050 = vld [vmem:[%s745 + $0x48] sm:$0xff]
      %v2051 = vld [vmem:[%s745 + $0x50] sm:$0xff]
      %v2052 = vld [vmem:[%s745 + $0x58] sm:$0xff]
      %v2053 = vld [vmem:[%s745 + $0x60] sm:$0xff]
      %v2054 = vld [vmem:[%s745 + $0x68] sm:$0xff]
      %v2055 = vld [vmem:[%s745 + $0x70] sm:$0xff]
      %v2056 = vld [vmem:[%s745 + $0x78] sm:$0xff]
      %v2057 = vld [vmem:[%s745 + $0x80] sm:$0xff]
      %v2058 = vld [vmem:[%s745 + $0x88] sm:$0xff]
      %v2059 = vld [vmem:[%s745 + $0x90] sm:$0xff]
      %v2060 = vld [vmem:[%s745 + $0x98] sm:$0xff]
      %v2061 = vld [vmem:[%s745 + $0xa0] sm:$0xff]
      %v2062 = vld [vmem:[%s745 + $0xa8] sm:$0xff]
      %v2063 = vld [vmem:[%s745 + $0xb0] sm:$0xff]
      %v2064 = vld [vmem:[%s745 + $0xb8] sm:$0xff]
      %v2065 = vld [vmem:[%s745 + $0xc0] sm:$0xff]
      %v2066 = vld [vmem:[%s745 + $0xc8] sm:$0xff]
      %v2067 = vld [vmem:[%s745 + $0xd0] sm:$0xff]
      %v2068 = vld [vmem:[%s745 + $0xd8] sm:$0xff]
      %v2069 = vld [vmem:[%s745 + $0xe0] sm:$0xff]
      %v2070 = vld [vmem:[%s745 + $0xe8] sm:$0xff]
      %v2071 = vld [vmem:[%s745 + $0xf0] sm:$0xff]
      %v2072 = vld [vmem:[%s745 + $0xf8] sm:$0xff]
      %v2073 = vld [vmem:[%s745 + $0x100] sm:$0xff]
      %v2074 = vld [vmem:[%s745 + $0x108] sm:$0xff]
      %v2075 = vld [vmem:[%s745 + $0x110] sm:$0xff]
      %v2076 = vld [vmem:[%s745 + $0x118] sm:$0xff]
      %v2077 = vld [vmem:[%s745 + $0x120] sm:$0xff]
      %v2078 = vld [vmem:[%s745 + $0x128] sm:$0xff]
      %v2079 = vld [vmem:[%s745 + $0x130] sm:$0xff]
      %v2080 = vld [vmem:[%s745 + $0x138] sm:$0xff]
      %v2081 = vld [vmem:[%s745 + $0x140] sm:$0xff]
      %v2082 = vld [vmem:[%s745 + $0x148] sm:$0xff]
      %v2083 = vld [vmem:[%s745 + $0x150] sm:$0xff]
      %v2084 = vld [vmem:[%s745 + $0x158] sm:$0xff]
      %v2085 = vld [vmem:[%s745 + $0x160] sm:$0xff]
      %v2086 = vld [vmem:[%s745 + $0x168] sm:$0xff]
      %v2087 = vld [vmem:[%s745 + $0x170] sm:$0xff]
      %v2088 = vld [vmem:[%s745 + $0x178] sm:$0xff]
      %v2089 = vpack.c.bf16 %v2026, %v2025
      %v2090 = vpack.c.bf16 %v2028, %v2027
      %v2091 = vpack.c.bf16 %v2030, %v2029
      %v2092 = vpack.c.bf16 %v2032, %v2031
      %v2093 = vpack.c.bf16 %v2034, %v2033
      %v2094 = vpack.c.bf16 %v2036, %v2035
      %v2095 = vpack.c.bf16 %v2038, %v2037
      %v2096 = vpack.c.bf16 %v2040, %v2039
      %v2097 = vld [vmem:[%s749] sm:$0x3f]
      %v2099 = vlaneseq
      %v2100 = vshrl.u32 %v2099, 7
      %v2101 = vsub.s32 0, %v2100
      %v2102 = vrot.slane %v2097, %v2101
      %v2103 = vlaneseq
      %v2104 = vshrl.u32 %v2103, 7
      %v2105 = vsub.s32 1, %v2104
      %v2106 = vrot.slane %v2097, %v2105
      %v2107 = vlaneseq
      %v2108 = vshrl.u32 %v2107, 7
      %v2109 = vsub.s32 2, %v2108
      %v2110 = vrot.slane %v2097, %v2109
      %v2111 = vlaneseq
      %v2112 = vshrl.u32 %v2111, 7
      %v2113 = vsub.s32 3, %v2112
      %v2114 = vrot.slane %v2097, %v2113
      %v2115 = vlaneseq
      %v2116 = vshrl.u32 %v2115, 7
      %v2117 = vsub.s32 4, %v2116
      %v2118 = vrot.slane %v2097, %v2117
      %v2119 = vlaneseq
      %v2120 = vshrl.u32 %v2119, 7
      %v2121 = vsub.s32 5, %v2120
      %v2122 = vrot.slane %v2097, %v2121
      %v2177 = vunpack.c.l.b16 %v2041
      %v2178 = vunpack.c.h.b16 %v2041
      %v2179 = vunpack.c.l.b16 %v2042
      %v2180 = vunpack.c.h.b16 %v2042
      %v2181 = vunpack.c.l.b16 %v2043
      %v2182 = vunpack.c.h.b16 %v2043
      %v2183 = vunpack.c.l.b16 %v2044
      %v2184 = vunpack.c.h.b16 %v2044
      %v2185 = vunpack.c.l.b16 %v2045
      %v2186 = vunpack.c.h.b16 %v2045
      %v2187 = vunpack.c.l.b16 %v2046
      %v2188 = vunpack.c.h.b16 %v2046
      %v2189 = vunpack.c.l.b16 %v2047
      %v2190 = vunpack.c.h.b16 %v2047
      %v2191 = vunpack.c.l.b16 %v2048
      %v2192 = vunpack.c.h.b16 %v2048
      %v2193 = vunpack.c.l.b16 %v2049
      %v2194 = vunpack.c.h.b16 %v2049
      %v2195 = vunpack.c.l.b16 %v2050
      %v2196 = vunpack.c.h.b16 %v2050
      %v2197 = vunpack.c.l.b16 %v2051
      %v2198 = vunpack.c.h.b16 %v2051
      %v2199 = vunpack.c.l.b16 %v2052
      %v2200 = vunpack.c.h.b16 %v2052
      %v2201 = vunpack.c.l.b16 %v2053
      %v2202 = vunpack.c.h.b16 %v2053
      %v2203 = vunpack.c.l.b16 %v2054
      %v2204 = vunpack.c.h.b16 %v2054
      %v2205 = vunpack.c.l.b16 %v2055
      %v2206 = vunpack.c.h.b16 %v2055
      %v2207 = vunpack.c.l.b16 %v2056
      %v2208 = vunpack.c.h.b16 %v2056
      %v2209 = vunpack.c.l.b16 %v2057
      %v2210 = vunpack.c.h.b16 %v2057
      %v2211 = vunpack.c.l.b16 %v2058
      %v2212 = vunpack.c.h.b16 %v2058
      %v2213 = vunpack.c.l.b16 %v2059
      %v2214 = vunpack.c.h.b16 %v2059
      %v2215 = vunpack.c.l.b16 %v2060
      %v2216 = vunpack.c.h.b16 %v2060
      %v2217 = vunpack.c.l.b16 %v2061
      %v2218 = vunpack.c.h.b16 %v2061
      %v2219 = vunpack.c.l.b16 %v2062
      %v2220 = vunpack.c.h.b16 %v2062
      %v2221 = vunpack.c.l.b16 %v2063
      %v2222 = vunpack.c.h.b16 %v2063
      %v2223 = vunpack.c.l.b16 %v2064
      %v2224 = vunpack.c.h.b16 %v2064
      %v2225 = vunpack.c.l.b16 %v2065
      %v2226 = vunpack.c.h.b16 %v2065
      %v2227 = vunpack.c.l.b16 %v2066
      %v2228 = vunpack.c.h.b16 %v2066
      %v2229 = vunpack.c.l.b16 %v2067
      %v2230 = vunpack.c.h.b16 %v2067
      %v2231 = vunpack.c.l.b16 %v2068
      %v2232 = vunpack.c.h.b16 %v2068
      %v2233 = vunpack.c.l.b16 %v2069
      %v2234 = vunpack.c.h.b16 %v2069
      %v2235 = vunpack.c.l.b16 %v2070
      %v2236 = vunpack.c.h.b16 %v2070
      %v2237 = vunpack.c.l.b16 %v2071
      %v2238 = vunpack.c.h.b16 %v2071
      %v2239 = vunpack.c.l.b16 %v2072
      %v2240 = vunpack.c.h.b16 %v2072
      %v2241 = vunpack.c.l.b16 %v2073
      %v2242 = vunpack.c.h.b16 %v2073
      %v2243 = vunpack.c.l.b16 %v2074
      %v2244 = vunpack.c.h.b16 %v2074
      %v2245 = vunpack.c.l.b16 %v2075
      %v2246 = vunpack.c.h.b16 %v2075
      %v2247 = vunpack.c.l.b16 %v2076
      %v2248 = vunpack.c.h.b16 %v2076
      %v2249 = vunpack.c.l.b16 %v2077
      %v2250 = vunpack.c.h.b16 %v2077
      %v2251 = vunpack.c.l.b16 %v2078
      %v2252 = vunpack.c.h.b16 %v2078
      %v2253 = vunpack.c.l.b16 %v2079
      %v2254 = vunpack.c.h.b16 %v2079
      %v2255 = vunpack.c.l.b16 %v2080
      %v2256 = vunpack.c.h.b16 %v2080
      %v2257 = vunpack.c.l.b16 %v2081
      %v2258 = vunpack.c.h.b16 %v2081
      %v2259 = vunpack.c.l.b16 %v2082
      %v2260 = vunpack.c.h.b16 %v2082
      %v2261 = vunpack.c.l.b16 %v2083
      %v2262 = vunpack.c.h.b16 %v2083
      %v2263 = vunpack.c.l.b16 %v2084
      %v2264 = vunpack.c.h.b16 %v2084
      %v2265 = vunpack.c.l.b16 %v2085
      %v2266 = vunpack.c.h.b16 %v2085
      %v2267 = vunpack.c.l.b16 %v2086
      %v2268 = vunpack.c.h.b16 %v2086
      %v2269 = vunpack.c.l.b16 %v2087
      %v2270 = vunpack.c.h.b16 %v2087
      %v2271 = vunpack.c.l.b16 %v2088
      %v2272 = vunpack.c.h.b16 %v2088
      %v2273 = vpack.c.b16 %v2183, %v2177
      %v2274 = vpack.c.b16 %v2184, %v2178
      %v2275 = vpack.c.b16 %v2185, %v2179
      %v2276 = vpack.c.b16 %v2186, %v2180
      %v2277 = vpack.c.b16 %v2187, %v2181
      %v2278 = vpack.c.b16 %v2188, %v2182
      %v2279 = vpack.c.b16 %v2195, %v2189
      %v2280 = vpack.c.b16 %v2196, %v2190
      %v2281 = vpack.c.b16 %v2197, %v2191
      %v2282 = vpack.c.b16 %v2198, %v2192
      %v2283 = vpack.c.b16 %v2199, %v2193
      %v2284 = vpack.c.b16 %v2200, %v2194
      %v2285 = vpack.c.b16 %v2207, %v2201
      %v2286 = vpack.c.b16 %v2208, %v2202
      %v2287 = vpack.c.b16 %v2209, %v2203
      %v2288 = vpack.c.b16 %v2210, %v2204
      %v2289 = vpack.c.b16 %v2211, %v2205
      %v2290 = vpack.c.b16 %v2212, %v2206
      %v2291 = vpack.c.b16 %v2219, %v2213
      %v2292 = vpack.c.b16 %v2220, %v2214
      %v2293 = vpack.c.b16 %v2221, %v2215
      %v2294 = vpack.c.b16 %v2222, %v2216
      %v2295 = vpack.c.b16 %v2223, %v2217
      %v2296 = vpack.c.b16 %v2224, %v2218
      %v2297 = vpack.c.b16 %v2231, %v2225
      %v2298 = vpack.c.b16 %v2232, %v2226
      %v2299 = vpack.c.b16 %v2233, %v2227
      %v2300 = vpack.c.b16 %v2234, %v2228
      %v2301 = vpack.c.b16 %v2235, %v2229
      %v2302 = vpack.c.b16 %v2236, %v2230
      %v2303 = vpack.c.b16 %v2243, %v2237
      %v2304 = vpack.c.b16 %v2244, %v2238
      %v2305 = vpack.c.b16 %v2245, %v2239
      %v2306 = vpack.c.b16 %v2246, %v2240
      %v2307 = vpack.c.b16 %v2247, %v2241
      %v2308 = vpack.c.b16 %v2248, %v2242
      %v2309 = vpack.c.b16 %v2255, %v2249
      %v2310 = vpack.c.b16 %v2256, %v2250
      %v2311 = vpack.c.b16 %v2257, %v2251
      %v2312 = vpack.c.b16 %v2258, %v2252
      %v2313 = vpack.c.b16 %v2259, %v2253
      %v2314 = vpack.c.b16 %v2260, %v2254
      %v2315 = vpack.c.b16 %v2267, %v2261
      %v2316 = vpack.c.b16 %v2268, %v2262
      %v2317 = vpack.c.b16 %v2269, %v2263
      %v2318 = vpack.c.b16 %v2270, %v2264
      %v2319 = vpack.c.b16 %v2271, %v2265
      %v2320 = vpack.c.b16 %v2272, %v2266
      %2369 = vmatprep.subr.bf16.mxu0 %v2316
      %2370 = vmatpush1.bf16.msra.mxu0 %v2315
      %2371 = vmatprep.subr.bf16.mxu0 %v2310
      %2372 = vmatpush1.bf16.msra.mxu0 %v2309
      %2373 = vmatprep.subr.bf16.mxu0 %v2304
      %2374 = vmatpush1.bf16.msra.mxu0 %v2303
      %2375 = vmatprep.subr.bf16.mxu0 %v2298
      %2376 = vmatpush1.bf16.msra.mxu0 %v2297
      %2377 = vmatprep.subr.bf16.mxu0 %v2292
      %2378 = vmatpush1.bf16.msra.mxu0 %v2291
      %2379 = vmatprep.subr.bf16.mxu0 %v2286
      %2380 = vmatpush1.bf16.msra.mxu0 %v2285
      %2381 = vmatprep.subr.bf16.mxu0 %v2280
      %2382 = vmatpush1.bf16.msra.mxu0 %v2279
      %2383 = vmatprep.subr.bf16.mxu0 %v2274
      %2384 = vmatpush1.bf16.msra.mxu0 %v2273
      %2385 = vmatprep.subr.bf16.mxu0 0
      %2386 = vmatpush2.bf16.msra.mxu0 0
      %2387 = vmatprep.subr.bf16.mxu0 0
      %2388 = vmatpush2.bf16.msra.mxu0 0
      %2389 = vmatprep.subr.bf16.mxu0 0
      %2390 = vmatpush2.bf16.msra.mxu0 0
      %2391 = vmatprep.subr.bf16.mxu0 0
      %2392 = vmatpush2.bf16.msra.mxu0 0
      %2393 = vmatprep.subr.bf16.mxu0 0
      %2394 = vmatpush2.bf16.msra.mxu0 0
      %2395 = vmatprep.subr.bf16.mxu0 0
      %2396 = vmatpush2.bf16.msra.mxu0 0
      %2397 = vmatprep.subr.bf16.mxu0 0
      %2398 = vmatpush2.bf16.msra.mxu0 0
      %2399 = vmatprep.subr.bf16.mxu0 0
      %2400 = vmatpush2.bf16.msra.mxu0 0
      %2401 = vmatprep.mubr.bf16.mxu0 0
      %2402 = vmatmul.mubr.bf16.gmra.mxu0 %v2089
      %v2403 = vpop.f32.mrf.mxu0
      %v2404 = vadd.f32 %v2102, %v2403
      %v2405 = vpop.f32.mrf.mxu0
      %v2406 = vadd.f32 %v2106, %v2405
      %v2407 = vpop.f32.mrf.mxu0
      %v2408 = vadd.f32 %v2102, %v2407
      %v2409 = vpop.f32.mrf.mxu0
      %v2410 = vadd.f32 %v2106, %v2409
      %2411 = vmatprep.mubr.bf16.mxu0 0
      %2412 = vmatmul.mubr.bf16.gmra.mxu0 %v2090
      %v2413 = vpop.f32.mrf.mxu0
      %v2414 = vadd.f32 %v2102, %v2413
      %v2415 = vpop.f32.mrf.mxu0
      %v2416 = vadd.f32 %v2106, %v2415
      %v2417 = vpop.f32.mrf.mxu0
      %v2418 = vadd.f32 %v2102, %v2417
      %v2419 = vpop.f32.mrf.mxu0
      %v2420 = vadd.f32 %v2106, %v2419
      %2421 = vmatprep.mubr.bf16.mxu0 0
      %2422 = vmatmul.mubr.bf16.gmra.mxu0 %v2091
      %v2423 = vpop.f32.mrf.mxu0
      %v2424 = vadd.f32 %v2102, %v2423
      %v2425 = vpop.f32.mrf.mxu0
      %v2426 = vadd.f32 %v2106, %v2425
      %v2427 = vpop.f32.mrf.mxu0
      %v2428 = vadd.f32 %v2102, %v2427
      %v2429 = vpop.f32.mrf.mxu0
      %v2430 = vadd.f32 %v2106, %v2429
      %2431 = vmatprep.mubr.bf16.mxu0 0
      %2432 = vmatmul.mubr.bf16.gmra.mxu0 %v2092
      %v2433 = vpop.f32.mrf.mxu0
      %v2434 = vadd.f32 %v2102, %v2433
      %v2435 = vpop.f32.mrf.mxu0
      %v2436 = vadd.f32 %v2106, %v2435
      %v2437 = vpop.f32.mrf.mxu0
      %v2438 = vadd.f32 %v2102, %v2437
      %v2439 = vpop.f32.mrf.mxu0
      %v2440 = vadd.f32 %v2106, %v2439
      %2441 = vmatprep.mubr.bf16.mxu0 0
      %2442 = vmatmul.mubr.bf16.gmra.mxu0 %v2093
      %v2443 = vpop.f32.mrf.mxu0
      %v2444 = vadd.f32 %v2102, %v2443
      %v2445 = vpop.f32.mrf.mxu0
      %v2446 = vadd.f32 %v2106, %v2445
      %v2447 = vpop.f32.mrf.mxu0
      %v2448 = vadd.f32 %v2102, %v2447
      %v2449 = vpop.f32.mrf.mxu0
      %v2450 = vadd.f32 %v2106, %v2449
      %2451 = vmatprep.mubr.bf16.mxu0 0
      %2452 = vmatmul.mubr.bf16.gmra.mxu0 %v2094
      %v2453 = vpop.f32.mrf.mxu0
      %v2454 = vadd.f32 %v2102, %v2453
      %v2455 = vpop.f32.mrf.mxu0
      %v2456 = vadd.f32 %v2106, %v2455
      %v2457 = vpop.f32.mrf.mxu0
      %v2458 = vadd.f32 %v2102, %v2457
      %v2459 = vpop.f32.mrf.mxu0
      %v2460 = vadd.f32 %v2106, %v2459
      %2461 = vmatprep.mubr.bf16.mxu0 0
      %2462 = vmatmul.mubr.bf16.gmra.mxu0 %v2095
      %v2463 = vpop.f32.mrf.mxu0
      %v2464 = vadd.f32 %v2102, %v2463
      %v2465 = vpop.f32.mrf.mxu0
      %v2466 = vadd.f32 %v2106, %v2465
      %v2467 = vpop.f32.mrf.mxu0
      %v2468 = vadd.f32 %v2102, %v2467
      %v2469 = vpop.f32.mrf.mxu0
      %v2470 = vadd.f32 %v2106, %v2469
      %2471 = vmatprep.mubr.bf16.mxu0 0
      %2472 = vmatmul.mubr.bf16.gmra.mxu0 %v2096
      %v2473 = vpop.f32.mrf.mxu0
      %v2474 = vadd.f32 %v2102, %v2473
      %v2475 = vpop.f32.mrf.mxu0
      %v2476 = vadd.f32 %v2106, %v2475
      %v2477 = vpop.f32.mrf.mxu0
      %v2478 = vadd.f32 %v2102, %v2477
      %v2479 = vpop.f32.mrf.mxu0
      %v2480 = vadd.f32 %v2106, %v2479
      %2481 = vdwg.mxu0
      %2482 = vmatprep.subr.bf16.mxu0 %v2318
      %2483 = vmatpush1.bf16.msra.mxu0 %v2317
      %2484 = vmatprep.subr.bf16.mxu0 %v2312
      %2485 = vmatpush1.bf16.msra.mxu0 %v2311
      %2486 = vmatprep.subr.bf16.mxu0 %v2306
      %2487 = vmatpush1.bf16.msra.mxu0 %v2305
      %2488 = vmatprep.subr.bf16.mxu0 %v2300
      %2489 = vmatpush1.bf16.msra.mxu0 %v2299
      %2490 = vmatprep.subr.bf16.mxu0 %v2294
      %2491 = vmatpush1.bf16.msra.mxu0 %v2293
      %2492 = vmatprep.subr.bf16.mxu0 %v2288
      %2493 = vmatpush1.bf16.msra.mxu0 %v2287
      %2494 = vmatprep.subr.bf16.mxu0 %v2282
      %2495 = vmatpush1.bf16.msra.mxu0 %v2281
      %2496 = vmatprep.subr.bf16.mxu0 %v2276
      %2497 = vmatpush1.bf16.msra.mxu0 %v2275
      %2498 = vmatprep.subr.bf16.mxu0 0
      %2499 = vmatpush2.bf16.msra.mxu0 0
      %2500 = vmatprep.subr.bf16.mxu0 0
      %2501 = vmatpush2.bf16.msra.mxu0 0
      %2502 = vmatprep.subr.bf16.mxu0 0
      %2503 = vmatpush2.bf16.msra.mxu0 0
      %2504 = vmatprep.subr.bf16.mxu0 0
      %2505 = vmatpush2.bf16.msra.mxu0 0
      %2506 = vmatprep.subr.bf16.mxu0 0
      %2507 = vmatpush2.bf16.msra.mxu0 0
      %2508 = vmatprep.subr.bf16.mxu0 0
      %2509 = vmatpush2.bf16.msra.mxu0 0
      %2510 = vmatprep.subr.bf16.mxu0 0
      %2511 = vmatpush2.bf16.msra.mxu0 0
      %2512 = vmatprep.subr.bf16.mxu0 0
      %2513 = vmatpush2.bf16.msra.mxu0 0
      %2514 = vmatprep.mubr.bf16.mxu0 0
      %2515 = vmatmul.mubr.bf16.gmra.mxu0 %v2089
      %v2516 = vpop.f32.mrf.mxu0
      %v2517 = vadd.f32 %v2110, %v2516
      %v2518 = vpop.f32.mrf.mxu0
      %v2519 = vadd.f32 %v2114, %v2518
      %v2520 = vpop.f32.mrf.mxu0
      %v2521 = vadd.f32 %v2110, %v2520
      %v2522 = vpop.f32.mrf.mxu0
      %v2523 = vadd.f32 %v2114, %v2522
      %2524 = vmatprep.mubr.bf16.mxu0 0
      %2525 = vmatmul.mubr.bf16.gmra.mxu0 %v2090
      %v2526 = vpop.f32.mrf.mxu0
      %v2527 = vadd.f32 %v2110, %v2526
      %v2528 = vpop.f32.mrf.mxu0
      %v2529 = vadd.f32 %v2114, %v2528
      %v2530 = vpop.f32.mrf.mxu0
      %v2531 = vadd.f32 %v2110, %v2530
      %v2532 = vpop.f32.mrf.mxu0
      %v2533 = vadd.f32 %v2114, %v2532
      %2534 = vmatprep.mubr.bf16.mxu0 0
      %2535 = vmatmul.mubr.bf16.gmra.mxu0 %v2091
      %v2536 = vpop.f32.mrf.mxu0
      %v2537 = vadd.f32 %v2110, %v2536
      %v2538 = vpop.f32.mrf.mxu0
      %v2539 = vadd.f32 %v2114, %v2538
      %v2540 = vpop.f32.mrf.mxu0
      %v2541 = vadd.f32 %v2110, %v2540
      %v2542 = vpop.f32.mrf.mxu0
      %v2543 = vadd.f32 %v2114, %v2542
      %2544 = vmatprep.mubr.bf16.mxu0 0
      %2545 = vmatmul.mubr.bf16.gmra.mxu0 %v2092
      %v2546 = vpop.f32.mrf.mxu0
      %v2547 = vadd.f32 %v2110, %v2546
      %v2548 = vpop.f32.mrf.mxu0
      %v2549 = vadd.f32 %v2114, %v2548
      %v2550 = vpop.f32.mrf.mxu0
      %v2551 = vadd.f32 %v2110, %v2550
      %v2552 = vpop.f32.mrf.mxu0
      %v2553 = vadd.f32 %v2114, %v2552
      %2554 = vmatprep.mubr.bf16.mxu0 0
      %2555 = vmatmul.mubr.bf16.gmra.mxu0 %v2093
      %v2556 = vpop.f32.mrf.mxu0
      %v2557 = vadd.f32 %v2110, %v2556
      %v2558 = vpop.f32.mrf.mxu0
      %v2559 = vadd.f32 %v2114, %v2558
      %v2560 = vpop.f32.mrf.mxu0
      %v2561 = vadd.f32 %v2110, %v2560
      %v2562 = vpop.f32.mrf.mxu0
      %v2563 = vadd.f32 %v2114, %v2562
      %2564 = vmatprep.mubr.bf16.mxu0 0
      %2565 = vmatmul.mubr.bf16.gmra.mxu0 %v2094
      %v2566 = vpop.f32.mrf.mxu0
      %v2567 = vadd.f32 %v2110, %v2566
      %v2568 = vpop.f32.mrf.mxu0
      %v2569 = vadd.f32 %v2114, %v2568
      %v2570 = vpop.f32.mrf.mxu0
      %v2571 = vadd.f32 %v2110, %v2570
      %v2572 = vpop.f32.mrf.mxu0
      %v2573 = vadd.f32 %v2114, %v2572
      %2574 = vmatprep.mubr.bf16.mxu0 0
      %2575 = vmatmul.mubr.bf16.gmra.mxu0 %v2095
      %v2576 = vpop.f32.mrf.mxu0
      %v2577 = vadd.f32 %v2110, %v2576
      %v2578 = vpop.f32.mrf.mxu0
      %v2579 = vadd.f32 %v2114, %v2578
      %v2580 = vpop.f32.mrf.mxu0
      %v2581 = vadd.f32 %v2110, %v2580
      %v2582 = vpop.f32.mrf.mxu0
      %v2583 = vadd.f32 %v2114, %v2582
      %2584 = vmatprep.mubr.bf16.mxu0 0
      %2585 = vmatmul.mubr.bf16.gmra.mxu0 %v2096
      %v2586 = vpop.f32.mrf.mxu0
      %v2587 = vadd.f32 %v2110, %v2586
      %v2588 = vpop.f32.mrf.mxu0
      %v2589 = vadd.f32 %v2114, %v2588
      %v2590 = vpop.f32.mrf.mxu0
      %v2591 = vadd.f32 %v2110, %v2590
      %v2592 = vpop.f32.mrf.mxu0
      %v2593 = vadd.f32 %v2114, %v2592
      %2594 = vdwg.mxu0
      %2595 = vmatprep.subr.bf16.mxu0 %v2320
      %2596 = vmatpush1.bf16.msra.mxu0 %v2319
      %2597 = vmatprep.subr.bf16.mxu0 %v2314
      %2598 = vmatpush1.bf16.msra.mxu0 %v2313
      %2599 = vmatprep.subr.bf16.mxu0 %v2308
      %2600 = vmatpush1.bf16.msra.mxu0 %v2307
      %2601 = vmatprep.subr.bf16.mxu0 %v2302
      %2602 = vmatpush1.bf16.msra.mxu0 %v2301
      %2603 = vmatprep.subr.bf16.mxu0 %v2296
      %2604 = vmatpush1.bf16.msra.mxu0 %v2295
      %2605 = vmatprep.subr.bf16.mxu0 %v2290
      %2606 = vmatpush1.bf16.msra.mxu0 %v2289
      %2607 = vmatprep.subr.bf16.mxu0 %v2284
      %2608 = vmatpush1.bf16.msra.mxu0 %v2283
      %2609 = vmatprep.subr.bf16.mxu0 %v2278
      %2610 = vmatpush1.bf16.msra.mxu0 %v2277
      %2611 = vmatprep.subr.bf16.mxu0 0
      %2612 = vmatpush2.bf16.msra.mxu0 0
      %2613 = vmatprep.subr.bf16.mxu0 0
      %2614 = vmatpush2.bf16.msra.mxu0 0
      %2615 = vmatprep.subr.bf16.mxu0 0
      %2616 = vmatpush2.bf16.msra.mxu0 0
      %2617 = vmatprep.subr.bf16.mxu0 0
      %2618 = vmatpush2.bf16.msra.mxu0 0
      %2619 = vmatprep.subr.bf16.mxu0 0
      %2620 = vmatpush2.bf16.msra.mxu0 0
      %2621 = vmatprep.subr.bf16.mxu0 0
      %2622 = vmatpush2.bf16.msra.mxu0 0
      %2623 = vmatprep.subr.bf16.mxu0 0
      %2624 = vmatpush2.bf16.msra.mxu0 0
      %2625 = vmatprep.subr.bf16.mxu0 0
      %2626 = vmatpush2.bf16.msra.mxu0 0
      %2627 = vmatprep.mubr.bf16.mxu0 0
      %2628 = vmatmul.mubr.bf16.gmra.mxu0 %v2089
      %v2629 = vpop.f32.mrf.mxu0
      %v2630 = vadd.f32 %v2118, %v2629
      %v2631 = vpop.f32.mrf.mxu0
      %v2632 = vadd.f32 %v2122, %v2631
      %v2633 = vpop.f32.mrf.mxu0
      %v2634 = vadd.f32 %v2118, %v2633
      %v2635 = vpop.f32.mrf.mxu0
      %v2636 = vadd.f32 %v2122, %v2635
      %2637 = vmatprep.mubr.bf16.mxu0 0
      %2638 = vmatmul.mubr.bf16.gmra.mxu0 %v2090
      %v2639 = vpop.f32.mrf.mxu0
      %v2640 = vadd.f32 %v2118, %v2639
      %v2641 = vpop.f32.mrf.mxu0
      %v2642 = vadd.f32 %v2122, %v2641
      %v2643 = vpop.f32.mrf.mxu0
      %v2644 = vadd.f32 %v2118, %v2643
      %v2645 = vpop.f32.mrf.mxu0
      %v2646 = vadd.f32 %v2122, %v2645
      %2647 = vmatprep.mubr.bf16.mxu0 0
      %2648 = vmatmul.mubr.bf16.gmra.mxu0 %v2091
      %v2649 = vpop.f32.mrf.mxu0
      %v2650 = vadd.f32 %v2118, %v2649
      %v2651 = vpop.f32.mrf.mxu0
      %v2652 = vadd.f32 %v2122, %v2651
      %v2653 = vpop.f32.mrf.mxu0
      %v2654 = vadd.f32 %v2118, %v2653
      %v2655 = vpop.f32.mrf.mxu0
      %v2656 = vadd.f32 %v2122, %v2655
      %2657 = vmatprep.mubr.bf16.mxu0 0
      %2658 = vmatmul.mubr.bf16.gmra.mxu0 %v2092
      %v2659 = vpop.f32.mrf.mxu0
      %v2660 = vadd.f32 %v2118, %v2659
      %v2661 = vpop.f32.mrf.mxu0
      %v2662 = vadd.f32 %v2122, %v2661
      %v2663 = vpop.f32.mrf.mxu0
      %v2664 = vadd.f32 %v2118, %v2663
      %v2665 = vpop.f32.mrf.mxu0
      %v2666 = vadd.f32 %v2122, %v2665
      %2667 = vmatprep.mubr.bf16.mxu0 0
      %2668 = vmatmul.mubr.bf16.gmra.mxu0 %v2093
      %v2669 = vpop.f32.mrf.mxu0
      %v2670 = vadd.f32 %v2118, %v2669
      %v2671 = vpop.f32.mrf.mxu0
      %v2672 = vadd.f32 %v2122, %v2671
      %v2673 = vpop.f32.mrf.mxu0
      %v2674 = vadd.f32 %v2118, %v2673
      %v2675 = vpop.f32.mrf.mxu0
      %v2676 = vadd.f32 %v2122, %v2675
      %2677 = vmatprep.mubr.bf16.mxu0 0
      %2678 = vmatmul.mubr.bf16.gmra.mxu0 %v2094
      %v2679 = vpop.f32.mrf.mxu0
      %v2680 = vadd.f32 %v2118, %v2679
      %v2681 = vpop.f32.mrf.mxu0
      %v2682 = vadd.f32 %v2122, %v2681
      %v2683 = vpop.f32.mrf.mxu0
      %v2684 = vadd.f32 %v2118, %v2683
      %v2685 = vpop.f32.mrf.mxu0
      %v2686 = vadd.f32 %v2122, %v2685
      %2687 = vmatprep.mubr.bf16.mxu0 0
      %2688 = vmatmul.mubr.bf16.gmra.mxu0 %v2095
      %v2689 = vpop.f32.mrf.mxu0
      %v2690 = vadd.f32 %v2118, %v2689
      %v2691 = vpop.f32.mrf.mxu0
      %v2692 = vadd.f32 %v2122, %v2691
      %v2693 = vpop.f32.mrf.mxu0
      %v2694 = vadd.f32 %v2118, %v2693
      %v2695 = vpop.f32.mrf.mxu0
      %v2696 = vadd.f32 %v2122, %v2695
      %2697 = vmatprep.mubr.bf16.mxu0 0
      %2698 = vmatmul.mubr.bf16.gmra.mxu0 %v2096
      %v2699 = vpop.f32.mrf.mxu0
      %v2700 = vadd.f32 %v2118, %v2699
      %v2701 = vpop.f32.mrf.mxu0
      %v2702 = vadd.f32 %v2122, %v2701
      %v2703 = vpop.f32.mrf.mxu0
      %v2704 = vadd.f32 %v2118, %v2703
      %v2705 = vpop.f32.mrf.mxu0
      %v2706 = vadd.f32 %v2122, %v2705
      %2707 = vdwg.mxu0
      %v2708 = vpack.c.bf16 %v2408, %v2404
      %v2709 = vpack.c.bf16 %v2410, %v2406
      %v2710 = vpack.c.bf16 %v2521, %v2517
      %v2711 = vpack.c.bf16 %v2523, %v2519
      %v2712 = vpack.c.bf16 %v2634, %v2630
      %v2713 = vpack.c.bf16 %v2636, %v2632
      %v2714 = vpack.c.bf16 %v2418, %v2414
      %v2715 = vpack.c.bf16 %v2420, %v2416
      %v2716 = vpack.c.bf16 %v2531, %v2527
      %v2717 = vpack.c.bf16 %v2533, %v2529
      %v2718 = vpack.c.bf16 %v2644, %v2640
      %v2719 = vpack.c.bf16 %v2646, %v2642
      %v2720 = vpack.c.bf16 %v2428, %v2424
      %v2721 = vpack.c.bf16 %v2430, %v2426
      %v2722 = vpack.c.bf16 %v2541, %v2537
      %v2723 = vpack.c.bf16 %v2543, %v2539
      %v2724 = vpack.c.bf16 %v2654, %v2650
      %v2725 = vpack.c.bf16 %v2656, %v2652
      %v2726 = vpack.c.bf16 %v2438, %v2434
      %v2727 = vpack.c.bf16 %v2440, %v2436
      %v2728 = vpack.c.bf16 %v2551, %v2547
      %v2729 = vpack.c.bf16 %v2553, %v2549
      %v2730 = vpack.c.bf16 %v2664, %v2660
      %v2731 = vpack.c.bf16 %v2666, %v2662
      %v2732 = vpack.c.bf16 %v2448, %v2444
      %v2733 = vpack.c.bf16 %v2450, %v2446
      %v2734 = vpack.c.bf16 %v2561, %v2557
      %v2735 = vpack.c.bf16 %v2563, %v2559
      %v2736 = vpack.c.bf16 %v2674, %v2670
      %v2737 = vpack.c.bf16 %v2676, %v2672
      %v2738 = vpack.c.bf16 %v2458, %v2454
      %v2739 = vpack.c.bf16 %v2460, %v2456
      %v2740 = vpack.c.bf16 %v2571, %v2567
      %v2741 = vpack.c.bf16 %v2573, %v2569
      %v2742 = vpack.c.bf16 %v2684, %v2680
      %v2743 = vpack.c.bf16 %v2686, %v2682
      %v2744 = vpack.c.bf16 %v2468, %v2464
      %v2745 = vpack.c.bf16 %v2470, %v2466
      %v2746 = vpack.c.bf16 %v2581, %v2577
      %v2747 = vpack.c.bf16 %v2583, %v2579
      %v2748 = vpack.c.bf16 %v2694, %v2690
      %v2749 = vpack.c.bf16 %v2696, %v2692
      %v2750 = vpack.c.bf16 %v2478, %v2474
      %v2751 = vpack.c.bf16 %v2480, %v2476
      %v2752 = vpack.c.bf16 %v2591, %v2587
      %v2753 = vpack.c.bf16 %v2593, %v2589
      %v2754 = vpack.c.bf16 %v2704, %v2700
      %v2755 = vpack.c.bf16 %v2706, %v2702
      %v2756 = vld [vmem:[%s754] sm:$0xf]
      %v2757 = vld [vmem:[%s754 + $0x4] sm:$0xf]
      %v2758 = vld [vmem:[%s754 + $0x8] sm:$0xf]
      %v2759 = vld [vmem:[%s754 + $0xc] sm:$0xf]
      %v2760 = vld [vmem:[%s754 + $0x10] sm:$0xf]
      %v2761 = vld [vmem:[%s754 + $0x14] sm:$0xf]
      %v2762 = vld [vmem:[%s754 + $0x18] sm:$0xf]
      %v2763 = vld [vmem:[%s754 + $0x1c] sm:$0xf]
      %v2764 = vld [vmem:[%s754 + $0x20] sm:$0xf]
      %v2765 = vld [vmem:[%s754 + $0x24] sm:$0xf]
      %v2766 = vld [vmem:[%s754 + $0x28] sm:$0xf]
      %v2767 = vld [vmem:[%s754 + $0x2c] sm:$0xf]
      %v2768 = vld [vmem:[%s754 + $0x30] sm:$0xf]
      %v2769 = vld [vmem:[%s754 + $0x34] sm:$0xf]
      %v2770 = vld [vmem:[%s754 + $0x38] sm:$0xf]
      %v2771 = vld [vmem:[%s754 + $0x3c] sm:$0xf]
      %v2772 = vld [vmem:[%s754 + $0x40] sm:$0xf]
      %v2773 = vld [vmem:[%s754 + $0x44] sm:$0xf]
      %v2774 = vld [vmem:[%s754 + $0x48] sm:$0xf]
      %v2775 = vld [vmem:[%s754 + $0x4c] sm:$0xf]
      %v2776 = vld [vmem:[%s754 + $0x50] sm:$0xf]
      %v2777 = vld [vmem:[%s754 + $0x54] sm:$0xf]
      %v2778 = vld [vmem:[%s754 + $0x58] sm:$0xf]
      %v2779 = vld [vmem:[%s754 + $0x5c] sm:$0xf]
      %v2780 = vld [vmem:[%s754 + $0x60] sm:$0xf]
      %v2781 = vld [vmem:[%s754 + $0x64] sm:$0xf]
      %v2782 = vld [vmem:[%s754 + $0x68] sm:$0xf]
      %v2783 = vld [vmem:[%s754 + $0x6c] sm:$0xf]
      %v2784 = vld [vmem:[%s754 + $0x70] sm:$0xf]
      %v2785 = vld [vmem:[%s754 + $0x74] sm:$0xf]
      %v2786 = vld [vmem:[%s754 + $0x78] sm:$0xf]
      %v2787 = vld [vmem:[%s754 + $0x7c] sm:$0xf]
      %2788 = vmatprep.subr.bf16.mxu0 0
      %2789 = vmatpush1.bf16.xpose.msra.mxu0 %v2751
      %2790 = vmatprep.subr.bf16.mxu0 0
      %2791 = vmatpush1.bf16.xpose.msra.mxu0 %v2745
      %2792 = vmatprep.subr.bf16.mxu0 0
      %2793 = vmatpush1.bf16.xpose.msra.mxu0 %v2739
      %2794 = vmatprep.subr.bf16.mxu0 0
      %2795 = vmatpush1.bf16.xpose.msra.mxu0 %v2733
      %2796 = vmatprep.subr.bf16.mxu0 0
      %2797 = vmatpush1.bf16.xpose.msra.mxu0 %v2727
      %2798 = vmatprep.subr.bf16.mxu0 0
      %2799 = vmatpush1.bf16.xpose.msra.mxu0 %v2721
      %2800 = vmatprep.subr.bf16.mxu0 0
      %2801 = vmatpush1.bf16.xpose.msra.mxu0 %v2715
      %2802 = vmatprep.subr.bf16.mxu0 0
      %2803 = vmatpush1.bf16.xpose.msra.mxu0 %v2709
      %2804 = vmatprep.subr.bf16.mxu0 0
      %2805 = vmatpush2.bf16.xpose.msra.mxu0 0
      %2806 = vmatprep.subr.bf16.mxu0 0
      %2807 = vmatpush2.bf16.xpose.msra.mxu0 0
      %2808 = vmatprep.subr.bf16.mxu0 0
      %2809 = vmatpush2.bf16.xpose.msra.mxu0 0
      %2810 = vmatprep.subr.bf16.mxu0 0
      %2811 = vmatpush2.bf16.xpose.msra.mxu0 0
      %2812 = vmatprep.subr.bf16.mxu0 0
      %2813 = vmatpush2.bf16.xpose.msra.mxu0 0
      %2814 = vmatprep.subr.bf16.mxu0 0
      %2815 = vmatpush2.bf16.xpose.msra.mxu0 0
      %2816 = vmatprep.subr.bf16.mxu0 0
      %2817 = vmatpush2.bf16.xpose.msra.mxu0 0
      %2818 = vmatprep.subr.bf16.mxu0 0
      %2819 = vmatpush2.bf16.xpose.msra.mxu0 0
      %2820 = vmatprep.mubr.bf16.mxu0 0
      %2821 = vmatmul.mubr.bf16.gmra.mxu0 %v2708
      %v2822 = vpop.f32.mrf.mxu0
      %v2823 = vadd.f32 0.0, %v2822
      %v2824 = vpop.f32.mrf.mxu0
      %v2825 = vpop.f32.mrf.mxu0
      %v2826 = vadd.f32 0.0, %v2825
      %v2827 = vpop.f32.mrf.mxu0
      %2828 = vmatprep.mubr.bf16.mxu0 0
      %2829 = vmatmul.mubr.bf16.gmra.mxu0 %v2714
      %v2830 = vpop.f32.mrf.mxu0
      %v2831 = vadd.f32 0.0, %v2830
      %v2832 = vpop.f32.mrf.mxu0
      %v2833 = vpop.f32.mrf.mxu0
      %v2834 = vadd.f32 0.0, %v2833
      %v2835 = vpop.f32.mrf.mxu0
      %2836 = vmatprep.mubr.bf16.mxu0 0
      %2837 = vmatmul.mubr.bf16.gmra.mxu0 %v2720
      %v2838 = vpop.f32.mrf.mxu0
      %v2839 = vadd.f32 0.0, %v2838
      %v2840 = vpop.f32.mrf.mxu0
      %v2841 = vpop.f32.mrf.mxu0
      %v2842 = vadd.f32 0.0, %v2841
      %v2843 = vpop.f32.mrf.mxu0
      %2844 = vmatprep.mubr.bf16.mxu0 0
      %2845 = vmatmul.mubr.bf16.gmra.mxu0 %v2726
      %v2846 = vpop.f32.mrf.mxu0
      %v2847 = vadd.f32 0.0, %v2846
      %v2848 = vpop.f32.mrf.mxu0
      %v2849 = vpop.f32.mrf.mxu0
      %v2850 = vadd.f32 0.0, %v2849
      %v2851 = vpop.f32.mrf.mxu0
      %2852 = vmatprep.mubr.bf16.mxu0 0
      %2853 = vmatmul.mubr.bf16.gmra.mxu0 %v2732
      %v2854 = vpop.f32.mrf.mxu0
      %v2855 = vadd.f32 0.0, %v2854
      %v2856 = vpop.f32.mrf.mxu0
      %v2857 = vpop.f32.mrf.mxu0
      %v2858 = vadd.f32 0.0, %v2857
      %v2859 = vpop.f32.mrf.mxu0
      %2860 = vmatprep.mubr.bf16.mxu0 0
      %2861 = vmatmul.mubr.bf16.gmra.mxu0 %v2738
      %v2862 = vpop.f32.mrf.mxu0
      %v2863 = vadd.f32 0.0, %v2862
      %v2864 = vpop.f32.mrf.mxu0
      %v2865 = vpop.f32.mrf.mxu0
      %v2866 = vadd.f32 0.0, %v2865
      %v2867 = vpop.f32.mrf.mxu0
      %2868 = vmatprep.mubr.bf16.mxu0 0
      %2869 = vmatmul.mubr.bf16.gmra.mxu0 %v2744
      %v2870 = vpop.f32.mrf.mxu0
      %v2871 = vadd.f32 0.0, %v2870
      %v2872 = vpop.f32.mrf.mxu0
      %v2873 = vpop.f32.mrf.mxu0
      %v2874 = vadd.f32 0.0, %v2873
      %v2875 = vpop.f32.mrf.mxu0
      %2876 = vmatprep.mubr.bf16.mxu0 0
      %2877 = vmatmul.mubr.bf16.gmra.mxu0 %v2750
      %v2878 = vpop.f32.mrf.mxu0
      %v2879 = vadd.f32 0.0, %v2878
      %v2880 = vpop.f32.mrf.mxu0
      %v2881 = vpop.f32.mrf.mxu0
      %v2882 = vadd.f32 0.0, %v2881
      %v2883 = vpop.f32.mrf.mxu0
      %2884 = vdwg.mxu0
      %v2885 = vmul.f32 %v2823, 0.125
      %v2886 = vmul.f32 %v2826, 0.125
      %v2887 = vmul.f32 %v2831, 0.125
      %v2888 = vmul.f32 %v2834, 0.125
      %v2889 = vmul.f32 %v2839, 0.125
      %v2890 = vmul.f32 %v2842, 0.125
      %v2891 = vmul.f32 %v2847, 0.125
      %v2892 = vmul.f32 %v2850, 0.125
      %v2893 = vmul.f32 %v2855, 0.125
      %v2894 = vmul.f32 %v2858, 0.125
      %v2895 = vmul.f32 %v2863, 0.125
      %v2896 = vmul.f32 %v2866, 0.125
      %v2897 = vmul.f32 %v2871, 0.125
      %v2898 = vmul.f32 %v2874, 0.125
      %v2899 = vmul.f32 %v2879, 0.125
      %v2900 = vmul.f32 %v2882, 0.125
      %v2901 = vadd.f32 %v2885, %v1802
      %v2902 = vadd.f32 %v2886, %v1803
      %v2903 = vadd.f32 %v2887, %v1804
      %v2904 = vadd.f32 %v2888, %v1805
      %v2905 = vadd.f32 %v2889, %v1806
      %v2906 = vadd.f32 %v2890, %v1807
      %v2907 = vadd.f32 %v2891, %v1808
      %v2908 = vadd.f32 %v2892, %v1809
      %v2909 = vadd.f32 %v2893, %v1810
      %v2910 = vadd.f32 %v2894, %v1811
      %v2911 = vadd.f32 %v2895, %v1812
      %v2912 = vadd.f32 %v2896, %v1813
      %v2913 = vadd.f32 %v2897, %v1814
      %v2914 = vadd.f32 %v2898, %v1815
      %v2915 = vadd.f32 %v2899, %v1816
      %v2916 = vadd.f32 %v2900, %v1817
      %2917 = vmax.xlane.f32.xlu0 %v2901
      %v2918 = vpop.xlane.xlu0 %2917
      %2919 = vmax.xlane.f32.xlu0 %v2902
      %v2920 = vpop.xlane.xlu0 %2919
      %2921 = vmax.xlane.f32.xlu0 %v2903
      %v2922 = vpop.xlane.xlu0 %2921
      %2923 = vmax.xlane.f32.xlu0 %v2904
      %v2924 = vpop.xlane.xlu0 %2923
      %2925 = vmax.xlane.f32.xlu0 %v2905
      %v2926 = vpop.xlane.xlu0 %2925
      %2927 = vmax.xlane.f32.xlu0 %v2906
      %v2928 = vpop.xlane.xlu0 %2927
      %2929 = vmax.xlane.f32.xlu0 %v2907
      %v2930 = vpop.xlane.xlu0 %2929
      %2931 = vmax.xlane.f32.xlu0 %v2908
      %v2932 = vpop.xlane.xlu0 %2931
      %2933 = vmax.xlane.f32.xlu0 %v2909
      %v2934 = vpop.xlane.xlu0 %2933
      %2935 = vmax.xlane.f32.xlu0 %v2910
      %v2936 = vpop.xlane.xlu0 %2935
      %2937 = vmax.xlane.f32.xlu0 %v2911
      %v2938 = vpop.xlane.xlu0 %2937
      %2939 = vmax.xlane.f32.xlu0 %v2912
      %v2940 = vpop.xlane.xlu0 %2939
      %2941 = vmax.xlane.f32.xlu0 %v2913
      %v2942 = vpop.xlane.xlu0 %2941
      %2943 = vmax.xlane.f32.xlu0 %v2914
      %v2944 = vpop.xlane.xlu0 %2943
      %2945 = vmax.xlane.f32.xlu0 %v2915
      %v2946 = vpop.xlane.xlu0 %2945
      %2947 = vmax.xlane.f32.xlu0 %v2916
      %v2948 = vpop.xlane.xlu0 %2947
      %v2949 = vsub.f32 %v2901, %v2918
      %v2950 = vsub.f32 %v2902, %v2920
      %v2951 = vsub.f32 %v2903, %v2922
      %v2952 = vsub.f32 %v2904, %v2924
      %v2953 = vsub.f32 %v2905, %v2926
      %v2954 = vsub.f32 %v2906, %v2928
      %v2955 = vsub.f32 %v2907, %v2930
      %v2956 = vsub.f32 %v2908, %v2932
      %v2957 = vsub.f32 %v2909, %v2934
      %v2958 = vsub.f32 %v2910, %v2936
      %v2959 = vsub.f32 %v2911, %v2938
      %v2960 = vsub.f32 %v2912, %v2940
      %v2961 = vsub.f32 %v2913, %v2942
      %v2962 = vsub.f32 %v2914, %v2944
      %v2963 = vsub.f32 %v2915, %v2946
      %v2964 = vsub.f32 %v2916, %v2948
      %v2965 = vmul.f32 %v2949, 1.442695
      %v2966 = vpow.pop %v2965
      %v2967 = vmul.f32 %v2950, 1.442695
      %v2968 = vpow.pop %v2967
      %v2969 = vmul.f32 %v2951, 1.442695
      %v2970 = vpow.pop %v2969
      %v2971 = vmul.f32 %v2952, 1.442695
      %v2972 = vpow.pop %v2971
      %v2973 = vmul.f32 %v2953, 1.442695
      %v2974 = vpow.pop %v2973
      %v2975 = vmul.f32 %v2954, 1.442695
      %v2976 = vpow.pop %v2975
      %v2977 = vmul.f32 %v2955, 1.442695
      %v2978 = vpow.pop %v2977
      %v2979 = vmul.f32 %v2956, 1.442695
      %v2980 = vpow.pop %v2979
      %v2981 = vmul.f32 %v2957, 1.442695
      %v2982 = vpow.pop %v2981
      %v2983 = vmul.f32 %v2958, 1.442695
      %v2984 = vpow.pop %v2983
      %v2985 = vmul.f32 %v2959, 1.442695
      %v2986 = vpow.pop %v2985
      %v2987 = vmul.f32 %v2960, 1.442695
      %v2988 = vpow.pop %v2987
      %v2989 = vmul.f32 %v2961, 1.442695
      %v2990 = vpow.pop %v2989
      %v2991 = vmul.f32 %v2962, 1.442695
      %v2992 = vpow.pop %v2991
      %v2993 = vmul.f32 %v2963, 1.442695
      %v2994 = vpow.pop %v2993
      %v2995 = vmul.f32 %v2964, 1.442695
      %v2996 = vpow.pop %v2995
      %2997 = vadd.xlane.f32.xlu0 %v2966
      %v2998 = vpop.xlane.xlu0 %2997
      %2999 = vadd.xlane.f32.xlu0 %v2968
      %v3000 = vpop.xlane.xlu0 %2999
      %3001 = vadd.xlane.f32.xlu0 %v2970
      %v3002 = vpop.xlane.xlu0 %3001
      %3003 = vadd.xlane.f32.xlu0 %v2972
      %v3004 = vpop.xlane.xlu0 %3003
      %3005 = vadd.xlane.f32.xlu0 %v2974
      %v3006 = vpop.xlane.xlu0 %3005
      %3007 = vadd.xlane.f32.xlu0 %v2976
      %v3008 = vpop.xlane.xlu0 %3007
      %3009 = vadd.xlane.f32.xlu0 %v2978
      %v3010 = vpop.xlane.xlu0 %3009
      %3011 = vadd.xlane.f32.xlu0 %v2980
      %v3012 = vpop.xlane.xlu0 %3011
      %3013 = vadd.xlane.f32.xlu0 %v2982
      %v3014 = vpop.xlane.xlu0 %3013
      %3015 = vadd.xlane.f32.xlu0 %v2984
      %v3016 = vpop.xlane.xlu0 %3015
      %3017 = vadd.xlane.f32.xlu0 %v2986
      %v3018 = vpop.xlane.xlu0 %3017
      %3019 = vadd.xlane.f32.xlu0 %v2988
      %v3020 = vpop.xlane.xlu0 %3019
      %3021 = vadd.xlane.f32.xlu0 %v2990
      %v3022 = vpop.xlane.xlu0 %3021
      %3023 = vadd.xlane.f32.xlu0 %v2992
      %v3024 = vpop.xlane.xlu0 %3023
      %3025 = vadd.xlane.f32.xlu0 %v2994
      %v3026 = vpop.xlane.xlu0 %3025
      %3027 = vadd.xlane.f32.xlu0 %v2996
      %v3028 = vpop.xlane.xlu0 %3027
      %v3029 = vrcp.pop %v2998
      %v3030 = vrcp.pop %v3000
      %v3031 = vrcp.pop %v3002
      %v3032 = vrcp.pop %v3004
      %v3033 = vrcp.pop %v3006
      %v3034 = vrcp.pop %v3008
      %v3035 = vrcp.pop %v3010
      %v3036 = vrcp.pop %v3012
      %v3037 = vrcp.pop %v3014
      %v3038 = vrcp.pop %v3016
      %v3039 = vrcp.pop %v3018
      %v3040 = vrcp.pop %v3020
      %v3041 = vrcp.pop %v3022
      %v3042 = vrcp.pop %v3024
      %v3043 = vrcp.pop %v3026
      %v3044 = vrcp.pop %v3028
      %v3045 = vmul.f32 %v2966, %v3029
      %v3046 = vmul.f32 %v2968, %v3030
      %v3047 = vmul.f32 %v2970, %v3031
      %v3048 = vmul.f32 %v2972, %v3032
      %v3049 = vmul.f32 %v2974, %v3033
      %v3050 = vmul.f32 %v2976, %v3034
      %v3051 = vmul.f32 %v2978, %v3035
      %v3052 = vmul.f32 %v2980, %v3036
      %v3053 = vmul.f32 %v2982, %v3037
      %v3054 = vmul.f32 %v2984, %v3038
      %v3055 = vmul.f32 %v2986, %v3039
      %v3056 = vmul.f32 %v2988, %v3040
      %v3057 = vmul.f32 %v2990, %v3041
      %v3058 = vmul.f32 %v2992, %v3042
      %v3059 = vmul.f32 %v2994, %v3043
      %v3060 = vmul.f32 %v2996, %v3044
      %v3061 = vpack.c.bf16 %v3046, %v3045
      %v3062 = vpack.c.bf16 %v3048, %v3047
      %v3063 = vpack.c.bf16 %v3050, %v3049
      %v3064 = vpack.c.bf16 %v3052, %v3051
      %v3065 = vpack.c.bf16 %v3054, %v3053
      %v3066 = vpack.c.bf16 %v3056, %v3055
      %v3067 = vpack.c.bf16 %v3058, %v3057
      %v3068 = vpack.c.bf16 %v3060, %v3059
      %3069 = vmatprep.subr.bf16.mxu0 0
      %3070 = vmatpush1.bf16.msra.mxu0 %v2752
      %3071 = vmatprep.subr.bf16.mxu0 0
      %3072 = vmatpush1.bf16.msra.mxu0 %v2746
      %3073 = vmatprep.subr.bf16.mxu0 0
      %3074 = vmatpush1.bf16.msra.mxu0 %v2740
      %3075 = vmatprep.subr.bf16.mxu0 0
      %3076 = vmatpush1.bf16.msra.mxu0 %v2734
      %3077 = vmatprep.subr.bf16.mxu0 0
      %3078 = vmatpush1.bf16.msra.mxu0 %v2728
      %3079 = vmatprep.subr.bf16.mxu0 0
      %3080 = vmatpush1.bf16.msra.mxu0 %v2722
      %3081 = vmatprep.subr.bf16.mxu0 0
      %3082 = vmatpush1.bf16.msra.mxu0 %v2716
      %3083 = vmatprep.subr.bf16.mxu0 0
      %3084 = vmatpush1.bf16.msra.mxu0 %v2710
      %3085 = vmatprep.subr.bf16.mxu0 0
      %3086 = vmatpush2.bf16.msra.mxu0 0
      %3087 = vmatprep.subr.bf16.mxu0 0
      %3088 = vmatpush2.bf16.msra.mxu0 0
      %3089 = vmatprep.subr.bf16.mxu0 0
      %3090 = vmatpush2.bf16.msra.mxu0 0
      %3091 = vmatprep.subr.bf16.mxu0 0
      %3092 = vmatpush2.bf16.msra.mxu0 0
      %3093 = vmatprep.subr.bf16.mxu0 0
      %3094 = vmatpush2.bf16.msra.mxu0 0
      %3095 = vmatprep.subr.bf16.mxu0 0
      %3096 = vmatpush2.bf16.msra.mxu0 0
      %3097 = vmatprep.subr.bf16.mxu0 0
      %3098 = vmatpush2.bf16.msra.mxu0 0
      %3099 = vmatprep.subr.bf16.mxu0 0
      %3100 = vmatpush2.bf16.msra.mxu0 0
      %3101 = vmatprep.mubr.bf16.mxu0 0
      %3102 = vmatmul.mubr.bf16.gmra.mxu0 %v3061
      %v3103 = vpop.f32.mrf.mxu0
      %v3104 = vadd.f32 0.0, %v3103
      %v3105 = vpop.f32.mrf.mxu0
      %v3106 = vpop.f32.mrf.mxu0
      %v3107 = vadd.f32 0.0, %v3106
      %v3108 = vpop.f32.mrf.mxu0
      %3109 = vmatprep.mubr.bf16.mxu0 0
      %3110 = vmatmul.mubr.bf16.gmra.mxu0 %v3062
      %v3111 = vpop.f32.mrf.mxu0
      %v3112 = vadd.f32 0.0, %v3111
      %v3113 = vpop.f32.mrf.mxu0
      %v3114 = vpop.f32.mrf.mxu0
      %v3115 = vadd.f32 0.0, %v3114
      %v3116 = vpop.f32.mrf.mxu0
      %3117 = vmatprep.mubr.bf16.mxu0 0
      %3118 = vmatmul.mubr.bf16.gmra.mxu0 %v3063
      %v3119 = vpop.f32.mrf.mxu0
      %v3120 = vadd.f32 0.0, %v3119
      %v3121 = vpop.f32.mrf.mxu0
      %v3122 = vpop.f32.mrf.mxu0
      %v3123 = vadd.f32 0.0, %v3122
      %v3124 = vpop.f32.mrf.mxu0
      %3125 = vmatprep.mubr.bf16.mxu0 0
      %3126 = vmatmul.mubr.bf16.gmra.mxu0 %v3064
      %v3127 = vpop.f32.mrf.mxu0
      %v3128 = vadd.f32 0.0, %v3127
      %v3129 = vpop.f32.mrf.mxu0
      %v3130 = vpop.f32.mrf.mxu0
      %v3131 = vadd.f32 0.0, %v3130
      %v3132 = vpop.f32.mrf.mxu0
      %3133 = vmatprep.mubr.bf16.mxu0 0
      %3134 = vmatmul.mubr.bf16.gmra.mxu0 %v3065
      %v3135 = vpop.f32.mrf.mxu0
      %v3136 = vadd.f32 0.0, %v3135
      %v3137 = vpop.f32.mrf.mxu0
      %v3138 = vpop.f32.mrf.mxu0
      %v3139 = vadd.f32 0.0, %v3138
      %v3140 = vpop.f32.mrf.mxu0
      %3141 = vmatprep.mubr.bf16.mxu0 0
      %3142 = vmatmul.mubr.bf16.gmra.mxu0 %v3066
      %v3143 = vpop.f32.mrf.mxu0
      %v3144 = vadd.f32 0.0, %v3143
      %v3145 = vpop.f32.mrf.mxu0
      %v3146 = vpop.f32.mrf.mxu0
      %v3147 = vadd.f32 0.0, %v3146
      %v3148 = vpop.f32.mrf.mxu0
      %3149 = vmatprep.mubr.bf16.mxu0 0
      %3150 = vmatmul.mubr.bf16.gmra.mxu0 %v3067
      %v3151 = vpop.f32.mrf.mxu0
      %v3152 = vadd.f32 0.0, %v3151
      %v3153 = vpop.f32.mrf.mxu0
      %v3154 = vpop.f32.mrf.mxu0
      %v3155 = vadd.f32 0.0, %v3154
      %v3156 = vpop.f32.mrf.mxu0
      %3157 = vmatprep.mubr.bf16.mxu0 0
      %3158 = vmatmul.mubr.bf16.gmra.mxu0 %v3068
      %v3159 = vpop.f32.mrf.mxu0
      %v3160 = vadd.f32 0.0, %v3159
      %v3161 = vpop.f32.mrf.mxu0
      %v3162 = vpop.f32.mrf.mxu0
      %v3163 = vadd.f32 0.0, %v3162
      %v3164 = vpop.f32.mrf.mxu0
      %3165 = vdwg.mxu0
      %v3166 = vpack.c.bf16 %v3107, %v3104
      %v3167 = vpack.c.bf16 %v3115, %v3112
      %v3168 = vpack.c.bf16 %v3123, %v3120
      %v3169 = vpack.c.bf16 %v3131, %v3128
      %v3170 = vpack.c.bf16 %v3139, %v3136
      %v3171 = vpack.c.bf16 %v3147, %v3144
      %v3172 = vpack.c.bf16 %v3155, %v3152
      %v3173 = vpack.c.bf16 %v3163, %v3160
      %3174 = vmatprep.subr.bf16.mxu0 0
      %3175 = vmatpush1.bf16.xpose.msra.mxu0 %v2754
      %3176 = vmatprep.subr.bf16.mxu0 0
      %3177 = vmatpush1.bf16.xpose.msra.mxu0 %v2748
      %3178 = vmatprep.subr.bf16.mxu0 0
      %3179 = vmatpush1.bf16.xpose.msra.mxu0 %v2742
      %3180 = vmatprep.subr.bf16.mxu0 0
      %3181 = vmatpush1.bf16.xpose.msra.mxu0 %v2736
      %3182 = vmatprep.subr.bf16.mxu0 0
      %3183 = vmatpush1.bf16.xpose.msra.mxu0 %v2730
      %3184 = vmatprep.subr.bf16.mxu0 0
      %3185 = vmatpush1.bf16.xpose.msra.mxu0 %v2724
      %3186 = vmatprep.subr.bf16.mxu0 0
      %3187 = vmatpush1.bf16.xpose.msra.mxu0 %v2718
      %3188 = vmatprep.subr.bf16.mxu0 0
      %3189 = vmatpush1.bf16.xpose.msra.mxu0 %v2712
      %3190 = vmatprep.subr.bf16.mxu0 0
      %3191 = vmatpush2.bf16.xpose.msra.mxu0 0
      %3192 = vmatprep.subr.bf16.mxu0 0
      %3193 = vmatpush2.bf16.xpose.msra.mxu0 0
      %3194 = vmatprep.subr.bf16.mxu0 0
      %3195 = vmatpush2.bf16.xpose.msra.mxu0 0
      %3196 = vmatprep.subr.bf16.mxu0 0
      %3197 = vmatpush2.bf16.xpose.msra.mxu0 0
      %3198 = vmatprep.subr.bf16.mxu0 0
      %3199 = vmatpush2.bf16.xpose.msra.mxu0 0
      %3200 = vmatprep.subr.bf16.mxu0 0
      %3201 = vmatpush2.bf16.xpose.msra.mxu0 0
      %3202 = vmatprep.subr.bf16.mxu0 0
      %3203 = vmatpush2.bf16.xpose.msra.mxu0 0
      %3204 = vmatprep.subr.bf16.mxu0 0
      %3205 = vmatpush2.bf16.xpose.msra.mxu0 0
      %3206 = vmatprep.mubr.bf16.mxu0 0
      %3207 = vmatmul.mubr.bf16.gmra.mxu0 %v2711
      %v3208 = vpop.f32.mrf.mxu0
      %v3209 = vadd.f32 0.0, %v3208
      %v3210 = vpop.f32.mrf.mxu0
      %v3211 = vpop.f32.mrf.mxu0
      %v3212 = vadd.f32 0.0, %v3211
      %v3213 = vpop.f32.mrf.mxu0
      %3214 = vmatprep.mubr.bf16.mxu0 0
      %3215 = vmatmul.mubr.bf16.gmra.mxu0 %v2717
      %v3216 = vpop.f32.mrf.mxu0
      %v3217 = vadd.f32 0.0, %v3216
      %v3218 = vpop.f32.mrf.mxu0
      %v3219 = vpop.f32.mrf.mxu0
      %v3220 = vadd.f32 0.0, %v3219
      %v3221 = vpop.f32.mrf.mxu0
      %3222 = vmatprep.mubr.bf16.mxu0 0
      %3223 = vmatmul.mubr.bf16.gmra.mxu0 %v2723
      %v3224 = vpop.f32.mrf.mxu0
      %v3225 = vadd.f32 0.0, %v3224
      %v3226 = vpop.f32.mrf.mxu0
      %v3227 = vpop.f32.mrf.mxu0
      %v3228 = vadd.f32 0.0, %v3227
      %v3229 = vpop.f32.mrf.mxu0
      %3230 = vmatprep.mubr.bf16.mxu0 0
      %3231 = vmatmul.mubr.bf16.gmra.mxu0 %v2729
      %v3232 = vpop.f32.mrf.mxu0
      %v3233 = vadd.f32 0.0, %v3232
      %v3234 = vpop.f32.mrf.mxu0
      %v3235 = vpop.f32.mrf.mxu0
      %v3236 = vadd.f32 0.0, %v3235
      %v3237 = vpop.f32.mrf.mxu0
      %3238 = vmatprep.mubr.bf16.mxu0 0
      %3239 = vmatmul.mubr.bf16.gmra.mxu0 %v2735
      %v3240 = vpop.f32.mrf.mxu0
      %v3241 = vadd.f32 0.0, %v3240
      %v3242 = vpop.f32.mrf.mxu0
      %v3243 = vpop.f32.mrf.mxu0
      %v3244 = vadd.f32 0.0, %v3243
      %v3245 = vpop.f32.mrf.mxu0
      %3246 = vmatprep.mubr.bf16.mxu0 0
      %3247 = vmatmul.mubr.bf16.gmra.mxu0 %v2741
      %v3248 = vpop.f32.mrf.mxu0
      %v3249 = vadd.f32 0.0, %v3248
      %v3250 = vpop.f32.mrf.mxu0
      %v3251 = vpop.f32.mrf.mxu0
      %v3252 = vadd.f32 0.0, %v3251
      %v3253 = vpop.f32.mrf.mxu0
      %3254 = vmatprep.mubr.bf16.mxu0 0
      %3255 = vmatmul.mubr.bf16.gmra.mxu0 %v2747
      %v3256 = vpop.f32.mrf.mxu0
      %v3257 = vadd.f32 0.0, %v3256
      %v3258 = vpop.f32.mrf.mxu0
      %v3259 = vpop.f32.mrf.mxu0
      %v3260 = vadd.f32 0.0, %v3259
      %v3261 = vpop.f32.mrf.mxu0
      %3262 = vmatprep.mubr.bf16.mxu0 0
      %3263 = vmatmul.mubr.bf16.gmra.mxu0 %v2753
      %v3264 = vpop.f32.mrf.mxu0
      %v3265 = vadd.f32 0.0, %v3264
      %v3266 = vpop.f32.mrf.mxu0
      %v3267 = vpop.f32.mrf.mxu0
      %v3268 = vadd.f32 0.0, %v3267
      %v3269 = vpop.f32.mrf.mxu0
      %3270 = vdwg.mxu0
      %v3271 = vmul.f32 %v3209, 0.125
      %v3272 = vmul.f32 %v3212, 0.125
      %v3273 = vmul.f32 %v3217, 0.125
      %v3274 = vmul.f32 %v3220, 0.125
      %v3275 = vmul.f32 %v3225, 0.125
      %v3276 = vmul.f32 %v3228, 0.125
      %v3277 = vmul.f32 %v3233, 0.125
      %v3278 = vmul.f32 %v3236, 0.125
      %v3279 = vmul.f32 %v3241, 0.125
      %v3280 = vmul.f32 %v3244, 0.125
      %v3281 = vmul.f32 %v3249, 0.125
      %v3282 = vmul.f32 %v3252, 0.125
      %v3283 = vmul.f32 %v3257, 0.125
      %v3284 = vmul.f32 %v3260, 0.125
      %v3285 = vmul.f32 %v3265, 0.125
      %v3286 = vmul.f32 %v3268, 0.125
      %v3287 = vadd.f32 %v3271, %v1802
      %v3288 = vadd.f32 %v3272, %v1803
      %v3289 = vadd.f32 %v3273, %v1804
      %v3290 = vadd.f32 %v3274, %v1805
      %v3291 = vadd.f32 %v3275, %v1806
      %v3292 = vadd.f32 %v3276, %v1807
      %v3293 = vadd.f32 %v3277, %v1808
      %v3294 = vadd.f32 %v3278, %v1809
      %v3295 = vadd.f32 %v3279, %v1810
      %v3296 = vadd.f32 %v3280, %v1811
      %v3297 = vadd.f32 %v3281, %v1812
      %v3298 = vadd.f32 %v3282, %v1813
      %v3299 = vadd.f32 %v3283, %v1814
      %v3300 = vadd.f32 %v3284, %v1815
      %v3301 = vadd.f32 %v3285, %v1816
      %v3302 = vadd.f32 %v3286, %v1817
      %3303 = vmax.xlane.f32.xlu0 %v3287
      %v3304 = vpop.xlane.xlu0 %3303
      %3305 = vmax.xlane.f32.xlu0 %v3288
      %v3306 = vpop.xlane.xlu0 %3305
      %3307 = vmax.xlane.f32.xlu0 %v3289
      %v3308 = vpop.xlane.xlu0 %3307
      %3309 = vmax.xlane.f32.xlu0 %v3290
      %v3310 = vpop.xlane.xlu0 %3309
      %3311 = vmax.xlane.f32.xlu0 %v3291
      %v3312 = vpop.xlane.xlu0 %3311
      %3313 = vmax.xlane.f32.xlu0 %v3292
      %v3314 = vpop.xlane.xlu0 %3313
      %3315 = vmax.xlane.f32.xlu0 %v3293
      %v3316 = vpop.xlane.xlu0 %3315
      %3317 = vmax.xlane.f32.xlu0 %v3294
      %v3318 = vpop.xlane.xlu0 %3317
      %3319 = vmax.xlane.f32.xlu0 %v3295
      %v3320 = vpop.xlane.xlu0 %3319
      %3321 = vmax.xlane.f32.xlu0 %v3296
      %v3322 = vpop.xlane.xlu0 %3321
      %3323 = vmax.xlane.f32.xlu0 %v3297
      %v3324 = vpop.xlane.xlu0 %3323
      %3325 = vmax.xlane.f32.xlu0 %v3298
      %v3326 = vpop.xlane.xlu0 %3325
      %3327 = vmax.xlane.f32.xlu0 %v3299
      %v3328 = vpop.xlane.xlu0 %3327
      %3329 = vmax.xlane.f32.xlu0 %v3300
      %v3330 = vpop.xlane.xlu0 %3329
      %3331 = vmax.xlane.f32.xlu0 %v3301
      %v3332 = vpop.xlane.xlu0 %3331
      %3333 = vmax.xlane.f32.xlu0 %v3302
      %v3334 = vpop.xlane.xlu0 %3333
      %v3335 = vsub.f32 %v3287, %v3304
      %v3336 = vsub.f32 %v3288, %v3306
      %v3337 = vsub.f32 %v3289, %v3308
      %v3338 = vsub.f32 %v3290, %v3310
      %v3339 = vsub.f32 %v3291, %v3312
      %v3340 = vsub.f32 %v3292, %v3314
      %v3341 = vsub.f32 %v3293, %v3316
      %v3342 = vsub.f32 %v3294, %v3318
      %v3343 = vsub.f32 %v3295, %v3320
      %v3344 = vsub.f32 %v3296, %v3322
      %v3345 = vsub.f32 %v3297, %v3324
      %v3346 = vsub.f32 %v3298, %v3326
      %v3347 = vsub.f32 %v3299, %v3328
      %v3348 = vsub.f32 %v3300, %v3330
      %v3349 = vsub.f32 %v3301, %v3332
      %v3350 = vsub.f32 %v3302, %v3334
      %v3351 = vmul.f32 %v3335, 1.442695
      %v3352 = vpow.pop %v3351
      %v3353 = vmul.f32 %v3336, 1.442695
      %v3354 = vpow.pop %v3353
      %v3355 = vmul.f32 %v3337, 1.442695
      %v3356 = vpow.pop %v3355
      %v3357 = vmul.f32 %v3338, 1.442695
      %v3358 = vpow.pop %v3357
      %v3359 = vmul.f32 %v3339, 1.442695
      %v3360 = vpow.pop %v3359
      %v3361 = vmul.f32 %v3340, 1.442695
      %v3362 = vpow.pop %v3361
      %v3363 = vmul.f32 %v3341, 1.442695
      %v3364 = vpow.pop %v3363
      %v3365 = vmul.f32 %v3342, 1.442695
      %v3366 = vpow.pop %v3365
      %v3367 = vmul.f32 %v3343, 1.442695
      %v3368 = vpow.pop %v3367
      %v3369 = vmul.f32 %v3344, 1.442695
      %v3370 = vpow.pop %v3369
      %v3371 = vmul.f32 %v3345, 1.442695
      %v3372 = vpow.pop %v3371
      %v3373 = vmul.f32 %v3346, 1.442695
      %v3374 = vpow.pop %v3373
      %v3375 = vmul.f32 %v3347, 1.442695
      %v3376 = vpow.pop %v3375
      %v3377 = vmul.f32 %v3348, 1.442695
      %v3378 = vpow.pop %v3377
      %v3379 = vmul.f32 %v3349, 1.442695
      %v3380 = vpow.pop %v3379
      %v3381 = vmul.f32 %v3350, 1.442695
      %v3382 = vpow.pop %v3381
      %3383 = vadd.xlane.f32.xlu0 %v3352
      %v3384 = vpop.xlane.xlu0 %3383
      %3385 = vadd.xlane.f32.xlu0 %v3354
      %v3386 = vpop.xlane.xlu0 %3385
      %3387 = vadd.xlane.f32.xlu0 %v3356
      %v3388 = vpop.xlane.xlu0 %3387
      %3389 = vadd.xlane.f32.xlu0 %v3358
      %v3390 = vpop.xlane.xlu0 %3389
      %3391 = vadd.xlane.f32.xlu0 %v3360
      %v3392 = vpop.xlane.xlu0 %3391
      %3393 = vadd.xlane.f32.xlu0 %v3362
      %v3394 = vpop.xlane.xlu0 %3393
      %3395 = vadd.xlane.f32.xlu0 %v3364
      %v3396 = vpop.xlane.xlu0 %3395
      %3397 = vadd.xlane.f32.xlu0 %v3366
      %v3398 = vpop.xlane.xlu0 %3397
      %3399 = vadd.xlane.f32.xlu0 %v3368
      %v3400 = vpop.xlane.xlu0 %3399
      %3401 = vadd.xlane.f32.xlu0 %v3370
      %v3402 = vpop.xlane.xlu0 %3401
      %3403 = vadd.xlane.f32.xlu0 %v3372
      %v3404 = vpop.xlane.xlu0 %3403
      %3405 = vadd.xlane.f32.xlu0 %v3374
      %v3406 = vpop.xlane.xlu0 %3405
      %3407 = vadd.xlane.f32.xlu0 %v3376
      %v3408 = vpop.xlane.xlu0 %3407
      %3409 = vadd.xlane.f32.xlu0 %v3378
      %v3410 = vpop.xlane.xlu0 %3409
      %3411 = vadd.xlane.f32.xlu0 %v3380
      %v3412 = vpop.xlane.xlu0 %3411
      %3413 = vadd.xlane.f32.xlu0 %v3382
      %v3414 = vpop.xlane.xlu0 %3413
      %v3415 = vrcp.pop %v3384
      %v3416 = vrcp.pop %v3386
      %v3417 = vrcp.pop %v3388
      %v3418 = vrcp.pop %v3390
      %v3419 = vrcp.pop %v3392
      %v3420 = vrcp.pop %v3394
      %v3421 = vrcp.pop %v3396
      %v3422 = vrcp.pop %v3398
      %v3423 = vrcp.pop %v3400
      %v3424 = vrcp.pop %v3402
      %v3425 = vrcp.pop %v3404
      %v3426 = vrcp.pop %v3406
      %v3427 = vrcp.pop %v3408
      %v3428 = vrcp.pop %v3410
      %v3429 = vrcp.pop %v3412
      %v3430 = vrcp.pop %v3414
      %v3431 = vmul.f32 %v3352, %v3415
      %v3432 = vmul.f32 %v3354, %v3416
      %v3433 = vmul.f32 %v3356, %v3417
      %v3434 = vmul.f32 %v3358, %v3418
      %v3435 = vmul.f32 %v3360, %v3419
      %v3436 = vmul.f32 %v3362, %v3420
      %v3437 = vmul.f32 %v3364, %v3421
      %v3438 = vmul.f32 %v3366, %v3422
      %v3439 = vmul.f32 %v3368, %v3423
      %v3440 = vmul.f32 %v3370, %v3424
      %v3441 = vmul.f32 %v3372, %v3425
      %v3442 = vmul.f32 %v3374, %v3426
      %v3443 = vmul.f32 %v3376, %v3427
      %v3444 = vmul.f32 %v3378, %v3428
      %v3445 = vmul.f32 %v3380, %v3429
      %v3446 = vmul.f32 %v3382, %v3430
      %v3447 = vpack.c.bf16 %v3432, %v3431
      %v3448 = vpack.c.bf16 %v3434, %v3433
      %v3449 = vpack.c.bf16 %v3436, %v3435
      %v3450 = vpack.c.bf16 %v3438, %v3437
      %v3451 = vpack.c.bf16 %v3440, %v3439
      %v3452 = vpack.c.bf16 %v3442, %v3441
      %v3453 = vpack.c.bf16 %v3444, %v3443
      %v3454 = vpack.c.bf16 %v3446, %v3445
      %3455 = vmatprep.subr.bf16.mxu0 0
      %3456 = vmatpush1.bf16.msra.mxu0 %v2755
      %3457 = vmatprep.subr.bf16.mxu0 0
      %3458 = vmatpush1.bf16.msra.mxu0 %v2749
      %3459 = vmatprep.subr.bf16.mxu0 0
      %3460 = vmatpush1.bf16.msra.mxu0 %v2743
      %3461 = vmatprep.subr.bf16.mxu0 0
      %3462 = vmatpush1.bf16.msra.mxu0 %v2737
      %3463 = vmatprep.subr.bf16.mxu0 0
      %3464 = vmatpush1.bf16.msra.mxu0 %v2731
      %3465 = vmatprep.subr.bf16.mxu0 0
      %3466 = vmatpush1.bf16.msra.mxu0 %v2725
      %3467 = vmatprep.subr.bf16.mxu0 0
      %3468 = vmatpush1.bf16.msra.mxu0 %v2719
      %3469 = vmatprep.subr.bf16.mxu0 0
      %3470 = vmatpush1.bf16.msra.mxu0 %v2713
      %3471 = vmatprep.subr.bf16.mxu0 0
      %3472 = vmatpush2.bf16.msra.mxu0 0
      %3473 = vmatprep.subr.bf16.mxu0 0
      %3474 = vmatpush2.bf16.msra.mxu0 0
      %3475 = vmatprep.subr.bf16.mxu0 0
      %3476 = vmatpush2.bf16.msra.mxu0 0
      %3477 = vmatprep.subr.bf16.mxu0 0
      %3478 = vmatpush2.bf16.msra.mxu0 0
      %3479 = vmatprep.subr.bf16.mxu0 0
      %3480 = vmatpush2.bf16.msra.mxu0 0
      %3481 = vmatprep.subr.bf16.mxu0 0
      %3482 = vmatpush2.bf16.msra.mxu0 0
      %3483 = vmatprep.subr.bf16.mxu0 0
      %3484 = vmatpush2.bf16.msra.mxu0 0
      %3485 = vmatprep.subr.bf16.mxu0 0
      %3486 = vmatpush2.bf16.msra.mxu0 0
      %3487 = vmatprep.mubr.bf16.mxu0 0
      %3488 = vmatmul.mubr.bf16.gmra.mxu0 %v3447
      %v3489 = vpop.f32.mrf.mxu0
      %v3490 = vadd.f32 0.0, %v3489
      %v3491 = vpop.f32.mrf.mxu0
      %v3492 = vpop.f32.mrf.mxu0
      %v3493 = vadd.f32 0.0, %v3492
      %v3494 = vpop.f32.mrf.mxu0
      %3495 = vmatprep.mubr.bf16.mxu0 0
      %3496 = vmatmul.mubr.bf16.gmra.mxu0 %v3448
      %v3497 = vpop.f32.mrf.mxu0
      %v3498 = vadd.f32 0.0, %v3497
      %v3499 = vpop.f32.mrf.mxu0
      %v3500 = vpop.f32.mrf.mxu0
      %v3501 = vadd.f32 0.0, %v3500
      %v3502 = vpop.f32.mrf.mxu0
      %3503 = vmatprep.mubr.bf16.mxu0 0
      %3504 = vmatmul.mubr.bf16.gmra.mxu0 %v3449
      %v3505 = vpop.f32.mrf.mxu0
      %v3506 = vadd.f32 0.0, %v3505
      %v3507 = vpop.f32.mrf.mxu0
      %v3508 = vpop.f32.mrf.mxu0
      %v3509 = vadd.f32 0.0, %v3508
      %v3510 = vpop.f32.mrf.mxu0
      %3511 = vmatprep.mubr.bf16.mxu0 0
      %3512 = vmatmul.mubr.bf16.gmra.mxu0 %v3450
      %v3513 = vpop.f32.mrf.mxu0
      %v3514 = vadd.f32 0.0, %v3513
      %v3515 = vpop.f32.mrf.mxu0
      %v3516 = vpop.f32.mrf.mxu0
      %v3517 = vadd.f32 0.0, %v3516
      %v3518 = vpop.f32.mrf.mxu0
      %3519 = vmatprep.mubr.bf16.mxu0 0
      %3520 = vmatmul.mubr.bf16.gmra.mxu0 %v3451
      %v3521 = vpop.f32.mrf.mxu0
      %v3522 = vadd.f32 0.0, %v3521
      %v3523 = vpop.f32.mrf.mxu0
      %v3524 = vpop.f32.mrf.mxu0
      %v3525 = vadd.f32 0.0, %v3524
      %v3526 = vpop.f32.mrf.mxu0
      %3527 = vmatprep.mubr.bf16.mxu0 0
      %3528 = vmatmul.mubr.bf16.gmra.mxu0 %v3452
      %v3529 = vpop.f32.mrf.mxu0
      %v3530 = vadd.f32 0.0, %v3529
      %v3531 = vpop.f32.mrf.mxu0
      %v3532 = vpop.f32.mrf.mxu0
      %v3533 = vadd.f32 0.0, %v3532
      %v3534 = vpop.f32.mrf.mxu0
      %3535 = vmatprep.mubr.bf16.mxu0 0
      %3536 = vmatmul.mubr.bf16.gmra.mxu0 %v3453
      %v3537 = vpop.f32.mrf.mxu0
      %v3538 = vadd.f32 0.0, %v3537
      %v3539 = vpop.f32.mrf.mxu0
      %v3540 = vpop.f32.mrf.mxu0
      %v3541 = vadd.f32 0.0, %v3540
      %v3542 = vpop.f32.mrf.mxu0
      %3543 = vmatprep.mubr.bf16.mxu0 0
      %3544 = vmatmul.mubr.bf16.gmra.mxu0 %v3454
      %v3545 = vpop.f32.mrf.mxu0
      %v3546 = vadd.f32 0.0, %v3545
      %v3547 = vpop.f32.mrf.mxu0
      %v3548 = vpop.f32.mrf.mxu0
      %v3549 = vadd.f32 0.0, %v3548
      %v3550 = vpop.f32.mrf.mxu0
      %3551 = vdwg.mxu0
      %v3552 = vpack.c.bf16 %v3493, %v3490
      %v3553 = vpack.c.bf16 %v3501, %v3498
      %v3554 = vpack.c.bf16 %v3509, %v3506
      %v3555 = vpack.c.bf16 %v3517, %v3514
      %v3556 = vpack.c.bf16 %v3525, %v3522
      %v3557 = vpack.c.bf16 %v3533, %v3530
      %v3558 = vpack.c.bf16 %v3541, %v3538
      %v3559 = vpack.c.bf16 %v3549, %v3546
      %v3576 = vunpack.c.l.b16 %v2772
      %v3577 = vunpack.c.l.b16 %v2773
      %v3578 = vunpack.c.l.b16 %v2774
      %v3579 = vunpack.c.l.b16 %v2775
      %v3580 = vunpack.c.l.b16 %v2776
      %v3581 = vunpack.c.l.b16 %v2777
      %v3582 = vunpack.c.l.b16 %v2778
      %v3583 = vunpack.c.l.b16 %v2779
      %v3584 = vunpack.c.l.b16 %v2780
      %v3585 = vunpack.c.l.b16 %v2781
      %v3586 = vunpack.c.l.b16 %v2782
      %v3587 = vunpack.c.l.b16 %v2783
      %v3588 = vunpack.c.l.b16 %v2784
      %v3589 = vunpack.c.l.b16 %v2785
      %v3590 = vunpack.c.l.b16 %v2786
      %v3591 = vunpack.c.l.b16 %v2787
      %v3592 = vpack.c.b16 %v3577, %v3576
      %v3593 = vpack.c.b16 %v3579, %v3578
      %v3594 = vpack.c.b16 %v3581, %v3580
      %v3595 = vpack.c.b16 %v3583, %v3582
      %v3596 = vpack.c.b16 %v3585, %v3584
      %v3597 = vpack.c.b16 %v3587, %v3586
      %v3598 = vpack.c.b16 %v3589, %v3588
      %v3599 = vpack.c.b16 %v3591, %v3590
      %3608 = vmatprep.subr.bf16.mxu0 0
      %3609 = vmatpush1.bf16.msra.mxu0 %v3599
      %3610 = vmatprep.subr.bf16.mxu0 0
      %3611 = vmatpush1.bf16.msra.mxu0 %v3598
      %3612 = vmatprep.subr.bf16.mxu0 0
      %3613 = vmatpush1.bf16.msra.mxu0 %v3597
      %3614 = vmatprep.subr.bf16.mxu0 0
      %3615 = vmatpush1.bf16.msra.mxu0 %v3596
      %3616 = vmatprep.subr.bf16.mxu0 0
      %3617 = vmatpush1.bf16.msra.mxu0 %v3595
      %3618 = vmatprep.subr.bf16.mxu0 0
      %3619 = vmatpush1.bf16.msra.mxu0 %v3594
      %3620 = vmatprep.subr.bf16.mxu0 0
      %3621 = vmatpush1.bf16.msra.mxu0 %v3593
      %3622 = vmatprep.subr.bf16.mxu0 0
      %3623 = vmatpush1.bf16.msra.mxu0 %v3592
      %3624 = vmatprep.subr.bf16.mxu0 0
      %3625 = vmatpush2.bf16.msra.mxu0 0
      %3626 = vmatprep.subr.bf16.mxu0 0
      %3627 = vmatpush2.bf16.msra.mxu0 0
      %3628 = vmatprep.subr.bf16.mxu0 0
      %3629 = vmatpush2.bf16.msra.mxu0 0
      %3630 = vmatprep.subr.bf16.mxu0 0
      %3631 = vmatpush2.bf16.msra.mxu0 0
      %3632 = vmatprep.subr.bf16.mxu0 0
      %3633 = vmatpush2.bf16.msra.mxu0 0
      %3634 = vmatprep.subr.bf16.mxu0 0
      %3635 = vmatpush2.bf16.msra.mxu0 0
      %3636 = vmatprep.subr.bf16.mxu0 0
      %3637 = vmatpush2.bf16.msra.mxu0 0
      %3638 = vmatprep.subr.bf16.mxu0 0
      %3639 = vmatpush2.bf16.msra.mxu0 0
      %3640 = vmatprep.mubr.bf16.mxu0 0
      %3641 = vmatmul.mubr.bf16.gmra.mxu0 %v3552
      %v3642 = vpop.f32.mrf.mxu0
      %v3643 = vadd.f32 0.0, %v3642
      %v3644 = vpop.f32.mrf.mxu0
      %v3645 = vpop.f32.mrf.mxu0
      %v3646 = vadd.f32 0.0, %v3645
      %v3647 = vpop.f32.mrf.mxu0
      %3648 = vmatprep.mubr.bf16.mxu0 0
      %3649 = vmatmul.mubr.bf16.gmra.mxu0 %v3553
      %v3650 = vpop.f32.mrf.mxu0
      %v3651 = vadd.f32 0.0, %v3650
      %v3652 = vpop.f32.mrf.mxu0
      %v3653 = vpop.f32.mrf.mxu0
      %v3654 = vadd.f32 0.0, %v3653
      %v3655 = vpop.f32.mrf.mxu0
      %3656 = vmatprep.mubr.bf16.mxu0 0
      %3657 = vmatmul.mubr.bf16.gmra.mxu0 %v3554
      %v3658 = vpop.f32.mrf.mxu0
      %v3659 = vadd.f32 0.0, %v3658
      %v3660 = vpop.f32.mrf.mxu0
      %v3661 = vpop.f32.mrf.mxu0
      %v3662 = vadd.f32 0.0, %v3661
      %v3663 = vpop.f32.mrf.mxu0
      %3664 = vmatprep.mubr.bf16.mxu0 0
      %3665 = vmatmul.mubr.bf16.gmra.mxu0 %v3555
      %v3666 = vpop.f32.mrf.mxu0
      %v3667 = vadd.f32 0.0, %v3666
      %v3668 = vpop.f32.mrf.mxu0
      %v3669 = vpop.f32.mrf.mxu0
      %v3670 = vadd.f32 0.0, %v3669
      %v3671 = vpop.f32.mrf.mxu0
      %3672 = vmatprep.mubr.bf16.mxu0 0
      %3673 = vmatmul.mubr.bf16.gmra.mxu0 %v3556
      %v3674 = vpop.f32.mrf.mxu0
      %v3675 = vadd.f32 0.0, %v3674
      %v3676 = vpop.f32.mrf.mxu0
      %v3677 = vpop.f32.mrf.mxu0
      %v3678 = vadd.f32 0.0, %v3677
      %v3679 = vpop.f32.mrf.mxu0
      %3680 = vmatprep.mubr.bf16.mxu0 0
      %3681 = vmatmul.mubr.bf16.gmra.mxu0 %v3557
      %v3682 = vpop.f32.mrf.mxu0
      %v3683 = vadd.f32 0.0, %v3682
      %v3684 = vpop.f32.mrf.mxu0
      %v3685 = vpop.f32.mrf.mxu0
      %v3686 = vadd.f32 0.0, %v3685
      %v3687 = vpop.f32.mrf.mxu0
      %3688 = vmatprep.mubr.bf16.mxu0 0
      %3689 = vmatmul.mubr.bf16.gmra.mxu0 %v3558
      %v3690 = vpop.f32.mrf.mxu0
      %v3691 = vadd.f32 0.0, %v3690
      %v3692 = vpop.f32.mrf.mxu0
      %v3693 = vpop.f32.mrf.mxu0
      %v3694 = vadd.f32 0.0, %v3693
      %v3695 = vpop.f32.mrf.mxu0
      %3696 = vmatprep.mubr.bf16.mxu0 0
      %3697 = vmatmul.mubr.bf16.gmra.mxu0 %v3559
      %v3698 = vpop.f32.mrf.mxu0
      %v3699 = vadd.f32 0.0, %v3698
      %v3700 = vpop.f32.mrf.mxu0
      %v3701 = vpop.f32.mrf.mxu0
      %v3702 = vadd.f32 0.0, %v3701
      %v3703 = vpop.f32.mrf.mxu0
      %3704 = vdwg.mxu0
      %v3721 = vunpack.c.l.b16 %v2756
      %v3722 = vunpack.c.l.b16 %v2757
      %v3723 = vunpack.c.l.b16 %v2758
      %v3724 = vunpack.c.l.b16 %v2759
      %v3725 = vunpack.c.l.b16 %v2760
      %v3726 = vunpack.c.l.b16 %v2761
      %v3727 = vunpack.c.l.b16 %v2762
      %v3728 = vunpack.c.l.b16 %v2763
      %v3729 = vunpack.c.l.b16 %v2764
      %v3730 = vunpack.c.l.b16 %v2765
      %v3731 = vunpack.c.l.b16 %v2766
      %v3732 = vunpack.c.l.b16 %v2767
      %v3733 = vunpack.c.l.b16 %v2768
      %v3734 = vunpack.c.l.b16 %v2769
      %v3735 = vunpack.c.l.b16 %v2770
      %v3736 = vunpack.c.l.b16 %v2771
      %v3737 = vpack.c.b16 %v3722, %v3721
      %v3738 = vpack.c.b16 %v3724, %v3723
      %v3739 = vpack.c.b16 %v3726, %v3725
      %v3740 = vpack.c.b16 %v3728, %v3727
      %v3741 = vpack.c.b16 %v3730, %v3729
      %v3742 = vpack.c.b16 %v3732, %v3731
      %v3743 = vpack.c.b16 %v3734, %v3733
      %v3744 = vpack.c.b16 %v3736, %v3735
      %3753 = vmatprep.subr.bf16.mxu0 0
      %3754 = vmatpush1.bf16.msra.mxu0 %v3744
      %3755 = vmatprep.subr.bf16.mxu0 0
      %3756 = vmatpush1.bf16.msra.mxu0 %v3743
      %3757 = vmatprep.subr.bf16.mxu0 0
      %3758 = vmatpush1.bf16.msra.mxu0 %v3742
      %3759 = vmatprep.subr.bf16.mxu0 0
      %3760 = vmatpush1.bf16.msra.mxu0 %v3741
      %3761 = vmatprep.subr.bf16.mxu0 0
      %3762 = vmatpush1.bf16.msra.mxu0 %v3740
      %3763 = vmatprep.subr.bf16.mxu0 0
      %3764 = vmatpush1.bf16.msra.mxu0 %v3739
      %3765 = vmatprep.subr.bf16.mxu0 0
      %3766 = vmatpush1.bf16.msra.mxu0 %v3738
      %3767 = vmatprep.subr.bf16.mxu0 0
      %3768 = vmatpush1.bf16.msra.mxu0 %v3737
      %3769 = vmatprep.subr.bf16.mxu0 0
      %3770 = vmatpush2.bf16.msra.mxu0 0
      %3771 = vmatprep.subr.bf16.mxu0 0
      %3772 = vmatpush2.bf16.msra.mxu0 0
      %3773 = vmatprep.subr.bf16.mxu0 0
      %3774 = vmatpush2.bf16.msra.mxu0 0
      %3775 = vmatprep.subr.bf16.mxu0 0
      %3776 = vmatpush2.bf16.msra.mxu0 0
      %3777 = vmatprep.subr.bf16.mxu0 0
      %3778 = vmatpush2.bf16.msra.mxu0 0
      %3779 = vmatprep.subr.bf16.mxu0 0
      %3780 = vmatpush2.bf16.msra.mxu0 0
      %3781 = vmatprep.subr.bf16.mxu0 0
      %3782 = vmatpush2.bf16.msra.mxu0 0
      %3783 = vmatprep.subr.bf16.mxu0 0
      %3784 = vmatpush2.bf16.msra.mxu0 0
      %3785 = vmatprep.mubr.bf16.mxu0 0
      %3786 = vmatmul.mubr.bf16.gmra.mxu0 %v3166
      %v3787 = vpop.f32.mrf.mxu0
      %v3788 = vadd.f32 %v3643, %v3787
      %v3789 = vpop.f32.mrf.mxu0
      %v3790 = vpop.f32.mrf.mxu0
      %v3791 = vadd.f32 %v3646, %v3790
      %v3792 = vpop.f32.mrf.mxu0
      %3793 = vmatprep.mubr.bf16.mxu0 0
      %3794 = vmatmul.mubr.bf16.gmra.mxu0 %v3167
      %v3795 = vpop.f32.mrf.mxu0
      %v3796 = vadd.f32 %v3651, %v3795
      %v3797 = vpop.f32.mrf.mxu0
      %v3798 = vpop.f32.mrf.mxu0
      %v3799 = vadd.f32 %v3654, %v3798
      %v3800 = vpop.f32.mrf.mxu0
      %3801 = vmatprep.mubr.bf16.mxu0 0
      %3802 = vmatmul.mubr.bf16.gmra.mxu0 %v3168
      %v3803 = vpop.f32.mrf.mxu0
      %v3804 = vadd.f32 %v3659, %v3803
      %v3805 = vpop.f32.mrf.mxu0
      %v3806 = vpop.f32.mrf.mxu0
      %v3807 = vadd.f32 %v3662, %v3806
      %v3808 = vpop.f32.mrf.mxu0
      %3809 = vmatprep.mubr.bf16.mxu0 0
      %3810 = vmatmul.mubr.bf16.gmra.mxu0 %v3169
      %v3811 = vpop.f32.mrf.mxu0
      %v3812 = vadd.f32 %v3667, %v3811
      %v3813 = vpop.f32.mrf.mxu0
      %v3814 = vpop.f32.mrf.mxu0
      %v3815 = vadd.f32 %v3670, %v3814
      %v3816 = vpop.f32.mrf.mxu0
      %3817 = vmatprep.mubr.bf16.mxu0 0
      %3818 = vmatmul.mubr.bf16.gmra.mxu0 %v3170
      %v3819 = vpop.f32.mrf.mxu0
      %v3820 = vadd.f32 %v3675, %v3819
      %v3821 = vpop.f32.mrf.mxu0
      %v3822 = vpop.f32.mrf.mxu0
      %v3823 = vadd.f32 %v3678, %v3822
      %v3824 = vpop.f32.mrf.mxu0
      %3825 = vmatprep.mubr.bf16.mxu0 0
      %3826 = vmatmul.mubr.bf16.gmra.mxu0 %v3171
      %v3827 = vpop.f32.mrf.mxu0
      %v3828 = vadd.f32 %v3683, %v3827
      %v3829 = vpop.f32.mrf.mxu0
      %v3830 = vpop.f32.mrf.mxu0
      %v3831 = vadd.f32 %v3686, %v3830
      %v3832 = vpop.f32.mrf.mxu0
      %3833 = vmatprep.mubr.bf16.mxu0 0
      %3834 = vmatmul.mubr.bf16.gmra.mxu0 %v3172
      %v3835 = vpop.f32.mrf.mxu0
      %v3836 = vadd.f32 %v3691, %v3835
      %v3837 = vpop.f32.mrf.mxu0
      %v3838 = vpop.f32.mrf.mxu0
      %v3839 = vadd.f32 %v3694, %v3838
      %v3840 = vpop.f32.mrf.mxu0
      %3841 = vmatprep.mubr.bf16.mxu0 0
      %3842 = vmatmul.mubr.bf16.gmra.mxu0 %v3173
      %v3843 = vpop.f32.mrf.mxu0
      %v3844 = vadd.f32 %v3699, %v3843
      %v3845 = vpop.f32.mrf.mxu0
      %v3846 = vpop.f32.mrf.mxu0
      %v3847 = vadd.f32 %v3702, %v3846
      %v3848 = vpop.f32.mrf.mxu0
      %3849 = vdwg.mxu0
      %v3850 = vadd.f32 %v1786, %v3788
      %v3851 = vadd.f32 %v1787, %v3791
      %v3852 = vadd.f32 %v1788, %v3796
      %v3853 = vadd.f32 %v1789, %v3799
      %v3854 = vadd.f32 %v1790, %v3804
      %v3855 = vadd.f32 %v1791, %v3807
      %v3856 = vadd.f32 %v1792, %v3812
      %v3857 = vadd.f32 %v1793, %v3815
      %v3858 = vadd.f32 %v1794, %v3820
      %v3859 = vadd.f32 %v1795, %v3823
      %v3860 = vadd.f32 %v1796, %v3828
      %v3861 = vadd.f32 %v1797, %v3831
      %v3862 = vadd.f32 %v1798, %v3836
      %v3863 = vadd.f32 %v1799, %v3839
      %v3864 = vadd.f32 %v1800, %v3844
      %v3865 = vadd.f32 %v1801, %v3847
      %v3866 = vld [vmem:[%s757] sm:$0x1]
      %v3868 = vlaneseq
      %v3869 = vshrl.u32 %v3868, 7
      %v3870 = vsub.s32 0, %v3869
      %v3871 = vrot.slane %v3866, %v3870
      %v3873 = vadd.f32 %v3850, %v3871
      %v3874 = vadd.f32 %v3851, %v3871
      %v3875 = vadd.f32 %v3852, %v3871
      %v3876 = vadd.f32 %v3853, %v3871
      %v3877 = vadd.f32 %v3854, %v3871
      %v3878 = vadd.f32 %v3855, %v3871
      %v3879 = vadd.f32 %v3856, %v3871
      %v3880 = vadd.f32 %v3857, %v3871
      %v3881 = vadd.f32 %v3858, %v3871
      %v3882 = vadd.f32 %v3859, %v3871
      %v3883 = vadd.f32 %v3860, %v3871
      %v3884 = vadd.f32 %v3861, %v3871
      %v3885 = vadd.f32 %v3862, %v3871
      %v3886 = vadd.f32 %v3863, %v3871
      %v3887 = vadd.f32 %v3864, %v3871
      %v3888 = vadd.f32 %v3865, %v3871
      %v3889 = vld [vmem:[%s760] sm:$0x1]
      %v3890 = vld [vmem:[%s763] sm:$0x1]
      %3891 = vadd.xlane.f32.xlu0 %v3873
      %v3892 = vpop.xlane.xlu0 %3891
      %3893 = vadd.xlane.f32.xlu0 %v3874
      %v3894 = vpop.xlane.xlu0 %3893
      %3895 = vadd.xlane.f32.xlu0 %v3875
      %v3896 = vpop.xlane.xlu0 %3895
      %3897 = vadd.xlane.f32.xlu0 %v3876
      %v3898 = vpop.xlane.xlu0 %3897
      %3899 = vadd.xlane.f32.xlu0 %v3877
      %v3900 = vpop.xlane.xlu0 %3899
      %3901 = vadd.xlane.f32.xlu0 %v3878
      %v3902 = vpop.xlane.xlu0 %3901
      %3903 = vadd.xlane.f32.xlu0 %v3879
      %v3904 = vpop.xlane.xlu0 %3903
      %3905 = vadd.xlane.f32.xlu0 %v3880
      %v3906 = vpop.xlane.xlu0 %3905
      %3907 = vadd.xlane.f32.xlu0 %v3881
      %v3908 = vpop.xlane.xlu0 %3907
      %3909 = vadd.xlane.f32.xlu0 %v3882
      %v3910 = vpop.xlane.xlu0 %3909
      %3911 = vadd.xlane.f32.xlu0 %v3883
      %v3912 = vpop.xlane.xlu0 %3911
      %3913 = vadd.xlane.f32.xlu0 %v3884
      %v3914 = vpop.xlane.xlu0 %3913
      %3915 = vadd.xlane.f32.xlu0 %v3885
      %v3916 = vpop.xlane.xlu0 %3915
      %3917 = vadd.xlane.f32.xlu0 %v3886
      %v3918 = vpop.xlane.xlu0 %3917
      %3919 = vadd.xlane.f32.xlu0 %v3887
      %v3920 = vpop.xlane.xlu0 %3919
      %3921 = vadd.xlane.f32.xlu0 %v3888
      %v3922 = vpop.xlane.xlu0 %3921
      %v3923 = vmul.f32 %v3892, %v1852
      %v3924 = vmul.f32 %v3894, %v1852
      %v3925 = vmul.f32 %v3896, %v1852
      %v3926 = vmul.f32 %v3898, %v1852
      %v3927 = vmul.f32 %v3900, %v1852
      %v3928 = vmul.f32 %v3902, %v1852
      %v3929 = vmul.f32 %v3904, %v1852
      %v3930 = vmul.f32 %v3906, %v1852
      %v3931 = vmul.f32 %v3908, %v1852
      %v3932 = vmul.f32 %v3910, %v1852
      %v3933 = vmul.f32 %v3912, %v1852
      %v3934 = vmul.f32 %v3914, %v1852
      %v3935 = vmul.f32 %v3916, %v1852
      %v3936 = vmul.f32 %v3918, %v1852
      %v3937 = vmul.f32 %v3920, %v1852
      %v3938 = vmul.f32 %v3922, %v1852
      %v3939 = vsub.f32 %v3873, %v3923
      %v3940 = vsub.f32 %v3874, %v3924
      %v3941 = vsub.f32 %v3875, %v3925
      %v3942 = vsub.f32 %v3876, %v3926
      %v3943 = vsub.f32 %v3877, %v3927
      %v3944 = vsub.f32 %v3878, %v3928
      %v3945 = vsub.f32 %v3879, %v3929
      %v3946 = vsub.f32 %v3880, %v3930
      %v3947 = vsub.f32 %v3881, %v3931
      %v3948 = vsub.f32 %v3882, %v3932
      %v3949 = vsub.f32 %v3883, %v3933
      %v3950 = vsub.f32 %v3884, %v3934
      %v3951 = vsub.f32 %v3885, %v3935
      %v3952 = vsub.f32 %v3886, %v3936
      %v3953 = vsub.f32 %v3887, %v3937
      %v3954 = vsub.f32 %v3888, %v3938
      %v3955 = vmul.f32 %v3939, %v3939
      %v3956 = vmul.f32 %v3940, %v3940
      %v3957 = vmul.f32 %v3941, %v3941
      %v3958 = vmul.f32 %v3942, %v3942
      %v3959 = vmul.f32 %v3943, %v3943
      %v3960 = vmul.f32 %v3944, %v3944
      %v3961 = vmul.f32 %v3945, %v3945
      %v3962 = vmul.f32 %v3946, %v3946
      %v3963 = vmul.f32 %v3947, %v3947
      %v3964 = vmul.f32 %v3948, %v3948
      %v3965 = vmul.f32 %v3949, %v3949
      %v3966 = vmul.f32 %v3950, %v3950
      %v3967 = vmul.f32 %v3951, %v3951
      %v3968 = vmul.f32 %v3952, %v3952
      %v3969 = vmul.f32 %v3953, %v3953
      %v3970 = vmul.f32 %v3954, %v3954
      %3971 = vadd.xlane.f32.xlu0 %v3955
      %v3972 = vpop.xlane.xlu0 %3971
      %3973 = vadd.xlane.f32.xlu0 %v3956
      %v3974 = vpop.xlane.xlu0 %3973
      %3975 = vadd.xlane.f32.xlu0 %v3957
      %v3976 = vpop.xlane.xlu0 %3975
      %3977 = vadd.xlane.f32.xlu0 %v3958
      %v3978 = vpop.xlane.xlu0 %3977
      %3979 = vadd.xlane.f32.xlu0 %v3959
      %v3980 = vpop.xlane.xlu0 %3979
      %3981 = vadd.xlane.f32.xlu0 %v3960
      %v3982 = vpop.xlane.xlu0 %3981
      %3983 = vadd.xlane.f32.xlu0 %v3961
      %v3984 = vpop.xlane.xlu0 %3983
      %3985 = vadd.xlane.f32.xlu0 %v3962
      %v3986 = vpop.xlane.xlu0 %3985
      %3987 = vadd.xlane.f32.xlu0 %v3963
      %v3988 = vpop.xlane.xlu0 %3987
      %3989 = vadd.xlane.f32.xlu0 %v3964
      %v3990 = vpop.xlane.xlu0 %3989
      %3991 = vadd.xlane.f32.xlu0 %v3965
      %v3992 = vpop.xlane.xlu0 %3991
      %3993 = vadd.xlane.f32.xlu0 %v3966
      %v3994 = vpop.xlane.xlu0 %3993
      %3995 = vadd.xlane.f32.xlu0 %v3967
      %v3996 = vpop.xlane.xlu0 %3995
      %3997 = vadd.xlane.f32.xlu0 %v3968
      %v3998 = vpop.xlane.xlu0 %3997
      %3999 = vadd.xlane.f32.xlu0 %v3969
      %v4000 = vpop.xlane.xlu0 %3999
      %4001 = vadd.xlane.f32.xlu0 %v3970
      %v4002 = vpop.xlane.xlu0 %4001
      %v4003 = vmul.f32 %v3972, %v1852
      %v4004 = vmul.f32 %v3974, %v1852
      %v4005 = vmul.f32 %v3976, %v1852
      %v4006 = vmul.f32 %v3978, %v1852
      %v4007 = vmul.f32 %v3980, %v1852
      %v4008 = vmul.f32 %v3982, %v1852
      %v4009 = vmul.f32 %v3984, %v1852
      %v4010 = vmul.f32 %v3986, %v1852
      %v4011 = vmul.f32 %v3988, %v1852
      %v4012 = vmul.f32 %v3990, %v1852
      %v4013 = vmul.f32 %v3992, %v1852
      %v4014 = vmul.f32 %v3994, %v1852
      %v4015 = vmul.f32 %v3996, %v1852
      %v4016 = vmul.f32 %v3998, %v1852
      %v4017 = vmul.f32 %v4000, %v1852
      %v4018 = vmul.f32 %v4002, %v1852
      %v4019 = vadd.f32 %v4003, 1e-12
      %v4020 = vadd.f32 %v4004, 1e-12
      %v4021 = vadd.f32 %v4005, 1e-12
      %v4022 = vadd.f32 %v4006, 1e-12
      %v4023 = vadd.f32 %v4007, 1e-12
      %v4024 = vadd.f32 %v4008, 1e-12
      %v4025 = vadd.f32 %v4009, 1e-12
      %v4026 = vadd.f32 %v4010, 1e-12
      %v4027 = vadd.f32 %v4011, 1e-12
      %v4028 = vadd.f32 %v4012, 1e-12
      %v4029 = vadd.f32 %v4013, 1e-12
      %v4030 = vadd.f32 %v4014, 1e-12
      %v4031 = vadd.f32 %v4015, 1e-12
      %v4032 = vadd.f32 %v4016, 1e-12
      %v4033 = vadd.f32 %v4017, 1e-12
      %v4034 = vadd.f32 %v4018, 1e-12
      %v4035 = vrsqrt.pop %v4019
      %v4036 = vrsqrt.pop %v4020
      %v4037 = vrsqrt.pop %v4021
      %v4038 = vrsqrt.pop %v4022
      %v4039 = vrsqrt.pop %v4023
      %v4040 = vrsqrt.pop %v4024
      %v4041 = vrsqrt.pop %v4025
      %v4042 = vrsqrt.pop %v4026
      %v4043 = vrsqrt.pop %v4027
      %v4044 = vrsqrt.pop %v4028
      %v4045 = vrsqrt.pop %v4029
      %v4046 = vrsqrt.pop %v4030
      %v4047 = vrsqrt.pop %v4031
      %v4048 = vrsqrt.pop %v4032
      %v4049 = vrsqrt.pop %v4033
      %v4050 = vrsqrt.pop %v4034
      %v4051 = vmul.f32 %v3939, %v4035
      %v4052 = vmul.f32 %v3940, %v4036
      %v4053 = vmul.f32 %v3941, %v4037
      %v4054 = vmul.f32 %v3942, %v4038
      %v4055 = vmul.f32 %v3943, %v4039
      %v4056 = vmul.f32 %v3944, %v4040
      %v4057 = vmul.f32 %v3945, %v4041
      %v4058 = vmul.f32 %v3946, %v4042
      %v4059 = vmul.f32 %v3947, %v4043
      %v4060 = vmul.f32 %v3948, %v4044
      %v4061 = vmul.f32 %v3949, %v4045
      %v4062 = vmul.f32 %v3950, %v4046
      %v4063 = vmul.f32 %v3951, %v4047
      %v4064 = vmul.f32 %v3952, %v4048
      %v4065 = vmul.f32 %v3953, %v4049
      %v4066 = vmul.f32 %v3954, %v4050
      %v4068 = vlaneseq
      %v4069 = vshrl.u32 %v4068, 7
      %v4070 = vsub.s32 0, %v4069
      %v4071 = vrot.slane %v3889, %v4070
      %v4073 = vmul.f32 %v4051, %v4071
      %v4074 = vmul.f32 %v4052, %v4071
      %v4075 = vmul.f32 %v4053, %v4071
      %v4076 = vmul.f32 %v4054, %v4071
      %v4077 = vmul.f32 %v4055, %v4071
      %v4078 = vmul.f32 %v4056, %v4071
      %v4079 = vmul.f32 %v4057, %v4071
      %v4080 = vmul.f32 %v4058, %v4071
      %v4081 = vmul.f32 %v4059, %v4071
      %v4082 = vmul.f32 %v4060, %v4071
      %v4083 = vmul.f32 %v4061, %v4071
      %v4084 = vmul.f32 %v4062, %v4071
      %v4085 = vmul.f32 %v4063, %v4071
      %v4086 = vmul.f32 %v4064, %v4071
      %v4087 = vmul.f32 %v4065, %v4071
      %v4088 = vmul.f32 %v4066, %v4071
      %v4090 = vlaneseq
      %v4091 = vshrl.u32 %v4090, 7
      %v4092 = vsub.s32 0, %v4091
      %v4093 = vrot.slane %v3890, %v4092
      %v4095 = vadd.f32 %v4073, %v4093
      %v4096 = vadd.f32 %v4074, %v4093
      %v4097 = vadd.f32 %v4075, %v4093
      %v4098 = vadd.f32 %v4076, %v4093
      %v4099 = vadd.f32 %v4077, %v4093
      %v4100 = vadd.f32 %v4078, %v4093
      %v4101 = vadd.f32 %v4079, %v4093
      %v4102 = vadd.f32 %v4080, %v4093
      %v4103 = vadd.f32 %v4081, %v4093
      %v4104 = vadd.f32 %v4082, %v4093
      %v4105 = vadd.f32 %v4083, %v4093
      %v4106 = vadd.f32 %v4084, %v4093
      %v4107 = vadd.f32 %v4085, %v4093
      %v4108 = vadd.f32 %v4086, %v4093
      %v4109 = vadd.f32 %v4087, %v4093
      %v4110 = vadd.f32 %v4088, %v4093
      %v4111 = vld [vmem:[%s768] sm:$0xff]
      %v4112 = vld [vmem:[%s768 + $0x8] sm:$0xff]
      %v4113 = vld [vmem:[%s768 + $0x10] sm:$0xff]
      %v4114 = vld [vmem:[%s768 + $0x18] sm:$0xff]
      %v4115 = vld [vmem:[%s768 + $0x20] sm:$0xff]
      %v4116 = vld [vmem:[%s768 + $0x28] sm:$0xff]
      %v4117 = vld [vmem:[%s768 + $0x30] sm:$0xff]
      %v4118 = vld [vmem:[%s768 + $0x38] sm:$0xff]
      %v4119 = vld [vmem:[%s768 + $0x40] sm:$0xff]
      %v4120 = vld [vmem:[%s768 + $0x48] sm:$0xff]
      %v4121 = vld [vmem:[%s768 + $0x50] sm:$0xff]
      %v4122 = vld [vmem:[%s768 + $0x58] sm:$0xff]
      %v4123 = vld [vmem:[%s768 + $0x60] sm:$0xff]
      %v4124 = vld [vmem:[%s768 + $0x68] sm:$0xff]
      %v4125 = vld [vmem:[%s768 + $0x70] sm:$0xff]
      %v4126 = vld [vmem:[%s768 + $0x78] sm:$0xff]
      %v4127 = vld [vmem:[%s768 + $0x80] sm:$0xff]
      %v4128 = vld [vmem:[%s768 + $0x88] sm:$0xff]
      %v4129 = vld [vmem:[%s768 + $0x90] sm:$0xff]
      %v4130 = vld [vmem:[%s768 + $0x98] sm:$0xff]
      %v4131 = vld [vmem:[%s768 + $0xa0] sm:$0xff]
      %v4132 = vld [vmem:[%s768 + $0xa8] sm:$0xff]
      %v4133 = vld [vmem:[%s768 + $0xb0] sm:$0xff]
      %v4134 = vld [vmem:[%s768 + $0xb8] sm:$0xff]
      %v4135 = vld [vmem:[%s768 + $0xc0] sm:$0xff]
      %v4136 = vld [vmem:[%s768 + $0xc8] sm:$0xff]
      %v4137 = vld [vmem:[%s768 + $0xd0] sm:$0xff]
      %v4138 = vld [vmem:[%s768 + $0xd8] sm:$0xff]
      %v4139 = vld [vmem:[%s768 + $0xe0] sm:$0xff]
      %v4140 = vld [vmem:[%s768 + $0xe8] sm:$0xff]
      %v4141 = vld [vmem:[%s768 + $0xf0] sm:$0xff]
      %v4142 = vld [vmem:[%s768 + $0xf8] sm:$0xff]
      %v4143 = vpack.c.bf16 %v4096, %v4095
      %v4144 = vpack.c.bf16 %v4098, %v4097
      %v4145 = vpack.c.bf16 %v4100, %v4099
      %v4146 = vpack.c.bf16 %v4102, %v4101
      %v4147 = vpack.c.bf16 %v4104, %v4103
      %v4148 = vpack.c.bf16 %v4106, %v4105
      %v4149 = vpack.c.bf16 %v4108, %v4107
      %v4150 = vpack.c.bf16 %v4110, %v4109
      %v4151 = vld [vmem:[%s772] sm:$0xf]
      %v4153 = vlaneseq
      %v4154 = vshrl.u32 %v4153, 7
      %v4155 = vsub.s32 0, %v4154
      %v4156 = vrot.slane %v4151, %v4155
      %v4157 = vlaneseq
      %v4158 = vshrl.u32 %v4157, 7
      %v4159 = vsub.s32 1, %v4158
      %v4160 = vrot.slane %v4151, %v4159
      %v4161 = vlaneseq
      %v4162 = vshrl.u32 %v4161, 7
      %v4163 = vsub.s32 2, %v4162
      %v4164 = vrot.slane %v4151, %v4163
      %v4165 = vlaneseq
      %v4166 = vshrl.u32 %v4165, 7
      %v4167 = vsub.s32 3, %v4166
      %v4168 = vrot.slane %v4151, %v4167
      %v4205 = vunpack.c.l.b16 %v4111
      %v4206 = vunpack.c.h.b16 %v4111
      %v4207 = vunpack.c.l.b16 %v4112
      %v4208 = vunpack.c.h.b16 %v4112
      %v4209 = vunpack.c.l.b16 %v4113
      %v4210 = vunpack.c.h.b16 %v4113
      %v4211 = vunpack.c.l.b16 %v4114
      %v4212 = vunpack.c.h.b16 %v4114
      %v4213 = vunpack.c.l.b16 %v4115
      %v4214 = vunpack.c.h.b16 %v4115
      %v4215 = vunpack.c.l.b16 %v4116
      %v4216 = vunpack.c.h.b16 %v4116
      %v4217 = vunpack.c.l.b16 %v4117
      %v4218 = vunpack.c.h.b16 %v4117
      %v4219 = vunpack.c.l.b16 %v4118
      %v4220 = vunpack.c.h.b16 %v4118
      %v4221 = vunpack.c.l.b16 %v4119
      %v4222 = vunpack.c.h.b16 %v4119
      %v4223 = vunpack.c.l.b16 %v4120
      %v4224 = vunpack.c.h.b16 %v4120
      %v4225 = vunpack.c.l.b16 %v4121
      %v4226 = vunpack.c.h.b16 %v4121
      %v4227 = vunpack.c.l.b16 %v4122
      %v4228 = vunpack.c.h.b16 %v4122
      %v4229 = vunpack.c.l.b16 %v4123
      %v4230 = vunpack.c.h.b16 %v4123
      %v4231 = vunpack.c.l.b16 %v4124
      %v4232 = vunpack.c.h.b16 %v4124
      %v4233 = vunpack.c.l.b16 %v4125
      %v4234 = vunpack.c.h.b16 %v4125
      %v4235 = vunpack.c.l.b16 %v4126
      %v4236 = vunpack.c.h.b16 %v4126
      %v4237 = vunpack.c.l.b16 %v4127
      %v4238 = vunpack.c.h.b16 %v4127
      %v4239 = vunpack.c.l.b16 %v4128
      %v4240 = vunpack.c.h.b16 %v4128
      %v4241 = vunpack.c.l.b16 %v4129
      %v4242 = vunpack.c.h.b16 %v4129
      %v4243 = vunpack.c.l.b16 %v4130
      %v4244 = vunpack.c.h.b16 %v4130
      %v4245 = vunpack.c.l.b16 %v4131
      %v4246 = vunpack.c.h.b16 %v4131
      %v4247 = vunpack.c.l.b16 %v4132
      %v4248 = vunpack.c.h.b16 %v4132
      %v4249 = vunpack.c.l.b16 %v4133
      %v4250 = vunpack.c.h.b16 %v4133
      %v4251 = vunpack.c.l.b16 %v4134
      %v4252 = vunpack.c.h.b16 %v4134
      %v4253 = vunpack.c.l.b16 %v4135
      %v4254 = vunpack.c.h.b16 %v4135
      %v4255 = vunpack.c.l.b16 %v4136
      %v4256 = vunpack.c.h.b16 %v4136
      %v4257 = vunpack.c.l.b16 %v4137
      %v4258 = vunpack.c.h.b16 %v4137
      %v4259 = vunpack.c.l.b16 %v4138
      %v4260 = vunpack.c.h.b16 %v4138
      %v4261 = vunpack.c.l.b16 %v4139
      %v4262 = vunpack.c.h.b16 %v4139
      %v4263 = vunpack.c.l.b16 %v4140
      %v4264 = vunpack.c.h.b16 %v4140
      %v4265 = vunpack.c.l.b16 %v4141
      %v4266 = vunpack.c.h.b16 %v4141
      %v4267 = vunpack.c.l.b16 %v4142
      %v4268 = vunpack.c.h.b16 %v4142
      %v4269 = vpack.c.b16 %v4209, %v4205
      %v4270 = vpack.c.b16 %v4210, %v4206
      %v4271 = vpack.c.b16 %v4211, %v4207
      %v4272 = vpack.c.b16 %v4212, %v4208
      %v4273 = vpack.c.b16 %v4217, %v4213
      %v4274 = vpack.c.b16 %v4218, %v4214
      %v4275 = vpack.c.b16 %v4219, %v4215
      %v4276 = vpack.c.b16 %v4220, %v4216
      %v4277 = vpack.c.b16 %v4225, %v4221
      %v4278 = vpack.c.b16 %v4226, %v4222
      %v4279 = vpack.c.b16 %v4227, %v4223
      %v4280 = vpack.c.b16 %v4228, %v4224
      %v4281 = vpack.c.b16 %v4233, %v4229
      %v4282 = vpack.c.b16 %v4234, %v4230
      %v4283 = vpack.c.b16 %v4235, %v4231
      %v4284 = vpack.c.b16 %v4236, %v4232
      %v4285 = vpack.c.b16 %v4241, %v4237
      %v4286 = vpack.c.b16 %v4242, %v4238
      %v4287 = vpack.c.b16 %v4243, %v4239
      %v4288 = vpack.c.b16 %v4244, %v4240
      %v4289 = vpack.c.b16 %v4249, %v4245
      %v4290 = vpack.c.b16 %v4250, %v4246
      %v4291 = vpack.c.b16 %v4251, %v4247
      %v4292 = vpack.c.b16 %v4252, %v4248
      %v4293 = vpack.c.b16 %v4257, %v4253
      %v4294 = vpack.c.b16 %v4258, %v4254
      %v4295 = vpack.c.b16 %v4259, %v4255
      %v4296 = vpack.c.b16 %v4260, %v4256
      %v4297 = vpack.c.b16 %v4265, %v4261
      %v4298 = vpack.c.b16 %v4266, %v4262
      %v4299 = vpack.c.b16 %v4267, %v4263
      %v4300 = vpack.c.b16 %v4268, %v4264
      %4333 = vmatprep.subr.bf16.mxu0 %v4298
      %4334 = vmatpush1.bf16.msra.mxu0 %v4297
      %4335 = vmatprep.subr.bf16.mxu0 %v4294
      %4336 = vmatpush1.bf16.msra.mxu0 %v4293
      %4337 = vmatprep.subr.bf16.mxu0 %v4290
      %4338 = vmatpush1.bf16.msra.mxu0 %v4289
      %4339 = vmatprep.subr.bf16.mxu0 %v4286
      %4340 = vmatpush1.bf16.msra.mxu0 %v4285
      %4341 = vmatprep.subr.bf16.mxu0 %v4282
      %4342 = vmatpush1.bf16.msra.mxu0 %v4281
      %4343 = vmatprep.subr.bf16.mxu0 %v4278
      %4344 = vmatpush1.bf16.msra.mxu0 %v4277
      %4345 = vmatprep.subr.bf16.mxu0 %v4274
      %4346 = vmatpush1.bf16.msra.mxu0 %v4273
      %4347 = vmatprep.subr.bf16.mxu0 %v4270
      %4348 = vmatpush1.bf16.msra.mxu0 %v4269
      %4349 = vmatprep.subr.bf16.mxu0 0
      %4350 = vmatpush2.bf16.msra.mxu0 0
      %4351 = vmatprep.subr.bf16.mxu0 0
      %4352 = vmatpush2.bf16.msra.mxu0 0
      %4353 = vmatprep.subr.bf16.mxu0 0
      %4354 = vmatpush2.bf16.msra.mxu0 0
      %4355 = vmatprep.subr.bf16.mxu0 0
      %4356 = vmatpush2.bf16.msra.mxu0 0
      %4357 = vmatprep.subr.bf16.mxu0 0
      %4358 = vmatpush2.bf16.msra.mxu0 0
      %4359 = vmatprep.subr.bf16.mxu0 0
      %4360 = vmatpush2.bf16.msra.mxu0 0
      %4361 = vmatprep.subr.bf16.mxu0 0
      %4362 = vmatpush2.bf16.msra.mxu0 0
      %4363 = vmatprep.subr.bf16.mxu0 0
      %4364 = vmatpush2.bf16.msra.mxu0 0
      %4365 = vmatprep.mubr.bf16.mxu0 0
      %4366 = vmatmul.mubr.bf16.gmra.mxu0 %v4143
      %v4367 = vpop.f32.mrf.mxu0
      %v4368 = vadd.f32 %v4156, %v4367
      %v4369 = vpop.f32.mrf.mxu0
      %v4370 = vadd.f32 %v4160, %v4369
      %v4371 = vpop.f32.mrf.mxu0
      %v4372 = vadd.f32 %v4156, %v4371
      %v4373 = vpop.f32.mrf.mxu0
      %v4374 = vadd.f32 %v4160, %v4373
      %4375 = vmatprep.mubr.bf16.mxu0 0
      %4376 = vmatmul.mubr.bf16.gmra.mxu0 %v4144
      %v4377 = vpop.f32.mrf.mxu0
      %v4378 = vadd.f32 %v4156, %v4377
      %v4379 = vpop.f32.mrf.mxu0
      %v4380 = vadd.f32 %v4160, %v4379
      %v4381 = vpop.f32.mrf.mxu0
      %v4382 = vadd.f32 %v4156, %v4381
      %v4383 = vpop.f32.mrf.mxu0
      %v4384 = vadd.f32 %v4160, %v4383
      %4385 = vmatprep.mubr.bf16.mxu0 0
      %4386 = vmatmul.mubr.bf16.gmra.mxu0 %v4145
      %v4387 = vpop.f32.mrf.mxu0
      %v4388 = vadd.f32 %v4156, %v4387
      %v4389 = vpop.f32.mrf.mxu0
      %v4390 = vadd.f32 %v4160, %v4389
      %v4391 = vpop.f32.mrf.mxu0
      %v4392 = vadd.f32 %v4156, %v4391
      %v4393 = vpop.f32.mrf.mxu0
      %v4394 = vadd.f32 %v4160, %v4393
      %4395 = vmatprep.mubr.bf16.mxu0 0
      %4396 = vmatmul.mubr.bf16.gmra.mxu0 %v4146
      %v4397 = vpop.f32.mrf.mxu0
      %v4398 = vadd.f32 %v4156, %v4397
      %v4399 = vpop.f32.mrf.mxu0
      %v4400 = vadd.f32 %v4160, %v4399
      %v4401 = vpop.f32.mrf.mxu0
      %v4402 = vadd.f32 %v4156, %v4401
      %v4403 = vpop.f32.mrf.mxu0
      %v4404 = vadd.f32 %v4160, %v4403
      %4405 = vmatprep.mubr.bf16.mxu0 0
      %4406 = vmatmul.mubr.bf16.gmra.mxu0 %v4147
      %v4407 = vpop.f32.mrf.mxu0
      %v4408 = vadd.f32 %v4156, %v4407
      %v4409 = vpop.f32.mrf.mxu0
      %v4410 = vadd.f32 %v4160, %v4409
      %v4411 = vpop.f32.mrf.mxu0
      %v4412 = vadd.f32 %v4156, %v4411
      %v4413 = vpop.f32.mrf.mxu0
      %v4414 = vadd.f32 %v4160, %v4413
      %4415 = vmatprep.mubr.bf16.mxu0 0
      %4416 = vmatmul.mubr.bf16.gmra.mxu0 %v4148
      %v4417 = vpop.f32.mrf.mxu0
      %v4418 = vadd.f32 %v4156, %v4417
      %v4419 = vpop.f32.mrf.mxu0
      %v4420 = vadd.f32 %v4160, %v4419
      %v4421 = vpop.f32.mrf.mxu0
      %v4422 = vadd.f32 %v4156, %v4421
      %v4423 = vpop.f32.mrf.mxu0
      %v4424 = vadd.f32 %v4160, %v4423
      %4425 = vmatprep.mubr.bf16.mxu0 0
      %4426 = vmatmul.mubr.bf16.gmra.mxu0 %v4149
      %v4427 = vpop.f32.mrf.mxu0
      %v4428 = vadd.f32 %v4156, %v4427
      %v4429 = vpop.f32.mrf.mxu0
      %v4430 = vadd.f32 %v4160, %v4429
      %v4431 = vpop.f32.mrf.mxu0
      %v4432 = vadd.f32 %v4156, %v4431
      %v4433 = vpop.f32.mrf.mxu0
      %v4434 = vadd.f32 %v4160, %v4433
      %4435 = vmatprep.mubr.bf16.mxu0 0
      %4436 = vmatmul.mubr.bf16.gmra.mxu0 %v4150
      %v4437 = vpop.f32.mrf.mxu0
      %v4438 = vadd.f32 %v4156, %v4437
      %v4439 = vpop.f32.mrf.mxu0
      %v4440 = vadd.f32 %v4160, %v4439
      %v4441 = vpop.f32.mrf.mxu0
      %v4442 = vadd.f32 %v4156, %v4441
      %v4443 = vpop.f32.mrf.mxu0
      %v4444 = vadd.f32 %v4160, %v4443
      %4445 = vdwg.mxu0
      %4446 = vmatprep.subr.bf16.mxu0 %v4300
      %4447 = vmatpush1.bf16.msra.mxu0 %v4299
      %4448 = vmatprep.subr.bf16.mxu0 %v4296
      %4449 = vmatpush1.bf16.msra.mxu0 %v4295
      %4450 = vmatprep.subr.bf16.mxu0 %v4292
      %4451 = vmatpush1.bf16.msra.mxu0 %v4291
      %4452 = vmatprep.subr.bf16.mxu0 %v4288
      %4453 = vmatpush1.bf16.msra.mxu0 %v4287
      %4454 = vmatprep.subr.bf16.mxu0 %v4284
      %4455 = vmatpush1.bf16.msra.mxu0 %v4283
      %4456 = vmatprep.subr.bf16.mxu0 %v4280
      %4457 = vmatpush1.bf16.msra.mxu0 %v4279
      %4458 = vmatprep.subr.bf16.mxu0 %v4276
      %4459 = vmatpush1.bf16.msra.mxu0 %v4275
      %4460 = vmatprep.subr.bf16.mxu0 %v4272
      %4461 = vmatpush1.bf16.msra.mxu0 %v4271
      %4462 = vmatprep.subr.bf16.mxu0 0
      %4463 = vmatpush2.bf16.msra.mxu0 0
      %4464 = vmatprep.subr.bf16.mxu0 0
      %4465 = vmatpush2.bf16.msra.mxu0 0
      %4466 = vmatprep.subr.bf16.mxu0 0
      %4467 = vmatpush2.bf16.msra.mxu0 0
      %4468 = vmatprep.subr.bf16.mxu0 0
      %4469 = vmatpush2.bf16.msra.mxu0 0
      %4470 = vmatprep.subr.bf16.mxu0 0
      %4471 = vmatpush2.bf16.msra.mxu0 0
      %4472 = vmatprep.subr.bf16.mxu0 0
      %4473 = vmatpush2.bf16.msra.mxu0 0
      %4474 = vmatprep.subr.bf16.mxu0 0
      %4475 = vmatpush2.bf16.msra.mxu0 0
      %4476 = vmatprep.subr.bf16.mxu0 0
      %4477 = vmatpush2.bf16.msra.mxu0 0
      %4478 = vmatprep.mubr.bf16.mxu0 0
      %4479 = vmatmul.mubr.bf16.gmra.mxu0 %v4143
      %v4480 = vpop.f32.mrf.mxu0
      %v4481 = vadd.f32 %v4164, %v4480
      %v4482 = vpop.f32.mrf.mxu0
      %v4483 = vadd.f32 %v4168, %v4482
      %v4484 = vpop.f32.mrf.mxu0
      %v4485 = vadd.f32 %v4164, %v4484
      %v4486 = vpop.f32.mrf.mxu0
      %v4487 = vadd.f32 %v4168, %v4486
      %4488 = vmatprep.mubr.bf16.mxu0 0
      %4489 = vmatmul.mubr.bf16.gmra.mxu0 %v4144
      %v4490 = vpop.f32.mrf.mxu0
      %v4491 = vadd.f32 %v4164, %v4490
      %v4492 = vpop.f32.mrf.mxu0
      %v4493 = vadd.f32 %v4168, %v4492
      %v4494 = vpop.f32.mrf.mxu0
      %v4495 = vadd.f32 %v4164, %v4494
      %v4496 = vpop.f32.mrf.mxu0
      %v4497 = vadd.f32 %v4168, %v4496
      %4498 = vmatprep.mubr.bf16.mxu0 0
      %4499 = vmatmul.mubr.bf16.gmra.mxu0 %v4145
      %v4500 = vpop.f32.mrf.mxu0
      %v4501 = vadd.f32 %v4164, %v4500
      %v4502 = vpop.f32.mrf.mxu0
      %v4503 = vadd.f32 %v4168, %v4502
      %v4504 = vpop.f32.mrf.mxu0
      %v4505 = vadd.f32 %v4164, %v4504
      %v4506 = vpop.f32.mrf.mxu0
      %v4507 = vadd.f32 %v4168, %v4506
      %4508 = vmatprep.mubr.bf16.mxu0 0
      %4509 = vmatmul.mubr.bf16.gmra.mxu0 %v4146
      %v4510 = vpop.f32.mrf.mxu0
      %v4511 = vadd.f32 %v4164, %v4510
      %v4512 = vpop.f32.mrf.mxu0
      %v4513 = vadd.f32 %v4168, %v4512
      %v4514 = vpop.f32.mrf.mxu0
      %v4515 = vadd.f32 %v4164, %v4514
      %v4516 = vpop.f32.mrf.mxu0
      %v4517 = vadd.f32 %v4168, %v4516
      %4518 = vmatprep.mubr.bf16.mxu0 0
      %4519 = vmatmul.mubr.bf16.gmra.mxu0 %v4147
      %v4520 = vpop.f32.mrf.mxu0
      %v4521 = vadd.f32 %v4164, %v4520
      %v4522 = vpop.f32.mrf.mxu0
      %v4523 = vadd.f32 %v4168, %v4522
      %v4524 = vpop.f32.mrf.mxu0
      %v4525 = vadd.f32 %v4164, %v4524
      %v4526 = vpop.f32.mrf.mxu0
      %v4527 = vadd.f32 %v4168, %v4526
      %4528 = vmatprep.mubr.bf16.mxu0 0
      %4529 = vmatmul.mubr.bf16.gmra.mxu0 %v4148
      %v4530 = vpop.f32.mrf.mxu0
      %v4531 = vadd.f32 %v4164, %v4530
      %v4532 = vpop.f32.mrf.mxu0
      %v4533 = vadd.f32 %v4168, %v4532
      %v4534 = vpop.f32.mrf.mxu0
      %v4535 = vadd.f32 %v4164, %v4534
      %v4536 = vpop.f32.mrf.mxu0
      %v4537 = vadd.f32 %v4168, %v4536
      %4538 = vmatprep.mubr.bf16.mxu0 0
      %4539 = vmatmul.mubr.bf16.gmra.mxu0 %v4149
      %v4540 = vpop.f32.mrf.mxu0
      %v4541 = vadd.f32 %v4164, %v4540
      %v4542 = vpop.f32.mrf.mxu0
      %v4543 = vadd.f32 %v4168, %v4542
      %v4544 = vpop.f32.mrf.mxu0
      %v4545 = vadd.f32 %v4164, %v4544
      %v4546 = vpop.f32.mrf.mxu0
      %v4547 = vadd.f32 %v4168, %v4546
      %4548 = vmatprep.mubr.bf16.mxu0 0
      %4549 = vmatmul.mubr.bf16.gmra.mxu0 %v4150
      %v4550 = vpop.f32.mrf.mxu0
      %v4551 = vadd.f32 %v4164, %v4550
      %v4552 = vpop.f32.mrf.mxu0
      %v4553 = vadd.f32 %v4168, %v4552
      %v4554 = vpop.f32.mrf.mxu0
      %v4555 = vadd.f32 %v4164, %v4554
      %v4556 = vpop.f32.mrf.mxu0
      %v4557 = vadd.f32 %v4168, %v4556
      %4558 = vdwg.mxu0
      %v4559 = vmul.f32 %v4368, 0.5
      %v4560 = vmul.f32 %v4370, 0.5
      %v4561 = vmul.f32 %v4481, 0.5
      %v4562 = vmul.f32 %v4483, 0.5
      %v4563 = vmul.f32 %v4372, 0.5
      %v4564 = vmul.f32 %v4374, 0.5
      %v4565 = vmul.f32 %v4485, 0.5
      %v4566 = vmul.f32 %v4487, 0.5
      %v4567 = vmul.f32 %v4378, 0.5
      %v4568 = vmul.f32 %v4380, 0.5
      %v4569 = vmul.f32 %v4491, 0.5
      %v4570 = vmul.f32 %v4493, 0.5
      %v4571 = vmul.f32 %v4382, 0.5
      %v4572 = vmul.f32 %v4384, 0.5
      %v4573 = vmul.f32 %v4495, 0.5
      %v4574 = vmul.f32 %v4497, 0.5
      %v4575 = vmul.f32 %v4388, 0.5
      %v4576 = vmul.f32 %v4390, 0.5
      %v4577 = vmul.f32 %v4501, 0.5
      %v4578 = vmul.f32 %v4503, 0.5
      %v4579 = vmul.f32 %v4392, 0.5
      %v4580 = vmul.f32 %v4394, 0.5
      %v4581 = vmul.f32 %v4505, 0.5
      %v4582 = vmul.f32 %v4507, 0.5
      %v4583 = vmul.f32 %v4398, 0.5
      %v4584 = vmul.f32 %v4400, 0.5
      %v4585 = vmul.f32 %v4511, 0.5
      %v4586 = vmul.f32 %v4513, 0.5
      %v4587 = vmul.f32 %v4402, 0.5
      %v4588 = vmul.f32 %v4404, 0.5
      %v4589 = vmul.f32 %v4515, 0.5
      %v4590 = vmul.f32 %v4517, 0.5
      %v4591 = vmul.f32 %v4408, 0.5
      %v4592 = vmul.f32 %v4410, 0.5
      %v4593 = vmul.f32 %v4521, 0.5
      %v4594 = vmul.f32 %v4523, 0.5
      %v4595 = vmul.f32 %v4412, 0.5
      %v4596 = vmul.f32 %v4414, 0.5
      %v4597 = vmul.f32 %v4525, 0.5
      %v4598 = vmul.f32 %v4527, 0.5
      %v4599 = vmul.f32 %v4418, 0.5
      %v4600 = vmul.f32 %v4420, 0.5
      %v4601 = vmul.f32 %v4531, 0.5
      %v4602 = vmul.f32 %v4533, 0.5
      %v4603 = vmul.f32 %v4422, 0.5
      %v4604 = vmul.f32 %v4424, 0.5
      %v4605 = vmul.f32 %v4535, 0.5
      %v4606 = vmul.f32 %v4537, 0.5
      %v4607 = vmul.f32 %v4428, 0.5
      %v4608 = vmul.f32 %v4430, 0.5
      %v4609 = vmul.f32 %v4541, 0.5
      %v4610 = vmul.f32 %v4543, 0.5
      %v4611 = vmul.f32 %v4432, 0.5
      %v4612 = vmul.f32 %v4434, 0.5
      %v4613 = vmul.f32 %v4545, 0.5
      %v4614 = vmul.f32 %v4547, 0.5
      %v4615 = vmul.f32 %v4438, 0.5
      %v4616 = vmul.f32 %v4440, 0.5
      %v4617 = vmul.f32 %v4551, 0.5
      %v4618 = vmul.f32 %v4553, 0.5
      %v4619 = vmul.f32 %v4442, 0.5
      %v4620 = vmul.f32 %v4444, 0.5
      %v4621 = vmul.f32 %v4555, 0.5
      %v4622 = vmul.f32 %v4557, 0.5
      %v4623 = vmul.f32 %v4368, 0.044715
      %v4624 = vmul.f32 %v4370, 0.044715
      %v4625 = vmul.f32 %v4481, 0.044715
      %v4626 = vmul.f32 %v4483, 0.044715
      %v4627 = vmul.f32 %v4372, 0.044715
      %v4628 = vmul.f32 %v4374, 0.044715
      %v4629 = vmul.f32 %v4485, 0.044715
      %v4630 = vmul.f32 %v4487, 0.044715
      %v4631 = vmul.f32 %v4378, 0.044715
      %v4632 = vmul.f32 %v4380, 0.044715
      %v4633 = vmul.f32 %v4491, 0.044715
      %v4634 = vmul.f32 %v4493, 0.044715
      %v4635 = vmul.f32 %v4382, 0.044715
      %v4636 = vmul.f32 %v4384, 0.044715
      %v4637 = vmul.f32 %v4495, 0.044715
      %v4638 = vmul.f32 %v4497, 0.044715
      %v4639 = vmul.f32 %v4388, 0.044715
      %v4640 = vmul.f32 %v4390, 0.044715
      %v4641 = vmul.f32 %v4501, 0.044715
      %v4642 = vmul.f32 %v4503, 0.044715
      %v4643 = vmul.f32 %v4392, 0.044715
      %v4644 = vmul.f32 %v4394, 0.044715
      %v4645 = vmul.f32 %v4505, 0.044715
      %v4646 = vmul.f32 %v4507, 0.044715
      %v4647 = vmul.f32 %v4398, 0.044715
      %v4648 = vmul.f32 %v4400, 0.044715
      %v4649 = vmul.f32 %v4511, 0.044715
      %v4650 = vmul.f32 %v4513, 0.044715
      %v4651 = vmul.f32 %v4402, 0.044715
      %v4652 = vmul.f32 %v4404, 0.044715
      %v4653 = vmul.f32 %v4515, 0.044715
      %v4654 = vmul.f32 %v4517, 0.044715
      %v4655 = vmul.f32 %v4408, 0.044715
      %v4656 = vmul.f32 %v4410, 0.044715
      %v4657 = vmul.f32 %v4521, 0.044715
      %v4658 = vmul.f32 %v4523, 0.044715
      %v4659 = vmul.f32 %v4412, 0.044715
      %v4660 = vmul.f32 %v4414, 0.044715
      %v4661 = vmul.f32 %v4525, 0.044715
      %v4662 = vmul.f32 %v4527, 0.044715
      %v4663 = vmul.f32 %v4418, 0.044715
      %v4664 = vmul.f32 %v4420, 0.044715
      %v4665 = vmul.f32 %v4531, 0.044715
      %v4666 = vmul.f32 %v4533, 0.044715
      %v4667 = vmul.f32 %v4422, 0.044715
      %v4668 = vmul.f32 %v4424, 0.044715
      %v4669 = vmul.f32 %v4535, 0.044715
      %v4670 = vmul.f32 %v4537, 0.044715
      %v4671 = vmul.f32 %v4428, 0.044715
      %v4672 = vmul.f32 %v4430, 0.044715
      %v4673 = vmul.f32 %v4541, 0.044715
      %v4674 = vmul.f32 %v4543, 0.044715
      %v4675 = vmul.f32 %v4432, 0.044715
      %v4676 = vmul.f32 %v4434, 0.044715
      %v4677 = vmul.f32 %v4545, 0.044715
      %v4678 = vmul.f32 %v4547, 0.044715
      %v4679 = vmul.f32 %v4438, 0.044715
      %v4680 = vmul.f32 %v4440, 0.044715
      %v4681 = vmul.f32 %v4551, 0.044715
      %v4682 = vmul.f32 %v4553, 0.044715
      %v4683 = vmul.f32 %v4442, 0.044715
      %v4684 = vmul.f32 %v4444, 0.044715
      %v4685 = vmul.f32 %v4555, 0.044715
      %v4686 = vmul.f32 %v4557, 0.044715
      %v4687 = vmul.f32 %v4623, %v4368
      %v4688 = vmul.f32 %v4624, %v4370
      %v4689 = vmul.f32 %v4625, %v4481
      %v4690 = vmul.f32 %v4626, %v4483
      %v4691 = vmul.f32 %v4627, %v4372
      %v4692 = vmul.f32 %v4628, %v4374
      %v4693 = vmul.f32 %v4629, %v4485
      %v4694 = vmul.f32 %v4630, %v4487
      %v4695 = vmul.f32 %v4631, %v4378
      %v4696 = vmul.f32 %v4632, %v4380
      %v4697 = vmul.f32 %v4633, %v4491
      %v4698 = vmul.f32 %v4634, %v4493
      %v4699 = vmul.f32 %v4635, %v4382
      %v4700 = vmul.f32 %v4636, %v4384
      %v4701 = vmul.f32 %v4637, %v4495
      %v4702 = vmul.f32 %v4638, %v4497
      %v4703 = vmul.f32 %v4639, %v4388
      %v4704 = vmul.f32 %v4640, %v4390
      %v4705 = vmul.f32 %v4641, %v4501
      %v4706 = vmul.f32 %v4642, %v4503
      %v4707 = vmul.f32 %v4643, %v4392
      %v4708 = vmul.f32 %v4644, %v4394
      %v4709 = vmul.f32 %v4645, %v4505
      %v4710 = vmul.f32 %v4646, %v4507
      %v4711 = vmul.f32 %v4647, %v4398
      %v4712 = vmul.f32 %v4648, %v4400
      %v4713 = vmul.f32 %v4649, %v4511
      %v4714 = vmul.f32 %v4650, %v4513
      %v4715 = vmul.f32 %v4651, %v4402
      %v4716 = vmul.f32 %v4652, %v4404
      %v4717 = vmul.f32 %v4653, %v4515
      %v4718 = vmul.f32 %v4654, %v4517
      %v4719 = vmul.f32 %v4655, %v4408
      %v4720 = vmul.f32 %v4656, %v4410
      %v4721 = vmul.f32 %v4657, %v4521
      %v4722 = vmul.f32 %v4658, %v4523
      %v4723 = vmul.f32 %v4659, %v4412
      %v4724 = vmul.f32 %v4660, %v4414
      %v4725 = vmul.f32 %v4661, %v4525
      %v4726 = vmul.f32 %v4662, %v4527
      %v4727 = vmul.f32 %v4663, %v4418
      %v4728 = vmul.f32 %v4664, %v4420
      %v4729 = vmul.f32 %v4665, %v4531
      %v4730 = vmul.f32 %v4666, %v4533
      %v4731 = vmul.f32 %v4667, %v4422
      %v4732 = vmul.f32 %v4668, %v4424
      %v4733 = vmul.f32 %v4669, %v4535
      %v4734 = vmul.f32 %v4670, %v4537
      %v4735 = vmul.f32 %v4671, %v4428
      %v4736 = vmul.f32 %v4672, %v4430
      %v4737 = vmul.f32 %v4673, %v4541
      %v4738 = vmul.f32 %v4674, %v4543
      %v4739 = vmul.f32 %v4675, %v4432
      %v4740 = vmul.f32 %v4676, %v4434
      %v4741 = vmul.f32 %v4677, %v4545
      %v4742 = vmul.f32 %v4678, %v4547
      %v4743 = vmul.f32 %v4679, %v4438
      %v4744 = vmul.f32 %v4680, %v4440
      %v4745 = vmul.f32 %v4681, %v4551
      %v4746 = vmul.f32 %v4682, %v4553
      %v4747 = vmul.f32 %v4683, %v4442
      %v4748 = vmul.f32 %v4684, %v4444
      %v4749 = vmul.f32 %v4685, %v4555
      %v4750 = vmul.f32 %v4686, %v4557
      %v4751 = vmul.f32 %v4687, %v4368
      %v4752 = vmul.f32 %v4688, %v4370
      %v4753 = vmul.f32 %v4689, %v4481
      %v4754 = vmul.f32 %v4690, %v4483
      %v4755 = vmul.f32 %v4691, %v4372
      %v4756 = vmul.f32 %v4692, %v4374
      %v4757 = vmul.f32 %v4693, %v4485
      %v4758 = vmul.f32 %v4694, %v4487
      %v4759 = vmul.f32 %v4695, %v4378
      %v4760 = vmul.f32 %v4696, %v4380
      %v4761 = vmul.f32 %v4697, %v4491
      %v4762 = vmul.f32 %v4698, %v4493
      %v4763 = vmul.f32 %v4699, %v4382
      %v4764 = vmul.f32 %v4700, %v4384
      %v4765 = vmul.f32 %v4701, %v4495
      %v4766 = vmul.f32 %v4702, %v4497
      %v4767 = vmul.f32 %v4703, %v4388
      %v4768 = vmul.f32 %v4704, %v4390
      %v4769 = vmul.f32 %v4705, %v4501
      %v4770 = vmul.f32 %v4706, %v4503
      %v4771 = vmul.f32 %v4707, %v4392
      %v4772 = vmul.f32 %v4708, %v4394
      %v4773 = vmul.f32 %v4709, %v4505
      %v4774 = vmul.f32 %v4710, %v4507
      %v4775 = vmul.f32 %v4711, %v4398
      %v4776 = vmul.f32 %v4712, %v4400
      %v4777 = vmul.f32 %v4713, %v4511
      %v4778 = vmul.f32 %v4714, %v4513
      %v4779 = vmul.f32 %v4715, %v4402
      %v4780 = vmul.f32 %v4716, %v4404
      %v4781 = vmul.f32 %v4717, %v4515
      %v4782 = vmul.f32 %v4718, %v4517
      %v4783 = vmul.f32 %v4719, %v4408
      %v4784 = vmul.f32 %v4720, %v4410
      %v4785 = vmul.f32 %v4721, %v4521
      %v4786 = vmul.f32 %v4722, %v4523
      %v4787 = vmul.f32 %v4723, %v4412
      %v4788 = vmul.f32 %v4724, %v4414
      %v4789 = vmul.f32 %v4725, %v4525
      %v4790 = vmul.f32 %v4726, %v4527
      %v4791 = vmul.f32 %v4727, %v4418
      %v4792 = vmul.f32 %v4728, %v4420
      %v4793 = vmul.f32 %v4729, %v4531
      %v4794 = vmul.f32 %v4730, %v4533
      %v4795 = vmul.f32 %v4731, %v4422
      %v4796 = vmul.f32 %v4732, %v4424
      %v4797 = vmul.f32 %v4733, %v4535
      %v4798 = vmul.f32 %v4734, %v4537
      %v4799 = vmul.f32 %v4735, %v4428
      %v4800 = vmul.f32 %v4736, %v4430
      %v4801 = vmul.f32 %v4737, %v4541
      %v4802 = vmul.f32 %v4738, %v4543
      %v4803 = vmul.f32 %v4739, %v4432
      %v4804 = vmul.f32 %v4740, %v4434
      %v4805 = vmul.f32 %v4741, %v4545
      %v4806 = vmul.f32 %v4742, %v4547
      %v4807 = vmul.f32 %v4743, %v4438
      %v4808 = vmul.f32 %v4744, %v4440
      %v4809 = vmul.f32 %v4745, %v4551
      %v4810 = vmul.f32 %v4746, %v4553
      %v4811 = vmul.f32 %v4747, %v4442
      %v4812 = vmul.f32 %v4748, %v4444
      %v4813 = vmul.f32 %v4749, %v4555
      %v4814 = vmul.f32 %v4750, %v4557
      %v4815 = vadd.f32 %v4368, %v4751
      %v4816 = vadd.f32 %v4370, %v4752
      %v4817 = vadd.f32 %v4481, %v4753
      %v4818 = vadd.f32 %v4483, %v4754
      %v4819 = vadd.f32 %v4372, %v4755
      %v4820 = vadd.f32 %v4374, %v4756
      %v4821 = vadd.f32 %v4485, %v4757
      %v4822 = vadd.f32 %v4487, %v4758
      %v4823 = vadd.f32 %v4378, %v4759
      %v4824 = vadd.f32 %v4380, %v4760
      %v4825 = vadd.f32 %v4491, %v4761
      %v4826 = vadd.f32 %v4493, %v4762
      %v4827 = vadd.f32 %v4382, %v4763
      %v4828 = vadd.f32 %v4384, %v4764
      %v4829 = vadd.f32 %v4495, %v4765
      %v4830 = vadd.f32 %v4497, %v4766
      %v4831 = vadd.f32 %v4388, %v4767
      %v4832 = vadd.f32 %v4390, %v4768
      %v4833 = vadd.f32 %v4501, %v4769
      %v4834 = vadd.f32 %v4503, %v4770
      %v4835 = vadd.f32 %v4392, %v4771
      %v4836 = vadd.f32 %v4394, %v4772
      %v4837 = vadd.f32 %v4505, %v4773
      %v4838 = vadd.f32 %v4507, %v4774
      %v4839 = vadd.f32 %v4398, %v4775
      %v4840 = vadd.f32 %v4400, %v4776
      %v4841 = vadd.f32 %v4511, %v4777
      %v4842 = vadd.f32 %v4513, %v4778
      %v4843 = vadd.f32 %v4402, %v4779
      %v4844 = vadd.f32 %v4404, %v4780
      %v4845 = vadd.f32 %v4515, %v4781
      %v4846 = vadd.f32 %v4517, %v4782
      %v4847 = vadd.f32 %v4408, %v4783
      %v4848 = vadd.f32 %v4410, %v4784
      %v4849 = vadd.f32 %v4521, %v4785
      %v4850 = vadd.f32 %v4523, %v4786
      %v4851 = vadd.f32 %v4412, %v4787
      %v4852 = vadd.f32 %v4414, %v4788
      %v4853 = vadd.f32 %v4525, %v4789
      %v4854 = vadd.f32 %v4527, %v4790
      %v4855 = vadd.f32 %v4418, %v4791
      %v4856 = vadd.f32 %v4420, %v4792
      %v4857 = vadd.f32 %v4531, %v4793
      %v4858 = vadd.f32 %v4533, %v4794
      %v4859 = vadd.f32 %v4422, %v4795
      %v4860 = vadd.f32 %v4424, %v4796
      %v4861 = vadd.f32 %v4535, %v4797
      %v4862 = vadd.f32 %v4537, %v4798
      %v4863 = vadd.f32 %v4428, %v4799
      %v4864 = vadd.f32 %v4430, %v4800
      %v4865 = vadd.f32 %v4541, %v4801
      %v4866 = vadd.f32 %v4543, %v4802
      %v4867 = vadd.f32 %v4432, %v4803
      %v4868 = vadd.f32 %v4434, %v4804
      %v4869 = vadd.f32 %v4545, %v4805
      %v4870 = vadd.f32 %v4547, %v4806
      %v4871 = vadd.f32 %v4438, %v4807
      %v4872 = vadd.f32 %v4440, %v4808
      %v4873 = vadd.f32 %v4551, %v4809
      %v4874 = vadd.f32 %v4553, %v4810
      %v4875 = vadd.f32 %v4442, %v4811
      %v4876 = vadd.f32 %v4444, %v4812
      %v4877 = vadd.f32 %v4555, %v4813
      %v4878 = vadd.f32 %v4557, %v4814
      %v4879 = vmul.f32 %v4815, 0.7978846
      %v4880 = vmul.f32 %v4816, 0.7978846
      %v4881 = vmul.f32 %v4817, 0.7978846
      %v4882 = vmul.f32 %v4818, 0.7978846
      %v4883 = vmul.f32 %v4819, 0.7978846
      %v4884 = vmul.f32 %v4820, 0.7978846
      %v4885 = vmul.f32 %v4821, 0.7978846
      %v4886 = vmul.f32 %v4822, 0.7978846
      %v4887 = vmul.f32 %v4823, 0.7978846
      %v4888 = vmul.f32 %v4824, 0.7978846
      %v4889 = vmul.f32 %v4825, 0.7978846
      %v4890 = vmul.f32 %v4826, 0.7978846
      %v4891 = vmul.f32 %v4827, 0.7978846
      %v4892 = vmul.f32 %v4828, 0.7978846
      %v4893 = vmul.f32 %v4829, 0.7978846
      %v4894 = vmul.f32 %v4830, 0.7978846
      %v4895 = vmul.f32 %v4831, 0.7978846
      %v4896 = vmul.f32 %v4832, 0.7978846
      %v4897 = vmul.f32 %v4833, 0.7978846
      %v4898 = vmul.f32 %v4834, 0.7978846
      %v4899 = vmul.f32 %v4835, 0.7978846
      %v4900 = vmul.f32 %v4836, 0.7978846
      %v4901 = vmul.f32 %v4837, 0.7978846
      %v4902 = vmul.f32 %v4838, 0.7978846
      %v4903 = vmul.f32 %v4839, 0.7978846
      %v4904 = vmul.f32 %v4840, 0.7978846
      %v4905 = vmul.f32 %v4841, 0.7978846
      %v4906 = vmul.f32 %v4842, 0.7978846
      %v4907 = vmul.f32 %v4843, 0.7978846
      %v4908 = vmul.f32 %v4844, 0.7978846
      %v4909 = vmul.f32 %v4845, 0.7978846
      %v4910 = vmul.f32 %v4846, 0.7978846
      %v4911 = vmul.f32 %v4847, 0.7978846
      %v4912 = vmul.f32 %v4848, 0.7978846
      %v4913 = vmul.f32 %v4849, 0.7978846
      %v4914 = vmul.f32 %v4850, 0.7978846
      %v4915 = vmul.f32 %v4851, 0.7978846
      %v4916 = vmul.f32 %v4852, 0.7978846
      %v4917 = vmul.f32 %v4853, 0.7978846
      %v4918 = vmul.f32 %v4854, 0.7978846
      %v4919 = vmul.f32 %v4855, 0.7978846
      %v4920 = vmul.f32 %v4856, 0.7978846
      %v4921 = vmul.f32 %v4857, 0.7978846
      %v4922 = vmul.f32 %v4858, 0.7978846
      %v4923 = vmul.f32 %v4859, 0.7978846
      %v4924 = vmul.f32 %v4860, 0.7978846
      %v4925 = vmul.f32 %v4861, 0.7978846
      %v4926 = vmul.f32 %v4862, 0.7978846
      %v4927 = vmul.f32 %v4863, 0.7978846
      %v4928 = vmul.f32 %v4864, 0.7978846
      %v4929 = vmul.f32 %v4865, 0.7978846
      %v4930 = vmul.f32 %v4866, 0.7978846
      %v4931 = vmul.f32 %v4867, 0.7978846
      %v4932 = vmul.f32 %v4868, 0.7978846
      %v4933 = vmul.f32 %v4869, 0.7978846
      %v4934 = vmul.f32 %v4870, 0.7978846
      %v4935 = vmul.f32 %v4871, 0.7978846
      %v4936 = vmul.f32 %v4872, 0.7978846
      %v4937 = vmul.f32 %v4873, 0.7978846
      %v4938 = vmul.f32 %v4874, 0.7978846
      %v4939 = vmul.f32 %v4875, 0.7978846
      %v4940 = vmul.f32 %v4876, 0.7978846
      %v4941 = vmul.f32 %v4877, 0.7978846
      %v4942 = vmul.f32 %v4878, 0.7978846
      %v4943 = vtanh.pop %v4879
      %v4944 = vtanh.pop %v4880
      %v4945 = vtanh.pop %v4881
      %v4946 = vtanh.pop %v4882
      %v4947 = vtanh.pop %v4883
      %v4948 = vtanh.pop %v4884
      %v4949 = vtanh.pop %v4885
      %v4950 = vtanh.pop %v4886
      %v4951 = vtanh.pop %v4887
      %v4952 = vtanh.pop %v4888
      %v4953 = vtanh.pop %v4889
      %v4954 = vtanh.pop %v4890
      %v4955 = vtanh.pop %v4891
      %v4956 = vtanh.pop %v4892
      %v4957 = vtanh.pop %v4893
      %v4958 = vtanh.pop %v4894
      %v4959 = vtanh.pop %v4895
      %v4960 = vtanh.pop %v4896
      %v4961 = vtanh.pop %v4897
      %v4962 = vtanh.pop %v4898
      %v4963 = vtanh.pop %v4899
      %v4964 = vtanh.pop %v4900
      %v4965 = vtanh.pop %v4901
      %v4966 = vtanh.pop %v4902
      %v4967 = vtanh.pop %v4903
      %v4968 = vtanh.pop %v4904
      %v4969 = vtanh.pop %v4905
      %v4970 = vtanh.pop %v4906
      %v4971 = vtanh.pop %v4907
      %v4972 = vtanh.pop %v4908
      %v4973 = vtanh.pop %v4909
      %v4974 = vtanh.pop %v4910
      %v4975 = vtanh.pop %v4911
      %v4976 = vtanh.pop %v4912
      %v4977 = vtanh.pop %v4913
      %v4978 = vtanh.pop %v4914
      %v4979 = vtanh.pop %v4915
      %v4980 = vtanh.pop %v4916
      %v4981 = vtanh.pop %v4917
      %v4982 = vtanh.pop %v4918
      %v4983 = vtanh.pop %v4919
      %v4984 = vtanh.pop %v4920
      %v4985 = vtanh.pop %v4921
      %v4986 = vtanh.pop %v4922
      %v4987 = vtanh.pop %v4923
      %v4988 = vtanh.pop %v4924
      %v4989 = vtanh.pop %v4925
      %v4990 = vtanh.pop %v4926
      %v4991 = vtanh.pop %v4927
      %v4992 = vtanh.pop %v4928
      %v4993 = vtanh.pop %v4929
      %v4994 = vtanh.pop %v4930
      %v4995 = vtanh.pop %v4931
      %v4996 = vtanh.pop %v4932
      %v4997 = vtanh.pop %v4933
      %v4998 = vtanh.pop %v4934
      %v4999 = vtanh.pop %v4935
      %v5000 = vtanh.pop %v4936
      %v5001 = vtanh.pop %v4937
      %v5002 = vtanh.pop %v4938
      %v5003 = vtanh.pop %v4939
      %v5004 = vtanh.pop %v4940
      %v5005 = vtanh.pop %v4941
      %v5006 = vtanh.pop %v4942
      %v5007 = vadd.f32 %v4943, 1.0
      %v5008 = vadd.f32 %v4944, 1.0
      %v5009 = vadd.f32 %v4945, 1.0
      %v5010 = vadd.f32 %v4946, 1.0
      %v5011 = vadd.f32 %v4947, 1.0
      %v5012 = vadd.f32 %v4948, 1.0
      %v5013 = vadd.f32 %v4949, 1.0
      %v5014 = vadd.f32 %v4950, 1.0
      %v5015 = vadd.f32 %v4951, 1.0
      %v5016 = vadd.f32 %v4952, 1.0
      %v5017 = vadd.f32 %v4953, 1.0
      %v5018 = vadd.f32 %v4954, 1.0
      %v5019 = vadd.f32 %v4955, 1.0
      %v5020 = vadd.f32 %v4956, 1.0
      %v5021 = vadd.f32 %v4957, 1.0
      %v5022 = vadd.f32 %v4958, 1.0
      %v5023 = vadd.f32 %v4959, 1.0
      %v5024 = vadd.f32 %v4960, 1.0
      %v5025 = vadd.f32 %v4961, 1.0
      %v5026 = vadd.f32 %v4962, 1.0
      %v5027 = vadd.f32 %v4963, 1.0
      %v5028 = vadd.f32 %v4964, 1.0
      %v5029 = vadd.f32 %v4965, 1.0
      %v5030 = vadd.f32 %v4966, 1.0
      %v5031 = vadd.f32 %v4967, 1.0
      %v5032 = vadd.f32 %v4968, 1.0
      %v5033 = vadd.f32 %v4969, 1.0
      %v5034 = vadd.f32 %v4970, 1.0
      %v5035 = vadd.f32 %v4971, 1.0
      %v5036 = vadd.f32 %v4972, 1.0
      %v5037 = vadd.f32 %v4973, 1.0
      %v5038 = vadd.f32 %v4974, 1.0
      %v5039 = vadd.f32 %v4975, 1.0
      %v5040 = vadd.f32 %v4976, 1.0
      %v5041 = vadd.f32 %v4977, 1.0
      %v5042 = vadd.f32 %v4978, 1.0
      %v5043 = vadd.f32 %v4979, 1.0
      %v5044 = vadd.f32 %v4980, 1.0
      %v5045 = vadd.f32 %v4981, 1.0
      %v5046 = vadd.f32 %v4982, 1.0
      %v5047 = vadd.f32 %v4983, 1.0
      %v5048 = vadd.f32 %v4984, 1.0
      %v5049 = vadd.f32 %v4985, 1.0
      %v5050 = vadd.f32 %v4986, 1.0
      %v5051 = vadd.f32 %v4987, 1.0
      %v5052 = vadd.f32 %v4988, 1.0
      %v5053 = vadd.f32 %v4989, 1.0
      %v5054 = vadd.f32 %v4990, 1.0
      %v5055 = vadd.f32 %v4991, 1.0
      %v5056 = vadd.f32 %v4992, 1.0
      %v5057 = vadd.f32 %v4993, 1.0
      %v5058 = vadd.f32 %v4994, 1.0
      %v5059 = vadd.f32 %v4995, 1.0
      %v5060 = vadd.f32 %v4996, 1.0
      %v5061 = vadd.f32 %v4997, 1.0
      %v5062 = vadd.f32 %v4998, 1.0
      %v5063 = vadd.f32 %v4999, 1.0
      %v5064 = vadd.f32 %v5000, 1.0
      %v5065 = vadd.f32 %v5001, 1.0
      %v5066 = vadd.f32 %v5002, 1.0
      %v5067 = vadd.f32 %v5003, 1.0
      %v5068 = vadd.f32 %v5004, 1.0
      %v5069 = vadd.f32 %v5005, 1.0
      %v5070 = vadd.f32 %v5006, 1.0
      %v5071 = vmul.f32 %v4559, %v5007
      %v5072 = vmul.f32 %v4560, %v5008
      %v5073 = vmul.f32 %v4561, %v5009
      %v5074 = vmul.f32 %v4562, %v5010
      %v5075 = vmul.f32 %v4563, %v5011
      %v5076 = vmul.f32 %v4564, %v5012
      %v5077 = vmul.f32 %v4565, %v5013
      %v5078 = vmul.f32 %v4566, %v5014
      %v5079 = vmul.f32 %v4567, %v5015
      %v5080 = vmul.f32 %v4568, %v5016
      %v5081 = vmul.f32 %v4569, %v5017
      %v5082 = vmul.f32 %v4570, %v5018
      %v5083 = vmul.f32 %v4571, %v5019
      %v5084 = vmul.f32 %v4572, %v5020
      %v5085 = vmul.f32 %v4573, %v5021
      %v5086 = vmul.f32 %v4574, %v5022
      %v5087 = vmul.f32 %v4575, %v5023
      %v5088 = vmul.f32 %v4576, %v5024
      %v5089 = vmul.f32 %v4577, %v5025
      %v5090 = vmul.f32 %v4578, %v5026
      %v5091 = vmul.f32 %v4579, %v5027
      %v5092 = vmul.f32 %v4580, %v5028
      %v5093 = vmul.f32 %v4581, %v5029
      %v5094 = vmul.f32 %v4582, %v5030
      %v5095 = vmul.f32 %v4583, %v5031
      %v5096 = vmul.f32 %v4584, %v5032
      %v5097 = vmul.f32 %v4585, %v5033
      %v5098 = vmul.f32 %v4586, %v5034
      %v5099 = vmul.f32 %v4587, %v5035
      %v5100 = vmul.f32 %v4588, %v5036
      %v5101 = vmul.f32 %v4589, %v5037
      %v5102 = vmul.f32 %v4590, %v5038
      %v5103 = vmul.f32 %v4591, %v5039
      %v5104 = vmul.f32 %v4592, %v5040
      %v5105 = vmul.f32 %v4593, %v5041
      %v5106 = vmul.f32 %v4594, %v5042
      %v5107 = vmul.f32 %v4595, %v5043
      %v5108 = vmul.f32 %v4596, %v5044
      %v5109 = vmul.f32 %v4597, %v5045
      %v5110 = vmul.f32 %v4598, %v5046
      %v5111 = vmul.f32 %v4599, %v5047
      %v5112 = vmul.f32 %v4600, %v5048
      %v5113 = vmul.f32 %v4601, %v5049
      %v5114 = vmul.f32 %v4602, %v5050
      %v5115 = vmul.f32 %v4603, %v5051
      %v5116 = vmul.f32 %v4604, %v5052
      %v5117 = vmul.f32 %v4605, %v5053
      %v5118 = vmul.f32 %v4606, %v5054
      %v5119 = vmul.f32 %v4607, %v5055
      %v5120 = vmul.f32 %v4608, %v5056
      %v5121 = vmul.f32 %v4609, %v5057
      %v5122 = vmul.f32 %v4610, %v5058
      %v5123 = vmul.f32 %v4611, %v5059
      %v5124 = vmul.f32 %v4612, %v5060
      %v5125 = vmul.f32 %v4613, %v5061
      %v5126 = vmul.f32 %v4614, %v5062
      %v5127 = vmul.f32 %v4615, %v5063
      %v5128 = vmul.f32 %v4616, %v5064
      %v5129 = vmul.f32 %v4617, %v5065
      %v5130 = vmul.f32 %v4618, %v5066
      %v5131 = vmul.f32 %v4619, %v5067
      %v5132 = vmul.f32 %v4620, %v5068
      %v5133 = vmul.f32 %v4621, %v5069
      %v5134 = vmul.f32 %v4622, %v5070
      %v5135 = vld [vmem:[%s777] sm:$0xf]
      %v5136 = vld [vmem:[%s777 + $0x4] sm:$0xf]
      %v5137 = vld [vmem:[%s777 + $0x8] sm:$0xf]
      %v5138 = vld [vmem:[%s777 + $0xc] sm:$0xf]
      %v5139 = vld [vmem:[%s777 + $0x10] sm:$0xf]
      %v5140 = vld [vmem:[%s777 + $0x14] sm:$0xf]
      %v5141 = vld [vmem:[%s777 + $0x18] sm:$0xf]
      %v5142 = vld [vmem:[%s777 + $0x1c] sm:$0xf]
      %v5143 = vld [vmem:[%s777 + $0x20] sm:$0xf]
      %v5144 = vld [vmem:[%s777 + $0x24] sm:$0xf]
      %v5145 = vld [vmem:[%s777 + $0x28] sm:$0xf]
      %v5146 = vld [vmem:[%s777 + $0x2c] sm:$0xf]
      %v5147 = vld [vmem:[%s777 + $0x30] sm:$0xf]
      %v5148 = vld [vmem:[%s777 + $0x34] sm:$0xf]
      %v5149 = vld [vmem:[%s777 + $0x38] sm:$0xf]
      %v5150 = vld [vmem:[%s777 + $0x3c] sm:$0xf]
      %v5151 = vld [vmem:[%s777 + $0x40] sm:$0xf]
      %v5152 = vld [vmem:[%s777 + $0x44] sm:$0xf]
      %v5153 = vld [vmem:[%s777 + $0x48] sm:$0xf]
      %v5154 = vld [vmem:[%s777 + $0x4c] sm:$0xf]
      %v5155 = vld [vmem:[%s777 + $0x50] sm:$0xf]
      %v5156 = vld [vmem:[%s777 + $0x54] sm:$0xf]
      %v5157 = vld [vmem:[%s777 + $0x58] sm:$0xf]
      %v5158 = vld [vmem:[%s777 + $0x5c] sm:$0xf]
      %v5159 = vld [vmem:[%s777 + $0x60] sm:$0xf]
      %v5160 = vld [vmem:[%s777 + $0x64] sm:$0xf]
      %v5161 = vld [vmem:[%s777 + $0x68] sm:$0xf]
      %v5162 = vld [vmem:[%s777 + $0x6c] sm:$0xf]
      %v5163 = vld [vmem:[%s777 + $0x70] sm:$0xf]
      %v5164 = vld [vmem:[%s777 + $0x74] sm:$0xf]
      %v5165 = vld [vmem:[%s777 + $0x78] sm:$0xf]
      %v5166 = vld [vmem:[%s777 + $0x7c] sm:$0xf]
      %v5167 = vld [vmem:[%s777 + $0x80] sm:$0xf]
      %v5168 = vld [vmem:[%s777 + $0x84] sm:$0xf]
      %v5169 = vld [vmem:[%s777 + $0x88] sm:$0xf]
      %v5170 = vld [vmem:[%s777 + $0x8c] sm:$0xf]
      %v5171 = vld [vmem:[%s777 + $0x90] sm:$0xf]
      %v5172 = vld [vmem:[%s777 + $0x94] sm:$0xf]
      %v5173 = vld [vmem:[%s777 + $0x98] sm:$0xf]
      %v5174 = vld [vmem:[%s777 + $0x9c] sm:$0xf]
      %v5175 = vld [vmem:[%s777 + $0xa0] sm:$0xf]
      %v5176 = vld [vmem:[%s777 + $0xa4] sm:$0xf]
      %v5177 = vld [vmem:[%s777 + $0xa8] sm:$0xf]
      %v5178 = vld [vmem:[%s777 + $0xac] sm:$0xf]
      %v5179 = vld [vmem:[%s777 + $0xb0] sm:$0xf]
      %v5180 = vld [vmem:[%s777 + $0xb4] sm:$0xf]
      %v5181 = vld [vmem:[%s777 + $0xb8] sm:$0xf]
      %v5182 = vld [vmem:[%s777 + $0xbc] sm:$0xf]
      %v5183 = vld [vmem:[%s777 + $0xc0] sm:$0xf]
      %v5184 = vld [vmem:[%s777 + $0xc4] sm:$0xf]
      %v5185 = vld [vmem:[%s777 + $0xc8] sm:$0xf]
      %v5186 = vld [vmem:[%s777 + $0xcc] sm:$0xf]
      %v5187 = vld [vmem:[%s777 + $0xd0] sm:$0xf]
      %v5188 = vld [vmem:[%s777 + $0xd4] sm:$0xf]
      %v5189 = vld [vmem:[%s777 + $0xd8] sm:$0xf]
      %v5190 = vld [vmem:[%s777 + $0xdc] sm:$0xf]
      %v5191 = vld [vmem:[%s777 + $0xe0] sm:$0xf]
      %v5192 = vld [vmem:[%s777 + $0xe4] sm:$0xf]
      %v5193 = vld [vmem:[%s777 + $0xe8] sm:$0xf]
      %v5194 = vld [vmem:[%s777 + $0xec] sm:$0xf]
      %v5195 = vld [vmem:[%s777 + $0xf0] sm:$0xf]
      %v5196 = vld [vmem:[%s777 + $0xf4] sm:$0xf]
      %v5197 = vld [vmem:[%s777 + $0xf8] sm:$0xf]
      %v5198 = vld [vmem:[%s777 + $0xfc] sm:$0xf]
      %v5199 = vpack.c.bf16 %v5075, %v5071
      %v5200 = vpack.c.bf16 %v5076, %v5072
      %v5201 = vpack.c.bf16 %v5077, %v5073
      %v5202 = vpack.c.bf16 %v5078, %v5074
      %v5203 = vpack.c.bf16 %v5083, %v5079
      %v5204 = vpack.c.bf16 %v5084, %v5080
      %v5205 = vpack.c.bf16 %v5085, %v5081
      %v5206 = vpack.c.bf16 %v5086, %v5082
      %v5207 = vpack.c.bf16 %v5091, %v5087
      %v5208 = vpack.c.bf16 %v5092, %v5088
      %v5209 = vpack.c.bf16 %v5093, %v5089
      %v5210 = vpack.c.bf16 %v5094, %v5090
      %v5211 = vpack.c.bf16 %v5099, %v5095
      %v5212 = vpack.c.bf16 %v5100, %v5096
      %v5213 = vpack.c.bf16 %v5101, %v5097
      %v5214 = vpack.c.bf16 %v5102, %v5098
      %v5215 = vpack.c.bf16 %v5107, %v5103
      %v5216 = vpack.c.bf16 %v5108, %v5104
      %v5217 = vpack.c.bf16 %v5109, %v5105
      %v5218 = vpack.c.bf16 %v5110, %v5106
      %v5219 = vpack.c.bf16 %v5115, %v5111
      %v5220 = vpack.c.bf16 %v5116, %v5112
      %v5221 = vpack.c.bf16 %v5117, %v5113
      %v5222 = vpack.c.bf16 %v5118, %v5114
      %v5223 = vpack.c.bf16 %v5123, %v5119
      %v5224 = vpack.c.bf16 %v5124, %v5120
      %v5225 = vpack.c.bf16 %v5125, %v5121
      %v5226 = vpack.c.bf16 %v5126, %v5122
      %v5227 = vpack.c.bf16 %v5131, %v5127
      %v5228 = vpack.c.bf16 %v5132, %v5128
      %v5229 = vpack.c.bf16 %v5133, %v5129
      %v5230 = vpack.c.bf16 %v5134, %v5130
      %v5295 = vunpack.c.l.b16 %v5135
      %v5296 = vunpack.c.l.b16 %v5136
      %v5297 = vunpack.c.l.b16 %v5137
      %v5298 = vunpack.c.l.b16 %v5138
      %v5299 = vunpack.c.l.b16 %v5139
      %v5300 = vunpack.c.l.b16 %v5140
      %v5301 = vunpack.c.l.b16 %v5141
      %v5302 = vunpack.c.l.b16 %v5142
      %v5303 = vunpack.c.l.b16 %v5143
      %v5304 = vunpack.c.l.b16 %v5144
      %v5305 = vunpack.c.l.b16 %v5145
      %v5306 = vunpack.c.l.b16 %v5146
      %v5307 = vunpack.c.l.b16 %v5147
      %v5308 = vunpack.c.l.b16 %v5148
      %v5309 = vunpack.c.l.b16 %v5149
      %v5310 = vunpack.c.l.b16 %v5150
      %v5311 = vunpack.c.l.b16 %v5151
      %v5312 = vunpack.c.l.b16 %v5152
      %v5313 = vunpack.c.l.b16 %v5153
      %v5314 = vunpack.c.l.b16 %v5154
      %v5315 = vunpack.c.l.b16 %v5155
      %v5316 = vunpack.c.l.b16 %v5156
      %v5317 = vunpack.c.l.b16 %v5157
      %v5318 = vunpack.c.l.b16 %v5158
      %v5319 = vunpack.c.l.b16 %v5159
      %v5320 = vunpack.c.l.b16 %v5160
      %v5321 = vunpack.c.l.b16 %v5161
      %v5322 = vunpack.c.l.b16 %v5162
      %v5323 = vunpack.c.l.b16 %v5163
      %v5324 = vunpack.c.l.b16 %v5164
      %v5325 = vunpack.c.l.b16 %v5165
      %v5326 = vunpack.c.l.b16 %v5166
      %v5327 = vunpack.c.l.b16 %v5167
      %v5328 = vunpack.c.l.b16 %v5168
      %v5329 = vunpack.c.l.b16 %v5169
      %v5330 = vunpack.c.l.b16 %v5170
      %v5331 = vunpack.c.l.b16 %v5171
      %v5332 = vunpack.c.l.b16 %v5172
      %v5333 = vunpack.c.l.b16 %v5173
      %v5334 = vunpack.c.l.b16 %v5174
      %v5335 = vunpack.c.l.b16 %v5175
      %v5336 = vunpack.c.l.b16 %v5176
      %v5337 = vunpack.c.l.b16 %v5177
      %v5338 = vunpack.c.l.b16 %v5178
      %v5339 = vunpack.c.l.b16 %v5179
      %v5340 = vunpack.c.l.b16 %v5180
      %v5341 = vunpack.c.l.b16 %v5181
      %v5342 = vunpack.c.l.b16 %v5182
      %v5343 = vunpack.c.l.b16 %v5183
      %v5344 = vunpack.c.l.b16 %v5184
      %v5345 = vunpack.c.l.b16 %v5185
      %v5346 = vunpack.c.l.b16 %v5186
      %v5347 = vunpack.c.l.b16 %v5187
      %v5348 = vunpack.c.l.b16 %v5188
      %v5349 = vunpack.c.l.b16 %v5189
      %v5350 = vunpack.c.l.b16 %v5190
      %v5351 = vunpack.c.l.b16 %v5191
      %v5352 = vunpack.c.l.b16 %v5192
      %v5353 = vunpack.c.l.b16 %v5193
      %v5354 = vunpack.c.l.b16 %v5194
      %v5355 = vunpack.c.l.b16 %v5195
      %v5356 = vunpack.c.l.b16 %v5196
      %v5357 = vunpack.c.l.b16 %v5197
      %v5358 = vunpack.c.l.b16 %v5198
      %v5359 = vpack.c.b16 %v5296, %v5295
      %v5360 = vpack.c.b16 %v5298, %v5297
      %v5361 = vpack.c.b16 %v5300, %v5299
      %v5362 = vpack.c.b16 %v5302, %v5301
      %v5363 = vpack.c.b16 %v5304, %v5303
      %v5364 = vpack.c.b16 %v5306, %v5305
      %v5365 = vpack.c.b16 %v5308, %v5307
      %v5366 = vpack.c.b16 %v5310, %v5309
      %v5367 = vpack.c.b16 %v5312, %v5311
      %v5368 = vpack.c.b16 %v5314, %v5313
      %v5369 = vpack.c.b16 %v5316, %v5315
      %v5370 = vpack.c.b16 %v5318, %v5317
      %v5371 = vpack.c.b16 %v5320, %v5319
      %v5372 = vpack.c.b16 %v5322, %v5321
      %v5373 = vpack.c.b16 %v5324, %v5323
      %v5374 = vpack.c.b16 %v5326, %v5325
      %v5375 = vpack.c.b16 %v5328, %v5327
      %v5376 = vpack.c.b16 %v5330, %v5329
      %v5377 = vpack.c.b16 %v5332, %v5331
      %v5378 = vpack.c.b16 %v5334, %v5333
      %v5379 = vpack.c.b16 %v5336, %v5335
      %v5380 = vpack.c.b16 %v5338, %v5337
      %v5381 = vpack.c.b16 %v5340, %v5339
      %v5382 = vpack.c.b16 %v5342, %v5341
      %v5383 = vpack.c.b16 %v5344, %v5343
      %v5384 = vpack.c.b16 %v5346, %v5345
      %v5385 = vpack.c.b16 %v5348, %v5347
      %v5386 = vpack.c.b16 %v5350, %v5349
      %v5387 = vpack.c.b16 %v5352, %v5351
      %v5388 = vpack.c.b16 %v5354, %v5353
      %v5389 = vpack.c.b16 %v5356, %v5355
      %v5390 = vpack.c.b16 %v5358, %v5357
      %5423 = vmatprep.subr.bf16.mxu0 0
      %5424 = vmatpush1.bf16.msra.mxu0 %v5366
      %5425 = vmatprep.subr.bf16.mxu0 0
      %5426 = vmatpush1.bf16.msra.mxu0 %v5365
      %5427 = vmatprep.subr.bf16.mxu0 0
      %5428 = vmatpush1.bf16.msra.mxu0 %v5364
      %5429 = vmatprep.subr.bf16.mxu0 0
      %5430 = vmatpush1.bf16.msra.mxu0 %v5363
      %5431 = vmatprep.subr.bf16.mxu0 0
      %5432 = vmatpush1.bf16.msra.mxu0 %v5362
      %5433 = vmatprep.subr.bf16.mxu0 0
      %5434 = vmatpush1.bf16.msra.mxu0 %v5361
      %5435 = vmatprep.subr.bf16.mxu0 0
      %5436 = vmatpush1.bf16.msra.mxu0 %v5360
      %5437 = vmatprep.subr.bf16.mxu0 0
      %5438 = vmatpush1.bf16.msra.mxu0 %v5359
      %5439 = vmatprep.subr.bf16.mxu0 0
      %5440 = vmatpush2.bf16.msra.mxu0 %v5374
      %5441 = vmatprep.subr.bf16.mxu0 0
      %5442 = vmatpush2.bf16.msra.mxu0 %v5373
      %5443 = vmatprep.subr.bf16.mxu0 0
      %5444 = vmatpush2.bf16.msra.mxu0 %v5372
      %5445 = vmatprep.subr.bf16.mxu0 0
      %5446 = vmatpush2.bf16.msra.mxu0 %v5371
      %5447 = vmatprep.subr.bf16.mxu0 0
      %5448 = vmatpush2.bf16.msra.mxu0 %v5370
      %5449 = vmatprep.subr.bf16.mxu0 0
      %5450 = vmatpush2.bf16.msra.mxu0 %v5369
      %5451 = vmatprep.subr.bf16.mxu0 0
      %5452 = vmatpush2.bf16.msra.mxu0 %v5368
      %5453 = vmatprep.subr.bf16.mxu0 0
      %5454 = vmatpush2.bf16.msra.mxu0 %v5367
      %5455 = vmatprep.mubr.bf16.mxu0 %v5200
      %5456 = vmatmul.mubr.bf16.gmra.mxu0 %v5199
      %v5457 = vpop.f32.mrf.mxu0
      %v5458 = vadd.f32 0.0, %v5457
      %v5459 = vpop.f32.mrf.mxu0
      %v5460 = vpop.f32.mrf.mxu0
      %v5461 = vadd.f32 0.0, %v5460
      %v5462 = vpop.f32.mrf.mxu0
      %5463 = vmatprep.mubr.bf16.mxu0 %v5204
      %5464 = vmatmul.mubr.bf16.gmra.mxu0 %v5203
      %v5465 = vpop.f32.mrf.mxu0
      %v5466 = vadd.f32 0.0, %v5465
      %v5467 = vpop.f32.mrf.mxu0
      %v5468 = vpop.f32.mrf.mxu0
      %v5469 = vadd.f32 0.0, %v5468
      %v5470 = vpop.f32.mrf.mxu0
      %5471 = vmatprep.mubr.bf16.mxu0 %v5208
      %5472 = vmatmul.mubr.bf16.gmra.mxu0 %v5207
      %v5473 = vpop.f32.mrf.mxu0
      %v5474 = vadd.f32 0.0, %v5473
      %v5475 = vpop.f32.mrf.mxu0
      %v5476 = vpop.f32.mrf.mxu0
      %v5477 = vadd.f32 0.0, %v5476
      %v5478 = vpop.f32.mrf.mxu0
      %5479 = vmatprep.mubr.bf16.mxu0 %v5212
      %5480 = vmatmul.mubr.bf16.gmra.mxu0 %v5211
      %v5481 = vpop.f32.mrf.mxu0
      %v5482 = vadd.f32 0.0, %v5481
      %v5483 = vpop.f32.mrf.mxu0
      %v5484 = vpop.f32.mrf.mxu0
      %v5485 = vadd.f32 0.0, %v5484
      %v5486 = vpop.f32.mrf.mxu0
      %5487 = vmatprep.mubr.bf16.mxu0 %v5216
      %5488 = vmatmul.mubr.bf16.gmra.mxu0 %v5215
      %v5489 = vpop.f32.mrf.mxu0
      %v5490 = vadd.f32 0.0, %v5489
      %v5491 = vpop.f32.mrf.mxu0
      %v5492 = vpop.f32.mrf.mxu0
      %v5493 = vadd.f32 0.0, %v5492
      %v5494 = vpop.f32.mrf.mxu0
      %5495 = vmatprep.mubr.bf16.mxu0 %v5220
      %5496 = vmatmul.mubr.bf16.gmra.mxu0 %v5219
      %v5497 = vpop.f32.mrf.mxu0
      %v5498 = vadd.f32 0.0, %v5497
      %v5499 = vpop.f32.mrf.mxu0
      %v5500 = vpop.f32.mrf.mxu0
      %v5501 = vadd.f32 0.0, %v5500
      %v5502 = vpop.f32.mrf.mxu0
      %5503 = vmatprep.mubr.bf16.mxu0 %v5224
      %5504 = vmatmul.mubr.bf16.gmra.mxu0 %v5223
      %v5505 = vpop.f32.mrf.mxu0
      %v5506 = vadd.f32 0.0, %v5505
      %v5507 = vpop.f32.mrf.mxu0
      %v5508 = vpop.f32.mrf.mxu0
      %v5509 = vadd.f32 0.0, %v5508
      %v5510 = vpop.f32.mrf.mxu0
      %5511 = vmatprep.mubr.bf16.mxu0 %v5228
      %5512 = vmatmul.mubr.bf16.gmra.mxu0 %v5227
      %v5513 = vpop.f32.mrf.mxu0
      %v5514 = vadd.f32 0.0, %v5513
      %v5515 = vpop.f32.mrf.mxu0
      %v5516 = vpop.f32.mrf.mxu0
      %v5517 = vadd.f32 0.0, %v5516
      %v5518 = vpop.f32.mrf.mxu0
      %5519 = vdwg.mxu0
      %5520 = vmatprep.subr.bf16.mxu0 0
      %5521 = vmatpush1.bf16.msra.mxu0 %v5382
      %5522 = vmatprep.subr.bf16.mxu0 0
      %5523 = vmatpush1.bf16.msra.mxu0 %v5381
      %5524 = vmatprep.subr.bf16.mxu0 0
      %5525 = vmatpush1.bf16.msra.mxu0 %v5380
      %5526 = vmatprep.subr.bf16.mxu0 0
      %5527 = vmatpush1.bf16.msra.mxu0 %v5379
      %5528 = vmatprep.subr.bf16.mxu0 0
      %5529 = vmatpush1.bf16.msra.mxu0 %v5378
      %5530 = vmatprep.subr.bf16.mxu0 0
      %5531 = vmatpush1.bf16.msra.mxu0 %v5377
      %5532 = vmatprep.subr.bf16.mxu0 0
      %5533 = vmatpush1.bf16.msra.mxu0 %v5376
      %5534 = vmatprep.subr.bf16.mxu0 0
      %5535 = vmatpush1.bf16.msra.mxu0 %v5375
      %5536 = vmatprep.subr.bf16.mxu0 0
      %5537 = vmatpush2.bf16.msra.mxu0 %v5390
      %5538 = vmatprep.subr.bf16.mxu0 0
      %5539 = vmatpush2.bf16.msra.mxu0 %v5389
      %5540 = vmatprep.subr.bf16.mxu0 0
      %5541 = vmatpush2.bf16.msra.mxu0 %v5388
      %5542 = vmatprep.subr.bf16.mxu0 0
      %5543 = vmatpush2.bf16.msra.mxu0 %v5387
      %5544 = vmatprep.subr.bf16.mxu0 0
      %5545 = vmatpush2.bf16.msra.mxu0 %v5386
      %5546 = vmatprep.subr.bf16.mxu0 0
      %5547 = vmatpush2.bf16.msra.mxu0 %v5385
      %5548 = vmatprep.subr.bf16.mxu0 0
      %5549 = vmatpush2.bf16.msra.mxu0 %v5384
      %5550 = vmatprep.subr.bf16.mxu0 0
      %5551 = vmatpush2.bf16.msra.mxu0 %v5383
      %5552 = vmatprep.mubr.bf16.mxu0 %v5202
      %5553 = vmatmul.mubr.bf16.gmra.mxu0 %v5201
      %v5554 = vpop.f32.mrf.mxu0
      %v5555 = vadd.f32 %v5458, %v5554
      %v5556 = vpop.f32.mrf.mxu0
      %v5557 = vpop.f32.mrf.mxu0
      %v5558 = vadd.f32 %v5461, %v5557
      %v5559 = vpop.f32.mrf.mxu0
      %5560 = vmatprep.mubr.bf16.mxu0 %v5206
      %5561 = vmatmul.mubr.bf16.gmra.mxu0 %v5205
      %v5562 = vpop.f32.mrf.mxu0
      %v5563 = vadd.f32 %v5466, %v5562
      %v5564 = vpop.f32.mrf.mxu0
      %v5565 = vpop.f32.mrf.mxu0
      %v5566 = vadd.f32 %v5469, %v5565
      %v5567 = vpop.f32.mrf.mxu0
      %5568 = vmatprep.mubr.bf16.mxu0 %v5210
      %5569 = vmatmul.mubr.bf16.gmra.mxu0 %v5209
      %v5570 = vpop.f32.mrf.mxu0
      %v5571 = vadd.f32 %v5474, %v5570
      %v5572 = vpop.f32.mrf.mxu0
      %v5573 = vpop.f32.mrf.mxu0
      %v5574 = vadd.f32 %v5477, %v5573
      %v5575 = vpop.f32.mrf.mxu0
      %5576 = vmatprep.mubr.bf16.mxu0 %v5214
      %5577 = vmatmul.mubr.bf16.gmra.mxu0 %v5213
      %v5578 = vpop.f32.mrf.mxu0
      %v5579 = vadd.f32 %v5482, %v5578
      %v5580 = vpop.f32.mrf.mxu0
      %v5581 = vpop.f32.mrf.mxu0
      %v5582 = vadd.f32 %v5485, %v5581
      %v5583 = vpop.f32.mrf.mxu0
      %5584 = vmatprep.mubr.bf16.mxu0 %v5218
      %5585 = vmatmul.mubr.bf16.gmra.mxu0 %v5217
      %v5586 = vpop.f32.mrf.mxu0
      %v5587 = vadd.f32 %v5490, %v5586
      %v5588 = vpop.f32.mrf.mxu0
      %v5589 = vpop.f32.mrf.mxu0
      %v5590 = vadd.f32 %v5493, %v5589
      %v5591 = vpop.f32.mrf.mxu0
      %5592 = vmatprep.mubr.bf16.mxu0 %v5222
      %5593 = vmatmul.mubr.bf16.gmra.mxu0 %v5221
      %v5594 = vpop.f32.mrf.mxu0
      %v5595 = vadd.f32 %v5498, %v5594
      %v5596 = vpop.f32.mrf.mxu0
      %v5597 = vpop.f32.mrf.mxu0
      %v5598 = vadd.f32 %v5501, %v5597
      %v5599 = vpop.f32.mrf.mxu0
      %5600 = vmatprep.mubr.bf16.mxu0 %v5226
      %5601 = vmatmul.mubr.bf16.gmra.mxu0 %v5225
      %v5602 = vpop.f32.mrf.mxu0
      %v5603 = vadd.f32 %v5506, %v5602
      %v5604 = vpop.f32.mrf.mxu0
      %v5605 = vpop.f32.mrf.mxu0
      %v5606 = vadd.f32 %v5509, %v5605
      %v5607 = vpop.f32.mrf.mxu0
      %5608 = vmatprep.mubr.bf16.mxu0 %v5230
      %5609 = vmatmul.mubr.bf16.gmra.mxu0 %v5229
      %v5610 = vpop.f32.mrf.mxu0
      %v5611 = vadd.f32 %v5514, %v5610
      %v5612 = vpop.f32.mrf.mxu0
      %v5613 = vpop.f32.mrf.mxu0
      %v5614 = vadd.f32 %v5517, %v5613
      %v5615 = vpop.f32.mrf.mxu0
      %5616 = vdwg.mxu0
      %v5617 = vadd.f32 %v3873, %v5555
      %v5618 = vadd.f32 %v3874, %v5558
      %v5619 = vadd.f32 %v3875, %v5563
      %v5620 = vadd.f32 %v3876, %v5566
      %v5621 = vadd.f32 %v3877, %v5571
      %v5622 = vadd.f32 %v3878, %v5574
      %v5623 = vadd.f32 %v3879, %v5579
      %v5624 = vadd.f32 %v3880, %v5582
      %v5625 = vadd.f32 %v3881, %v5587
      %v5626 = vadd.f32 %v3882, %v5590
      %v5627 = vadd.f32 %v3883, %v5595
      %v5628 = vadd.f32 %v3884, %v5598
      %v5629 = vadd.f32 %v3885, %v5603
      %v5630 = vadd.f32 %v3886, %v5606
      %v5631 = vadd.f32 %v3887, %v5611
      %v5632 = vadd.f32 %v3888, %v5614
      %v5633 = vld [vmem:[%s780] sm:$0x1]
      %v5635 = vlaneseq
      %v5636 = vshrl.u32 %v5635, 7
      %v5637 = vsub.s32 0, %v5636
      %v5638 = vrot.slane %v5633, %v5637
      %v5640 = vadd.f32 %v5617, %v5638
      %v5641 = vadd.f32 %v5618, %v5638
      %v5642 = vadd.f32 %v5619, %v5638
      %v5643 = vadd.f32 %v5620, %v5638
      %v5644 = vadd.f32 %v5621, %v5638
      %v5645 = vadd.f32 %v5622, %v5638
      %v5646 = vadd.f32 %v5623, %v5638
      %v5647 = vadd.f32 %v5624, %v5638
      %v5648 = vadd.f32 %v5625, %v5638
      %v5649 = vadd.f32 %v5626, %v5638
      %v5650 = vadd.f32 %v5627, %v5638
      %v5651 = vadd.f32 %v5628, %v5638
      %v5652 = vadd.f32 %v5629, %v5638
      %v5653 = vadd.f32 %v5630, %v5638
      %v5654 = vadd.f32 %v5631, %v5638
      %v5655 = vadd.f32 %v5632, %v5638
      %5656 = vst [vmem:[#allocation2] sm:$0xff] %v5640
      %5657 = vst [vmem:[#allocation2 + $0x8] sm:$0xff] %v5641
      %5658 = vst [vmem:[#allocation2 + $0x10] sm:$0xff] %v5642
      %5659 = vst [vmem:[#allocation2 + $0x18] sm:$0xff] %v5643
      %5660 = vst [vmem:[#allocation2 + $0x20] sm:$0xff] %v5644
      %5661 = vst [vmem:[#allocation2 + $0x28] sm:$0xff] %v5645
      %5662 = vst [vmem:[#allocation2 + $0x30] sm:$0xff] %v5646
      %5663 = vst [vmem:[#allocation2 + $0x38] sm:$0xff] %v5647
      %5664 = vst [vmem:[#allocation2 + $0x40] sm:$0xff] %v5648
      %5665 = vst [vmem:[#allocation2 + $0x48] sm:$0xff] %v5649
      %5666 = vst [vmem:[#allocation2 + $0x50] sm:$0xff] %v5650
      %5667 = vst [vmem:[#allocation2 + $0x58] sm:$0xff] %v5651
      %5668 = vst [vmem:[#allocation2 + $0x60] sm:$0xff] %v5652
      %5669 = vst [vmem:[#allocation2 + $0x68] sm:$0xff] %v5653
      %5670 = vst [vmem:[#allocation2 + $0x70] sm:$0xff] %v5654
      %5671 = vst [vmem:[#allocation2 + $0x78] sm:$0xff] %v5655
      %p5672 = scmp.eq.s32.totalorder %s34, 1
      // Predicated region
      $region97: #{theia_feature_forward.1} parent=91 // pred_check
        %p5673 = pneg %p5672
      $region98: #{theia_feature_forward.1} parent=91 // pred_check_branch
        %5675 = sbr.rel (%p5673) target = $region100
      $region99: #{theia_feature_forward.1} parent=91 // pred_region
        %v5676 = vld [vmem:[%s16] sm:$0x1]
        %v5677 = vld [vmem:[%s17] sm:$0x1]
        %5678 = vadd.xlane.f32.xlu0 %v5640
        %v5679 = vpop.xlane.xlu0 %5678
        %5680 = vadd.xlane.f32.xlu0 %v5641
        %v5681 = vpop.xlane.xlu0 %5680
        %5682 = vadd.xlane.f32.xlu0 %v5642
        %v5683 = vpop.xlane.xlu0 %5682
        %5684 = vadd.xlane.f32.xlu0 %v5643
        %v5685 = vpop.xlane.xlu0 %5684
        %5686 = vadd.xlane.f32.xlu0 %v5644
        %v5687 = vpop.xlane.xlu0 %5686
        %5688 = vadd.xlane.f32.xlu0 %v5645
        %v5689 = vpop.xlane.xlu0 %5688
        %5690 = vadd.xlane.f32.xlu0 %v5646
        %v5691 = vpop.xlane.xlu0 %5690
        %5692 = vadd.xlane.f32.xlu0 %v5647
        %v5693 = vpop.xlane.xlu0 %5692
        %5694 = vadd.xlane.f32.xlu0 %v5648
        %v5695 = vpop.xlane.xlu0 %5694
        %5696 = vadd.xlane.f32.xlu0 %v5649
        %v5697 = vpop.xlane.xlu0 %5696
        %5698 = vadd.xlane.f32.xlu0 %v5650
        %v5699 = vpop.xlane.xlu0 %5698
        %5700 = vadd.xlane.f32.xlu0 %v5651
        %v5701 = vpop.xlane.xlu0 %5700
        %5702 = vadd.xlane.f32.xlu0 %v5652
        %v5703 = vpop.xlane.xlu0 %5702
        %5704 = vadd.xlane.f32.xlu0 %v5653
        %v5705 = vpop.xlane.xlu0 %5704
        %5706 = vadd.xlane.f32.xlu0 %v5654
        %v5707 = vpop.xlane.xlu0 %5706
        %5708 = vadd.xlane.f32.xlu0 %v5655
        %v5709 = vpop.xlane.xlu0 %5708
        %v5710 = vmul.f32 %v5679, %v1852
        %v5711 = vmul.f32 %v5681, %v1852
        %v5712 = vmul.f32 %v5683, %v1852
        %v5713 = vmul.f32 %v5685, %v1852
        %v5714 = vmul.f32 %v5687, %v1852
        %v5715 = vmul.f32 %v5689, %v1852
        %v5716 = vmul.f32 %v5691, %v1852
        %v5717 = vmul.f32 %v5693, %v1852
        %v5718 = vmul.f32 %v5695, %v1852
        %v5719 = vmul.f32 %v5697, %v1852
        %v5720 = vmul.f32 %v5699, %v1852
        %v5721 = vmul.f32 %v5701, %v1852
        %v5722 = vmul.f32 %v5703, %v1852
        %v5723 = vmul.f32 %v5705, %v1852
        %v5724 = vmul.f32 %v5707, %v1852
        %v5725 = vmul.f32 %v5709, %v1852
        %v5726 = vsub.f32 %v5640, %v5710
        %v5727 = vsub.f32 %v5641, %v5711
        %v5728 = vsub.f32 %v5642, %v5712
        %v5729 = vsub.f32 %v5643, %v5713
        %v5730 = vsub.f32 %v5644, %v5714
        %v5731 = vsub.f32 %v5645, %v5715
        %v5732 = vsub.f32 %v5646, %v5716
        %v5733 = vsub.f32 %v5647, %v5717
        %v5734 = vsub.f32 %v5648, %v5718
        %v5735 = vsub.f32 %v5649, %v5719
        %v5736 = vsub.f32 %v5650, %v5720
        %v5737 = vsub.f32 %v5651, %v5721
        %v5738 = vsub.f32 %v5652, %v5722
        %v5739 = vsub.f32 %v5653, %v5723
        %v5740 = vsub.f32 %v5654, %v5724
        %v5741 = vsub.f32 %v5655, %v5725
        %v5742 = vmul.f32 %v5726, %v5726
        %v5743 = vmul.f32 %v5727, %v5727
        %v5744 = vmul.f32 %v5728, %v5728
        %v5745 = vmul.f32 %v5729, %v5729
        %v5746 = vmul.f32 %v5730, %v5730
        %v5747 = vmul.f32 %v5731, %v5731
        %v5748 = vmul.f32 %v5732, %v5732
        %v5749 = vmul.f32 %v5733, %v5733
        %v5750 = vmul.f32 %v5734, %v5734
        %v5751 = vmul.f32 %v5735, %v5735
        %v5752 = vmul.f32 %v5736, %v5736
        %v5753 = vmul.f32 %v5737, %v5737
        %v5754 = vmul.f32 %v5738, %v5738
        %v5755 = vmul.f32 %v5739, %v5739
        %v5756 = vmul.f32 %v5740, %v5740
        %v5757 = vmul.f32 %v5741, %v5741
        %5758 = vadd.xlane.f32.xlu0 %v5742
        %v5759 = vpop.xlane.xlu0 %5758
        %5760 = vadd.xlane.f32.xlu0 %v5743
        %v5761 = vpop.xlane.xlu0 %5760
        %5762 = vadd.xlane.f32.xlu0 %v5744
        %v5763 = vpop.xlane.xlu0 %5762
        %5764 = vadd.xlane.f32.xlu0 %v5745
        %v5765 = vpop.xlane.xlu0 %5764
        %5766 = vadd.xlane.f32.xlu0 %v5746
        %v5767 = vpop.xlane.xlu0 %5766
        %5768 = vadd.xlane.f32.xlu0 %v5747
        %v5769 = vpop.xlane.xlu0 %5768
        %5770 = vadd.xlane.f32.xlu0 %v5748
        %v5771 = vpop.xlane.xlu0 %5770
        %5772 = vadd.xlane.f32.xlu0 %v5749
        %v5773 = vpop.xlane.xlu0 %5772
        %5774 = vadd.xlane.f32.xlu0 %v5750
        %v5775 = vpop.xlane.xlu0 %5774
        %5776 = vadd.xlane.f32.xlu0 %v5751
        %v5777 = vpop.xlane.xlu0 %5776
        %5778 = vadd.xlane.f32.xlu0 %v5752
        %v5779 = vpop.xlane.xlu0 %5778
        %5780 = vadd.xlane.f32.xlu0 %v5753
        %v5781 = vpop.xlane.xlu0 %5780
        %5782 = vadd.xlane.f32.xlu0 %v5754
        %v5783 = vpop.xlane.xlu0 %5782
        %5784 = vadd.xlane.f32.xlu0 %v5755
        %v5785 = vpop.xlane.xlu0 %5784
        %5786 = vadd.xlane.f32.xlu0 %v5756
        %v5787 = vpop.xlane.xlu0 %5786
        %5788 = vadd.xlane.f32.xlu0 %v5757
        %v5789 = vpop.xlane.xlu0 %5788
        %v5790 = vmul.f32 %v5759, %v1852
        %v5791 = vmul.f32 %v5761, %v1852
        %v5792 = vmul.f32 %v5763, %v1852
        %v5793 = vmul.f32 %v5765, %v1852
        %v5794 = vmul.f32 %v5767, %v1852
        %v5795 = vmul.f32 %v5769, %v1852
        %v5796 = vmul.f32 %v5771, %v1852
        %v5797 = vmul.f32 %v5773, %v1852
        %v5798 = vmul.f32 %v5775, %v1852
        %v5799 = vmul.f32 %v5777, %v1852
        %v5800 = vmul.f32 %v5779, %v1852
        %v5801 = vmul.f32 %v5781, %v1852
        %v5802 = vmul.f32 %v5783, %v1852
        %v5803 = vmul.f32 %v5785, %v1852
        %v5804 = vmul.f32 %v5787, %v1852
        %v5805 = vmul.f32 %v5789, %v1852
        %v5806 = vadd.f32 %v5790, 1e-12
        %v5807 = vadd.f32 %v5791, 1e-12
        %v5808 = vadd.f32 %v5792, 1e-12
        %v5809 = vadd.f32 %v5793, 1e-12
        %v5810 = vadd.f32 %v5794, 1e-12
        %v5811 = vadd.f32 %v5795, 1e-12
        %v5812 = vadd.f32 %v5796, 1e-12
        %v5813 = vadd.f32 %v5797, 1e-12
        %v5814 = vadd.f32 %v5798, 1e-12
        %v5815 = vadd.f32 %v5799, 1e-12
        %v5816 = vadd.f32 %v5800, 1e-12
        %v5817 = vadd.f32 %v5801, 1e-12
        %v5818 = vadd.f32 %v5802, 1e-12
        %v5819 = vadd.f32 %v5803, 1e-12
        %v5820 = vadd.f32 %v5804, 1e-12
        %v5821 = vadd.f32 %v5805, 1e-12
        %v5822 = vrsqrt.pop %v5806
        %v5823 = vrsqrt.pop %v5807
        %v5824 = vrsqrt.pop %v5808
        %v5825 = vrsqrt.pop %v5809
        %v5826 = vrsqrt.pop %v5810
        %v5827 = vrsqrt.pop %v5811
        %v5828 = vrsqrt.pop %v5812
        %v5829 = vrsqrt.pop %v5813
        %v5830 = vrsqrt.pop %v5814
        %v5831 = vrsqrt.pop %v5815
        %v5832 = vrsqrt.pop %v5816
        %v5833 = vrsqrt.pop %v5817
        %v5834 = vrsqrt.pop %v5818
        %v5835 = vrsqrt.pop %v5819
        %v5836 = vrsqrt.pop %v5820
        %v5837 = vrsqrt.pop %v5821
        %v5838 = vmul.f32 %v5726, %v5822
        %v5839 = vmul.f32 %v5727, %v5823
        %v5840 = vmul.f32 %v5728, %v5824
        %v5841 = vmul.f32 %v5729, %v5825
        %v5842 = vmul.f32 %v5730, %v5826
        %v5843 = vmul.f32 %v5731, %v5827
        %v5844 = vmul.f32 %v5732, %v5828
        %v5845 = vmul.f32 %v5733, %v5829
        %v5846 = vmul.f32 %v5734, %v5830
        %v5847 = vmul.f32 %v5735, %v5831
        %v5848 = vmul.f32 %v5736, %v5832
        %v5849 = vmul.f32 %v5737, %v5833
        %v5850 = vmul.f32 %v5738, %v5834
        %v5851 = vmul.f32 %v5739, %v5835
        %v5852 = vmul.f32 %v5740, %v5836
        %v5853 = vmul.f32 %v5741, %v5837
        %v5855 = vlaneseq
        %v5856 = vshrl.u32 %v5855, 7
        %v5857 = vsub.s32 0, %v5856
        %v5858 = vrot.slane %v5676, %v5857
        %v5860 = vmul.f32 %v5838, %v5858
        %v5861 = vmul.f32 %v5839, %v5858
        %v5862 = vmul.f32 %v5840, %v5858
        %v5863 = vmul.f32 %v5841, %v5858
        %v5864 = vmul.f32 %v5842, %v5858
        %v5865 = vmul.f32 %v5843, %v5858
        %v5866 = vmul.f32 %v5844, %v5858
        %v5867 = vmul.f32 %v5845, %v5858
        %v5868 = vmul.f32 %v5846, %v5858
        %v5869 = vmul.f32 %v5847, %v5858
        %v5870 = vmul.f32 %v5848, %v5858
        %v5871 = vmul.f32 %v5849, %v5858
        %v5872 = vmul.f32 %v5850, %v5858
        %v5873 = vmul.f32 %v5851, %v5858
        %v5874 = vmul.f32 %v5852, %v5858
        %v5875 = vmul.f32 %v5853, %v5858
        %v5877 = vlaneseq
        %v5878 = vshrl.u32 %v5877, 7
        %v5879 = vsub.s32 0, %v5878
        %v5880 = vrot.slane %v5677, %v5879
        %v5882 = vadd.f32 %v5860, %v5880
        %v5883 = vadd.f32 %v5861, %v5880
        %v5884 = vadd.f32 %v5862, %v5880
        %v5885 = vadd.f32 %v5863, %v5880
        %v5886 = vadd.f32 %v5864, %v5880
        %v5887 = vadd.f32 %v5865, %v5880
        %v5888 = vadd.f32 %v5866, %v5880
        %v5889 = vadd.f32 %v5867, %v5880
        %v5890 = vadd.f32 %v5868, %v5880
        %v5891 = vadd.f32 %v5869, %v5880
        %v5892 = vadd.f32 %v5870, %v5880
        %v5893 = vadd.f32 %v5871, %v5880
        %v5894 = vadd.f32 %v5872, %v5880
        %v5895 = vadd.f32 %v5873, %v5880
        %v5896 = vadd.f32 %v5874, %v5880
        %v5897 = vadd.f32 %v5875, %v5880
        %5898 = vst [vmem:[%s785] sm:$0xff] %v5882
        %5899 = vst [vmem:[%s785 + $0x8] sm:$0xff] %v5883
        %5900 = vst [vmem:[%s785 + $0x10] sm:$0xff] %v5884
        %5901 = vst [vmem:[%s785 + $0x18] sm:$0xff] %v5885
        %5902 = vst [vmem:[%s785 + $0x20] sm:$0xff] %v5886
        %5903 = vst [vmem:[%s785 + $0x28] sm:$0xff] %v5887
        %5904 = vst [vmem:[%s785 + $0x30] sm:$0xff] %v5888
        %5905 = vst [vmem:[%s785 + $0x38] sm:$0xff] %v5889
        %5906 = vst [vmem:[%s785 + $0x40] sm:$0xff] %v5890
        %5907 = vst [vmem:[%s785 + $0x48] sm:$0xff] %v5891
        %5908 = vst [vmem:[%s785 + $0x50] sm:$0xff] %v5892
        %5909 = vst [vmem:[%s785 + $0x58] sm:$0xff] %v5893
        %5910 = vst [vmem:[%s785 + $0x60] sm:$0xff] %v5894
        %5911 = vst [vmem:[%s785 + $0x68] sm:$0xff] %v5895
        %5912 = vst [vmem:[%s785 + $0x70] sm:$0xff] %v5896
        %5913 = vst [vmem:[%s785 + $0x78] sm:$0xff] %v5897
      $region100: #{theia_feature_forward.1} parent=91 // pred_fallthru
        _
      %p5914 = scmp.lt.s32.totalorder %s33, 1
      %s5915 = scalar_select %p5914, %s33, 1
      %s5916 = smul.addr %s5915, 16
      %s5917 = smul.addr %s5916, 8
      %s5918 = scalar_lea.vmem %s18, %s5917
      // Predicated region
      $region101: #{theia_feature_forward.1} parent=91 // pred_check
        %p5919 = pneg %p502
      $region102: #{theia_feature_forward.1} parent=91 // pred_check_branch
        %5921 = sbr.rel (%p5919) target = $region104
      $region103: #{theia_feature_forward.1} parent=91 // pred_region
        _
      $region104: #{theia_feature_forward.1} parent=91 // pred_fallthru
        _
    $region92: #{theia_feature_forward.1} parent=5 // pred_fallthru
      _
    %p5922 = scmp.le.s32.totalorder 2, %s24
    // Predicated region
    $region105: #{theia_feature_forward.1} parent=5 // pred_check
      %p5923 = pneg %p5922
    $region106: #{theia_feature_forward.1} parent=5 // pred_check_branch
      %5925 = sbr.rel (%p5923) target = $region108
    $region107: #{theia_feature_forward.1} parent=5 // pred_region
      %s5926 = ssub.s32 %s24, 2
      // Predicated region
      $region109: #{theia_feature_forward.1} parent=107 // pred_check
        %p5927 = pneg %p508
      $region110: #{theia_feature_forward.1} parent=107 // pred_check_branch
        %5929 = sbr.rel (%p5927) target = $region112
      $region111: #{theia_feature_forward.1} parent=107 // pred_region
        %p5930 = scmp.lt.s32.totalorder %s35, 1
        %s5931 = scalar_select %p5930, %s35, 1
        %s5932 = smul.addr %s5931, 16
        %s5933 = smul.addr %s5932, 8
        %s5934 = scalar_lea.vmem %s18, %s5933
      $region112: #{theia_feature_forward.1} parent=107 // pred_fallthru
        _
    $region108: #{theia_feature_forward.1} parent=5 // pred_fallthru
      _
  $region6: #{theia_feature_forward.1} parent=0 // loop_footer
    %s28 = sadd.s32 1, %s24
  $region7: #{theia_feature_forward.1} parent=0 // loop_footer_branch
    %23 = sbr.rel target = $region3
  $region8: #{theia_feature_forward.1} parent=0 // loop_exit
    _

</llo_original>
